<compile_context>
chip_gen: v7x
topology: tpu7x:2x2x1
jax: 0.10.0
libtpu: 0.0.40
codegen_flags: <defaults>
</compile_context>

<pallas_src>
import functools
import math

import jax
import jax.numpy as jnp
from jax import lax
from jax.experimental import pallas as pl
from jax.experimental.pallas import tpu as pltpu

_LN_EPS = 1e-5  # torch.nn.LayerNorm default


def _vmem_limit_bytes():
    """Raise the scoped-VMEM ceiling above the conservative compiler default.

    ~100 MiB on 128-MiB parts (v5e/v6e), ~51 MiB on v7x (64 MiB physical).
    Falls back to a v7x-safe value if the hardware query is unavailable.
    """
    cap = 64 * 1024 * 1024
    try:
        cap = int(pltpu.get_tpu_info().vmem_capacity_bytes)
    except Exception:
        pass
    return min(int(cap * 0.8), 100 * 1024 * 1024)


# ---------------------------------------------------------------------------
# In-kernel helpers (elementwise / reductions only — all lower on Mosaic).
# ---------------------------------------------------------------------------
def _layernorm(x, gamma, beta):
    """LayerNorm over the last axis (biased variance, eps=1e-5), f32 math."""
    mu = jnp.mean(x, axis=-1, keepdims=True)
    xc = x - mu
    var = jnp.mean(xc * xc, axis=-1, keepdims=True)
    return xc * lax.rsqrt(var + _LN_EPS) * gamma + beta


def _recip(x):
    """EUP approximate reciprocal + one Newton step (~f32 accuracy)."""
    r = pl.reciprocal(x, approx=True)
    return r * (2.0 - x * r)


def _erf(x):
    """erf via Abramowitz & Stegun 7.1.26 (max abs err ~1.5e-7), f32 math.

    The divide is routed through the EUP reciprocal (frees VALU slots)."""
    a1, a2, a3, a4, a5 = (0.254829592, -0.284496736, 1.421413741,
                          -1.453152027, 1.061405429)
    p = 0.3275911
    ax = jnp.abs(x)
    t = _recip(1.0 + p * ax)
    poly = ((((a5 * t + a4) * t + a3) * t + a2) * t + a1) * t
    y = 1.0 - poly * jnp.exp(-ax * ax)
    return jnp.where(x >= 0.0, y, -y)


def _gelu(x):
    """Exact (erf-based) GeLU, matching the module's GeLu class."""
    return x * 0.5 * (1.0 + _erf(x * (1.0 / math.sqrt(2.0))))


# ---------------------------------------------------------------------------
# Fused transformer stack kernel: grid = (batch, depth)
# ---------------------------------------------------------------------------
def _make_layer_stack_kernel(heads):
    """One (batch, layer) grid step of the fused transformer stack.

    The residual stream lives in an f32 VMEM scratch carried across the depth
    ("arbitrary") grid axis; only the final layer writes the output block.
    """

    def kernel(x_ref, g1_ref, be1_ref, wq_ref, wk_ref, wv_ref, wo_ref, bo_ref,
               g2_ref, be2_ref, w1_ref, b1_ref, w2_ref, b2_ref, o_ref, xs_ref):
        l = pl.program_id(1)
        mm = wq_ref.dtype                       # matmul operand dtype (bf16/f32)

        @pl.when(l == 0)
        def _():                                # load this batch's tokens once
            xs_ref[...] = x_ref[0].astype(jnp.float32)

        x = xs_ref[...]                         # (n, dim) f32 residual stream
        n, dim = x.shape

        # ---- Attention sub-layer: x += sum_h Attn_h(LN(x)) @ Wo_h + bo ----
        xn = _layernorm(x, g1_ref[0], be1_ref[0]).astype(mm)
        y = jnp.zeros((n, dim), jnp.float32)
        for h in range(heads):                  # static unroll; plain 2-D dots,
            q = jnp.dot(xn, wq_ref[0, h],       # no (heads, n, dim) broadcast
                        preferred_element_type=jnp.float32)
            k = jnp.dot(xn, wk_ref[0, h], preferred_element_type=jnp.float32)
            v = jnp.dot(xn, wv_ref[0, h], preferred_element_type=jnp.float32)
            # Scores contract on the last axis -> no explicit transpose.
            s = lax.dot_general(q.astype(mm), k.astype(mm),
                                (((1,), (1,)), ((), ())),
                                preferred_element_type=jnp.float32)   # (n, n)
            mx = jnp.max(s, axis=-1, keepdims=True)
            e = jnp.exp(s - mx)                                       # f32
            attn = e * _recip(jnp.sum(e, axis=-1, keepdims=True))
            ov = jnp.dot(attn.astype(mm), v.astype(mm),
                         preferred_element_type=jnp.float32)          # (n, d)
            # Output projection folded per head and accumulated in f32 —
            # no (heads, n, dim) intermediate, no head concat.
            y = y + jnp.dot(ov.astype(mm), wo_ref[0, h],
                            preferred_element_type=jnp.float32)
        x = x + y + bo_ref[0]                   # residual (+ to_out bias once)

        # ---- FeedForward sub-layer: x += GeLU(LN(x) @ W1 + b1) @ W2 + b2 ----
        xn2 = _layernorm(x, g2_ref[0], be2_ref[0]).astype(mm)
        hmid = jnp.dot(xn2, w1_ref[0],
                       preferred_element_type=jnp.float32) + b1_ref[0]
        hmid = _gelu(hmid)                      # f32
        x = x + jnp.dot(hmid.astype(mm), w2_ref[0],
                        preferred_element_type=jnp.float32) + b2_ref[0]

        xs_ref[...] = x                         # carry to the next layer
        @pl.when(l == pl.num_programs(1) - 1)
        def _():
            o_ref[0] = x.astype(o_ref.dtype)

    return kernel


def transformer_layers(x, p, heads):
    b, n, dim = x.shape
    depth, _, _, d_head = p["wq"].shape
    hidden = p["w1"].shape[-1]

    def vec(last):  # (depth, 1, last) parameter selected by layer index
        return pl.BlockSpec((1, 1, last), lambda i, l: (l, 0, 0))

    # NOTE: input_output_aliases={0: 0} would save one (b, n, dim) HBM
    # allocation here; omitted to keep the call maximally portable.
    return pl.pallas_call(
        _make_layer_stack_kernel(heads),
        out_shape=jax.ShapeDtypeStruct((b, n, dim), x.dtype),
        grid_spec=pltpu.PrefetchScalarGridSpec(
            num_scalar_prefetch=0,
            grid=(b, depth),                    # depth innermost ("arbitrary")
            in_specs=[
                pl.BlockSpec((1, n, dim), lambda i, l: (i, 0, 0)),                # x
                vec(dim), vec(dim),                                               # ln1 g, b
                pl.BlockSpec((1, heads, dim, d_head), lambda i, l: (l, 0, 0, 0)),  # Wq (scaled)
                pl.BlockSpec((1, heads, dim, d_head), lambda i, l: (l, 0, 0, 0)),  # Wk
                pl.BlockSpec((1, heads, dim, d_head), lambda i, l: (l, 0, 0, 0)),  # Wv
                pl.BlockSpec((1, heads, d_head, dim), lambda i, l: (l, 0, 0, 0)),  # Wo
                vec(dim),                                                         # bo
                vec(dim), vec(dim),                                               # ln2 g, b
                pl.BlockSpec((1, dim, hidden), lambda i, l: (l, 0, 0)),           # W1
                vec(hidden),                                                      # b1
                pl.BlockSpec((1, hidden, dim), lambda i, l: (l, 0, 0)),           # W2
                vec(dim),                                                         # b2
            ],
            out_specs=pl.BlockSpec((1, n, dim), lambda i, l: (i, 0, 0)),
            scratch_shapes=[pltpu.VMEM((n, dim), jnp.float32)],
        ),
        compiler_params=pltpu.CompilerParams(
            dimension_semantics=("parallel", "arbitrary"),
            vmem_limit_bytes=_vmem_limit_bytes()),
    )(x, p["ln1_g"], p["ln1_b"], p["wq"], p["wk"], p["wv"], p["wo"], p["bo"],
      p["ln2_g"], p["ln2_b"], p["w1"], p["b1"], p["w2"], p["b2"])


# ---------------------------------------------------------------------------
# Optional output head: out = GeLU(x) @ W + b
# ---------------------------------------------------------------------------
def _head_kernel(x_ref, w_ref, b_ref, o_ref):
    x = _gelu(x_ref[...].astype(jnp.float32))
    y = jnp.dot(x.astype(w_ref.dtype), w_ref[...],
                preferred_element_type=jnp.float32) + b_ref[...]
    o_ref[...] = y.astype(o_ref.dtype)


def _row_tile(rows):
    # Big tiles amortize the ~0.35 us per-grid-step cost.
    # TODO(synk): derive the cap from the per-generation VMEM budget at very
    #             large dim (smaller on v7x's 64 MiB).
    for t in (1024, 512, 256, 128, 64, 32, 16, 8):
        if rows % t == 0:
            return t
    return rows


def out_head(x, w, b):
    bb, n, dim = x.shape
    out_dim = w.shape[1]
    rows = bb * n
    tile = _row_tile(rows)
    x2 = x.reshape(rows, dim)     # fold (batch, seq) -> fills the MXU M dim
    out = pl.pallas_call(
        _head_kernel,
        out_shape=jax.ShapeDtypeStruct((rows, out_dim), x.dtype),
        grid_spec=pltpu.PrefetchScalarGridSpec(
            num_scalar_prefetch=0,
            grid=(rows // tile,),
            in_specs=[
                pl.BlockSpec((tile, dim), lambda i: (i, 0)),
                pl.BlockSpec((dim, out_dim), lambda i: (0, 0)),
                pl.BlockSpec((1, out_dim), lambda i: (0, 0)),
            ],
            out_specs=pl.BlockSpec((tile, out_dim), lambda i: (i, 0)),
        ),
        compiler_params=pltpu.CompilerParams(
            dimension_semantics=("parallel",),
            vmem_limit_bytes=_vmem_limit_bytes()),
    )(x2, w, b)
    return out.reshape(bb, n, out_dim)


# ---------------------------------------------------------------------------
# One-time parameter preparation (hoisted out of the jitted forward)
# ---------------------------------------------------------------------------
def prepare_params(layers, head, heads, matmul_dtype=jnp.bfloat16):
    """Stack per-layer weights along depth, fold the softmax scale into Wq,
    rearrange head-major (in, out), and cast matmul weights to `matmul_dtype`.
    Done once; the jitted forward does no weight preprocessing."""
    dim = layers[0]["w_qkv"].shape[0]
    d_head = dim // heads
    scale = dim ** (-0.5)         # full `dim`, exactly as in the PyTorch module

    def per_head(w):              # (dim, dim) -> (heads, dim, d_head)
        return w.reshape(dim, heads, d_head).transpose(1, 0, 2)

    def stk(key, f=lambda a: a):
        return jnp.stack([f(p[key]) for p in layers])

    packed = dict(
        ln1_g=stk("ln1_g", lambda a: a.reshape(1, dim)),
        ln1_b=stk("ln1_b", lambda a: a.reshape(1, dim)),
        wq=stk("w_qkv", lambda a: per_head(a[:, 0 * dim:1 * dim] * scale)
               ).astype(matmul_dtype),
        wk=stk("w_qkv", lambda a: per_head(a[:, 1 * dim:2 * dim])
               ).astype(matmul_dtype),
        wv=stk("w_qkv", lambda a: per_head(a[:, 2 * dim:3 * dim])
               ).astype(matmul_dtype),
        wo=stk("w_out", lambda a: a.reshape(heads, d_head, dim)
               ).astype(matmul_dtype),
        bo=stk("b_out", lambda a: a.reshape(1, dim)),
        ln2_g=stk("ln2_g", lambda a: a.reshape(1, dim)),
        ln2_b=stk("ln2_b", lambda a: a.reshape(1, dim)),
        w1=stk("w1").astype(matmul_dtype),
        b1=stk("b1", lambda a: a.reshape(1, -1)),
        w2=stk("w2").astype(matmul_dtype),
        b2=stk("b2", lambda a: a.reshape(1, dim)),
    )
    head_p = None
    if head is not None:
        head_p = dict(w=head["w"].astype(matmul_dtype),
                      b=head["b"].reshape(1, -1).astype(jnp.float32))
    return packed, head_p


@functools.partial(jax.jit, static_argnames=("heads",))
def transformer_forward(x, layer_params, head_params, heads):
    """Pallas-backed Transformer.forward (mask=None, pos=None, eval)."""
    x = transformer_layers(x, layer_params, heads)
    if head_params is not None:
        x = out_head(x, head_params["w"], head_params["b"])
    return x


# ---------------------------------------------------------------------------
# Pure-JAX reference mirroring the PyTorch module
# ---------------------------------------------------------------------------
def transformer_reference(x, layers, head, heads):
    b, n, dim = x.shape
    d = dim // heads
    scale = dim ** (-0.5)

    def ln(t, g, bb):
        mu = jnp.mean(t, axis=-1, keepdims=True)
        var = jnp.mean((t - mu) ** 2, axis=-1, keepdims=True)
        return (t - mu) / jnp.sqrt(var + _LN_EPS) * g + bb

    def gelu(t):
        return t * 0.5 * (1.0 + jax.scipy.special.erf(t / math.sqrt(2.0)))

    for p in layers:
        xn = ln(x, p["ln1_g"], p["ln1_b"])
        qkv = xn @ p["w_qkv"]
        q, k, v = jnp.split(qkv, 3, axis=-1)

        def to_heads(t):
            return t.reshape(b, n, heads, d).transpose(0, 2, 1, 3)

        q, k, v = map(to_heads, (q, k, v))
        dots = jnp.einsum("bhid,bhjd->bhij", q, k) * scale
        attn = jax.nn.softmax(dots, axis=-1)
        o = jnp.einsum("bhij,bhjd->bhid", attn, v)
        o = o.transpose(0, 2, 1, 3).reshape(b, n, dim)
        x = x + (o @ p["w_out"] + p["b_out"])

        xn = ln(x, p["ln2_g"], p["ln2_b"])
        hmid = gelu(xn @ p["w1"] + p["b1"])
        x = x + (hmid @ p["w2"] + p["b2"])

    if head is not None:
        x = gelu(x) @ head["w"] + head["b"]
    return x


# ---------------------------------------------------------------------------
# Demo / correctness check
# ---------------------------------------------------------------------------
def _uniform(key, shape, bound):
    return jax.random.uniform(key, shape, jnp.float32, minval=-bound, maxval=bound)


def init_params(key, dim, depth, mlp_dim, out_dim):
    keys = iter(jax.random.split(key, depth * 12 + 4))
    bd = 1.0 / math.sqrt(dim)
    bh = 1.0 / math.sqrt(mlp_dim)
    layers = []
    for _ in range(depth):
        layers.append(dict(
            ln1_g=1.0 + 0.1 * jax.random.normal(next(keys), (dim,), jnp.float32),
            ln1_b=0.1 * jax.random.normal(next(keys), (dim,), jnp.float32),
            w_qkv=_uniform(next(keys), (dim, 3 * dim), bd),
            w_out=_uniform(next(keys), (dim, dim), bd),
            b_out=_uniform(next(keys), (dim,), bd),
            ln2_g=1.0 + 0.1 * jax.random.normal(next(keys), (dim,), jnp.float32),
            ln2_b=0.1 * jax.random.normal(next(keys), (dim,), jnp.float32),
            w1=_uniform(next(keys), (dim, mlp_dim), bd),
            b1=_uniform(next(keys), (mlp_dim,), bd),
            w2=_uniform(next(keys), (mlp_dim, dim), bh),
            b2=_uniform(next(keys), (dim,), bh),
        ))
    head = dict(w=_uniform(next(keys), (dim, out_dim), bd),
                b=_uniform(next(keys), (out_dim,), bd)) if out_dim is not None else None
    return layers, head


if __name__ == "__main__":
    batch, seq, dim, heads = 2, 8, 32, 4
    depth, mlp_dim, out_dim = 2, 64, 32

    key = jax.random.PRNGKey(0)
    kx, kp = jax.random.split(key)
    x = jax.random.normal(kx, (batch, seq, dim), dtype=jnp.float32)
    layers, head = init_params(kp, dim, depth, mlp_dim, out_dim)

    ref = transformer_reference(x, layers, head, heads)

    # f32 matmul path: tight check that the fused kernel math is exact.
    p32, h32 = prepare_params(layers, head, heads, matmul_dtype=jnp.float32)
    out32 = jax.block_until_ready(transformer_forward(x, p32, h32, heads))
    assert out32.shape == (batch, seq, out_dim)
    assert jnp.allclose(out32, ref, atol=2e-3, rtol=2e-3), "f32 mismatch vs reference"

    # bf16 matmul path (production MXU config for v6e/v7x): looser tolerance
    # covers bf16 quantization of weights/activations at this small dim.
    pbf, hbf = prepare_params(layers, head, heads, matmul_dtype=jnp.bfloat16)
    outbf = jax.block_until_ready(transformer_forward(x, pbf, hbf, heads))
    assert outbf.shape == (batch, seq, out_dim)
    assert jnp.allclose(outbf, ref, atol=1e-1, rtol=1e-1), "bf16 mismatch vs reference"

    print("KERNEL_OK")
</pallas_src>

<mosaic_0001>
module attributes {stable_mosaic.version = 11 : i64} {
  func.func @_head_kernel(%arg0: i32, %arg1: memref<16x32xf32, #tpu.memory_space<vmem>>, %arg2: memref<32x32xf32, #tpu.memory_space<vmem>>, %arg3: memref<1x32xf32, #tpu.memory_space<vmem>>, %arg4: memref<16x32xf32, #tpu.memory_space<vmem>>) attributes {dimension_semantics = [#tpu.dimension_semantics<parallel>], iteration_bounds = array<i64: 1>, scalar_prefetch = 0 : i64, scratch_operands = 0 : i64, tpu.core_type = #tpu.core_type<tc>, window_params = [{transform_indices = @transform_0, window_bounds = array<i64: 16, 32>}, {pipeline_mode = #tpu.pipeline_mode<synchronous>, transform_indices = @transform_1, window_bounds = array<i64: 32, 32>}, {pipeline_mode = #tpu.pipeline_mode<synchronous>, transform_indices = @transform_2, window_bounds = array<i64: 1, 32>}, {transform_indices = @transform_3, window_bounds = array<i64: 16, 32>}]} {
    %c0 = arith.constant 0 : index
    %c0_0 = arith.constant 0 : index
    %0 = vector.load %arg1[%c0, %c0_0] : memref<16x32xf32, #tpu.memory_space<vmem>>, vector<16x32xf32>
    %cst = arith.constant 5.000000e-01 : f32
    %1 = vector.broadcast %cst : f32 to vector<16x32xf32>
    %2 = arith.mulf %0, %1 : vector<16x32xf32>
    %cst_1 = arith.constant 0.707106769 : f32
    %3 = vector.broadcast %cst_1 : f32 to vector<16x32xf32>
    %4 = arith.mulf %0, %3 : vector<16x32xf32>
    %5 = math.absf %4 : vector<16x32xf32>
    %cst_2 = arith.constant 0.327591091 : f32
    %6 = vector.broadcast %cst_2 : f32 to vector<16x32xf32>
    %7 = arith.mulf %6, %5 : vector<16x32xf32>
    %cst_3 = arith.constant 1.000000e+00 : f32
    %8 = vector.broadcast %cst_3 : f32 to vector<16x32xf32>
    %9 = arith.addf %8, %7 : vector<16x32xf32>
    %10 = tpu.reciprocal %9 {approx = true} : vector<16x32xf32> -> vector<16x32xf32>
    %11 = arith.mulf %9, %10 : vector<16x32xf32>
    %cst_4 = arith.constant 2.000000e+00 : f32
    %12 = vector.broadcast %cst_4 : f32 to vector<16x32xf32>
    %13 = arith.subf %12, %11 : vector<16x32xf32>
    %14 = arith.mulf %10, %13 : vector<16x32xf32>
    %cst_5 = arith.constant 1.06140542 : f32
    %15 = vector.broadcast %cst_5 : f32 to vector<16x32xf32>
    %16 = arith.mulf %15, %14 : vector<16x32xf32>
    %cst_6 = arith.constant -1.45315206 : f32
    %17 = vector.broadcast %cst_6 : f32 to vector<16x32xf32>
    %18 = arith.addf %16, %17 : vector<16x32xf32>
    %19 = arith.mulf %18, %14 : vector<16x32xf32>
    %cst_7 = arith.constant 1.42141378 : f32
    %20 = vector.broadcast %cst_7 : f32 to vector<16x32xf32>
    %21 = arith.addf %19, %20 : vector<16x32xf32>
    %22 = arith.mulf %21, %14 : vector<16x32xf32>
    %cst_8 = arith.constant -0.284496725 : f32
    %23 = vector.broadcast %cst_8 : f32 to vector<16x32xf32>
    %24 = arith.addf %22, %23 : vector<16x32xf32>
    %25 = arith.mulf %24, %14 : vector<16x32xf32>
    %cst_9 = arith.constant 0.254829586 : f32
    %26 = vector.broadcast %cst_9 : f32 to vector<16x32xf32>
    %27 = arith.addf %25, %26 : vector<16x32xf32>
    %28 = arith.mulf %27, %14 : vector<16x32xf32>
    %cst_10 = arith.constant 0.000000e+00 : f32
    %29 = vector.broadcast %cst_10 : f32 to vector<16x32xf32>
    %30 = arith.subf %29, %5 : vector<16x32xf32>
    %31 = arith.mulf %30, %5 : vector<16x32xf32>
    %32 = math.exp %31 : vector<16x32xf32>
    %33 = arith.mulf %28, %32 : vector<16x32xf32>
    %cst_11 = arith.constant 1.000000e+00 : f32
    %34 = vector.broadcast %cst_11 : f32 to vector<16x32xf32>
    %35 = arith.subf %34, %33 : vector<16x32xf32>
    %cst_12 = arith.constant 0.000000e+00 : f32
    %36 = vector.broadcast %cst_12 : f32 to vector<16x32xf32>
    %37 = arith.cmpf oge, %4, %36 : vector<16x32xf32>
    %cst_13 = arith.constant 0.000000e+00 : f32
    %38 = vector.broadcast %cst_13 : f32 to vector<16x32xf32>
    %39 = arith.subf %38, %35 : vector<16x32xf32>
    %40 = arith.select %37, %35, %39 : vector<16x32xi1>, vector<16x32xf32>
    %cst_14 = arith.constant 1.000000e+00 : f32
    %41 = vector.broadcast %cst_14 : f32 to vector<16x32xf32>
    %42 = arith.addf %41, %40 : vector<16x32xf32>
    %43 = arith.mulf %2, %42 : vector<16x32xf32>
    %c0_15 = arith.constant 0 : index
    %c0_16 = arith.constant 0 : index
    %44 = vector.load %arg2[%c0_15, %c0_16] : memref<32x32xf32, #tpu.memory_space<vmem>>, vector<32x32xf32>
    %cst_17 = arith.constant dense<0.000000e+00> : vector<16x32xf32>
    %45 = tpu.matmul %43, %44, %cst_17 {dimension_numbers = #tpu.dot_dimension_numbers<[1], [0], [0], [1], [0, 0, 1, 1], [], []>} : vector<16x32xf32>, vector<32x32xf32>, vector<16x32xf32> -> vector<16x32xf32>
    %c0_18 = arith.constant 0 : index
    %c0_19 = arith.constant 0 : index
    %46 = vector.load %arg3[%c0_18, %c0_19] : memref<1x32xf32, #tpu.memory_space<vmem>>, vector<1x32xf32>
    %47 = vector.broadcast %46 : vector<1x32xf32> to vector<16x32xf32>
    %48 = arith.addf %45, %47 : vector<16x32xf32>
    %c0_20 = arith.constant 0 : index
    %c0_21 = arith.constant 0 : index
    %49 = vector.load %arg4[%c0_20, %c0_21] : memref<16x32xf32, #tpu.memory_space<vmem>>, vector<16x32xf32>
    tpu.vector_store %arg4[%c0_20, %c0_21], %48 {strides = array<i32>} : memref<16x32xf32, #tpu.memory_space<vmem>>, vector<16x32xf32>,
    return
  }
  func.func @transform_0(%arg0: i32) -> (i32, i32) {
    %c0_i32 = arith.constant 0 : i32
    %c0_i32_0 = arith.constant 0 : i32
    return %arg0, %c0_i32 : i32, i32
  }
  func.func @transform_1(%arg0: i32) -> (i32, i32) {
    %c0_i32 = arith.constant 0 : i32
    %c0_i32_0 = arith.constant 0 : i32
    %c0_i32_1 = arith.constant 0 : i32
    return %c0_i32, %c0_i32_0 : i32, i32
  }
  func.func @transform_2(%arg0: i32) -> (i32, i32) {
    %c0_i32 = arith.constant 0 : i32
    %c0_i32_0 = arith.constant 0 : i32
    %c0_i32_1 = arith.constant 0 : i32
    return %c0_i32, %c0_i32_0 : i32, i32
  }
  func.func @transform_3(%arg0: i32) -> (i32, i32) {
    %c0_i32 = arith.constant 0 : i32
    %c0_i32_0 = arith.constant 0 : i32
    return %arg0, %c0_i32 : i32, i32
  }
}

module attributes {stable_mosaic.version = 11 : i64} {
  func.func @kernel(%arg0: i32, %arg1: i32, %arg2: memref<1x8x32xf32, #tpu.memory_space<vmem>>, %arg3: memref<1x1x32xf32, #tpu.memory_space<vmem>>, %arg4: memref<1x1x32xf32, #tpu.memory_space<vmem>>, %arg5: memref<1x4x32x8xf32, #tpu.memory_space<vmem>>, %arg6: memref<1x4x32x8xf32, #tpu.memory_space<vmem>>, %arg7: memref<1x4x32x8xf32, #tpu.memory_space<vmem>>, %arg8: memref<1x4x8x32xf32, #tpu.memory_space<vmem>>, %arg9: memref<1x1x32xf32, #tpu.memory_space<vmem>>, %arg10: memref<1x1x32xf32, #tpu.memory_space<vmem>>, %arg11: memref<1x1x32xf32, #tpu.memory_space<vmem>>, %arg12: memref<1x32x64xf32, #tpu.memory_space<vmem>>, %arg13: memref<1x1x64xf32, #tpu.memory_space<vmem>>, %arg14: memref<1x64x32xf32, #tpu.memory_space<vmem>>, %arg15: memref<1x1x32xf32, #tpu.memory_space<vmem>>, %arg16: memref<1x8x32xf32, #tpu.memory_space<vmem>>, %arg17: memref<8x32xf32, #tpu.memory_space<vmem>>) attributes {dimension_semantics = [#tpu.dimension_semantics<parallel>, #tpu.dimension_semantics<arbitrary>], iteration_bounds = array<i64: 2, 2>, scalar_prefetch = 0 : i64, scratch_operands = 1 : i64, tpu.core_type = #tpu.core_type<tc>, window_params = [{transform_indices = @transform_0, window_bounds = array<i64: 1, 8, 32>}, {transform_indices = @transform_1, window_bounds = array<i64: 1, 1, 32>}, {transform_indices = @transform_2, window_bounds = array<i64: 1, 1, 32>}, {transform_indices = @transform_3, window_bounds = array<i64: 1, 4, 32, 8>}, {transform_indices = @transform_4, window_bounds = array<i64: 1, 4, 32, 8>}, {transform_indices = @transform_5, window_bounds = array<i64: 1, 4, 32, 8>}, {transform_indices = @transform_6, window_bounds = array<i64: 1, 4, 8, 32>}, {transform_indices = @transform_7, window_bounds = array<i64: 1, 1, 32>}, {transform_indices = @transform_8, window_bounds = array<i64: 1, 1, 32>}, {transform_indices = @transform_9, window_bounds = array<i64: 1, 1, 32>}, {transform_indices = @transform_10, window_bounds = array<i64: 1, 32, 64>}, {transform_indices = @transform_11, window_bounds = array<i64: 1, 1, 64>}, {transform_indices = @transform_12, window_bounds = array<i64: 1, 64, 32>}, {transform_indices = @transform_13, window_bounds = array<i64: 1, 1, 32>}, {transform_indices = @transform_14, window_bounds = array<i64: 1, 8, 32>}]} {
    %c0_i32 = arith.constant 0 : i32
    %0 = arith.cmpi eq, %arg1, %c0_i32 : i32
    %1 = arith.extui %0 : i1 to i32
    %c0_i32_0 = arith.constant 0 : i32
    %2 = arith.cmpi ne, %1, %c0_i32_0 : i32
    scf.if %2 {
      %c0_156 = arith.constant 0 : index
      %c0_157 = arith.constant 0 : index
      %c0_158 = arith.constant 0 : index
      %236 = vector.load %arg2[%c0_156, %c0_157, %c0_158] : memref<1x8x32xf32, #tpu.memory_space<vmem>>, vector<1x8x32xf32>
      %237 = vector.shape_cast %236 : vector<1x8x32xf32> to vector<8x32xf32>
      %c0_159 = arith.constant 0 : index
      %c0_160 = arith.constant 0 : index
      %238 = vector.load %arg17[%c0_159, %c0_160] : memref<8x32xf32, #tpu.memory_space<vmem>>, vector<8x32xf32>
      tpu.vector_store %arg17[%c0_159, %c0_160], %237 {strides = array<i32>} : memref<8x32xf32, #tpu.memory_space<vmem>>, vector<8x32xf32>,
    } else {
    }
    %c0 = arith.constant 0 : index
    %c0_1 = arith.constant 0 : index
    %3 = vector.load %arg17[%c0, %c0_1] : memref<8x32xf32, #tpu.memory_space<vmem>>, vector<8x32xf32>
    %c0_2 = arith.constant 0 : index
    %c0_3 = arith.constant 0 : index
    %c0_4 = arith.constant 0 : index
    %4 = vector.load %arg3[%c0_2, %c0_3, %c0_4] : memref<1x1x32xf32, #tpu.memory_space<vmem>>, vector<1x1x32xf32>
    %5 = vector.shape_cast %4 : vector<1x1x32xf32> to vector<1x32xf32>
    %c0_5 = arith.constant 0 : index
    %c0_6 = arith.constant 0 : index
    %c0_7 = arith.constant 0 : index
    %6 = vector.load %arg4[%c0_5, %c0_6, %c0_7] : memref<1x1x32xf32, #tpu.memory_space<vmem>>, vector<1x1x32xf32>
    %7 = vector.shape_cast %6 : vector<1x1x32xf32> to vector<1x32xf32>
    %cst = arith.constant dense<0.000000e+00> : vector<8xf32>
    %8 = vector.multi_reduction <add>, %3, %cst [1] : vector<8x32xf32> to vector<8xf32>
    %9 = vector.shape_cast %8 : vector<8xf32> to vector<8x1xf32>
    %cst_8 = arith.constant 3.200000e+01 : f32
    %10 = vector.broadcast %cst_8 : f32 to vector<8x1xf32>
    %11 = arith.divf %9, %10 : vector<8x1xf32>
    %12 = vector.broadcast %11 : vector<8x1xf32> to vector<8x32xf32>
    %13 = arith.subf %3, %12 : vector<8x32xf32>
    %14 = arith.mulf %13, %13 : vector<8x32xf32>
    %cst_9 = arith.constant dense<0.000000e+00> : vector<8xf32>
    %15 = vector.multi_reduction <add>, %14, %cst_9 [1] : vector<8x32xf32> to vector<8xf32>
    %16 = vector.shape_cast %15 : vector<8xf32> to vector<8x1xf32>
    %cst_10 = arith.constant 3.200000e+01 : f32
    %17 = vector.broadcast %cst_10 : f32 to vector<8x1xf32>
    %18 = arith.divf %16, %17 : vector<8x1xf32>
    %cst_11 = arith.constant 9.99999974E-6 : f32
    %19 = vector.broadcast %cst_11 : f32 to vector<8x1xf32>
    %20 = arith.addf %18, %19 : vector<8x1xf32>
    %21 = math.rsqrt %20 : vector<8x1xf32>
    %22 = vector.broadcast %21 : vector<8x1xf32> to vector<8x32xf32>
    %23 = arith.mulf %13, %22 : vector<8x32xf32>
    %24 = vector.broadcast %5 : vector<1x32xf32> to vector<8x32xf32>
    %25 = arith.mulf %23, %24 : vector<8x32xf32>
    %26 = vector.broadcast %7 : vector<1x32xf32> to vector<8x32xf32>
    %27 = arith.addf %25, %26 : vector<8x32xf32>
    %cst_12 = arith.constant 0.000000e+00 : f32
    %28 = vector.broadcast %cst_12 : f32 to vector<8x32xf32>
    %c0_13 = arith.constant 0 : index
    %c0_14 = arith.constant 0 : index
    %c0_15 = arith.constant 0 : index
    %c0_16 = arith.constant 0 : index
    %29 = vector.load %arg5[%c0_13, %c0_14, %c0_15, %c0_16] : memref<1x4x32x8xf32, #tpu.memory_space<vmem>>, vector<1x1x32x8xf32>
    %30 = vector.shape_cast %29 : vector<1x1x32x8xf32> to vector<32x8xf32>
    %cst_17 = arith.constant dense<0.000000e+00> : vector<8x8xf32>
    %31 = tpu.matmul %27, %30, %cst_17 {dimension_numbers = #tpu.dot_dimension_numbers<[1], [0], [0], [1], [0, 0, 1, 1], [], []>} : vector<8x32xf32>, vector<32x8xf32>, vector<8x8xf32> -> vector<8x8xf32>
    %c0_18 = arith.constant 0 : index
    %c0_19 = arith.constant 0 : index
    %c0_20 = arith.constant 0 : index
    %c0_21 = arith.constant 0 : index
    %32 = vector.load %arg6[%c0_18, %c0_19, %c0_20, %c0_21] : memref<1x4x32x8xf32, #tpu.memory_space<vmem>>, vector<1x1x32x8xf32>
    %33 = vector.shape_cast %32 : vector<1x1x32x8xf32> to vector<32x8xf32>
    %cst_22 = arith.constant dense<0.000000e+00> : vector<8x8xf32>
    %34 = tpu.matmul %27, %33, %cst_22 {dimension_numbers = #tpu.dot_dimension_numbers<[1], [0], [0], [1], [0, 0, 1, 1], [], []>} : vector<8x32xf32>, vector<32x8xf32>, vector<8x8xf32> -> vector<8x8xf32>
    %c0_23 = arith.constant 0 : index
    %c0_24 = arith.constant 0 : index
    %c0_25 = arith.constant 0 : index
    %c0_26 = arith.constant 0 : index
    %35 = vector.load %arg7[%c0_23, %c0_24, %c0_25, %c0_26] : memref<1x4x32x8xf32, #tpu.memory_space<vmem>>, vector<1x1x32x8xf32>
    %36 = vector.shape_cast %35 : vector<1x1x32x8xf32> to vector<32x8xf32>
    %cst_27 = arith.constant dense<0.000000e+00> : vector<8x8xf32>
    %37 = tpu.matmul %27, %36, %cst_27 {dimension_numbers = #tpu.dot_dimension_numbers<[1], [0], [0], [1], [0, 0, 1, 1], [], []>} : vector<8x32xf32>, vector<32x8xf32>, vector<8x8xf32> -> vector<8x8xf32>
    %cst_28 = arith.constant dense<0.000000e+00> : vector<8x8xf32>
    %38 = tpu.matmul %31, %34, %cst_28 {dimension_numbers = #tpu.dot_dimension_numbers<[1], [1], [0], [0], [0, 0, 1, 0], [], []>} : vector<8x8xf32>, vector<8x8xf32>, vector<8x8xf32> -> vector<8x8xf32>
    %cst_29 = arith.constant dense<0xFF800000> : vector<8xf32>
    %39 = vector.multi_reduction <maximumf>, %38, %cst_29 [1] : vector<8x8xf32> to vector<8xf32>
    %40 = vector.shape_cast %39 : vector<8xf32> to vector<8x1xf32>
    %41 = vector.broadcast %40 : vector<8x1xf32> to vector<8x8xf32>
    %42 = arith.subf %38, %41 : vector<8x8xf32>
    %43 = math.exp %42 : vector<8x8xf32>
    %cst_30 = arith.constant dense<0.000000e+00> : vector<8xf32>
    %44 = vector.multi_reduction <add>, %43, %cst_30 [1] : vector<8x8xf32> to vector<8xf32>
    %45 = vector.shape_cast %44 : vector<8xf32> to vector<8x1xf32>
    %46 = tpu.reciprocal %45 {approx = true} : vector<8x1xf32> -> vector<8x1xf32>
    %47 = arith.mulf %45, %46 : vector<8x1xf32>
    %cst_31 = arith.constant 2.000000e+00 : f32
    %48 = vector.broadcast %cst_31 : f32 to vector<8x1xf32>
    %49 = arith.subf %48, %47 : vector<8x1xf32>
    %50 = arith.mulf %46, %49 : vector<8x1xf32>
    %51 = vector.broadcast %50 : vector<8x1xf32> to vector<8x8xf32>
    %52 = arith.mulf %43, %51 : vector<8x8xf32>
    %cst_32 = arith.constant dense<0.000000e+00> : vector<8x8xf32>
    %53 = tpu.matmul %52, %37, %cst_32 {dimension_numbers = #tpu.dot_dimension_numbers<[1], [0], [0], [1], [0, 0, 1, 1], [], []>} : vector<8x8xf32>, vector<8x8xf32>, vector<8x8xf32> -> vector<8x8xf32>
    %c0_33 = arith.constant 0 : index
    %c0_34 = arith.constant 0 : index
    %c0_35 = arith.constant 0 : index
    %c0_36 = arith.constant 0 : index
    %54 = vector.load %arg8[%c0_33, %c0_34, %c0_35, %c0_36] : memref<1x4x8x32xf32, #tpu.memory_space<vmem>>, vector<1x1x8x32xf32>
    %55 = vector.shape_cast %54 : vector<1x1x8x32xf32> to vector<8x32xf32>
    %cst_37 = arith.constant dense<0.000000e+00> : vector<8x32xf32>
    %56 = tpu.matmul %53, %55, %cst_37 {dimension_numbers = #tpu.dot_dimension_numbers<[1], [0], [0], [1], [0, 0, 1, 1], [], []>} : vector<8x8xf32>, vector<8x32xf32>, vector<8x32xf32> -> vector<8x32xf32>
    %57 = arith.addf %28, %56 : vector<8x32xf32>
    %c0_38 = arith.constant 0 : index
    %c1 = arith.constant 1 : index
    %c0_39 = arith.constant 0 : index
    %c0_40 = arith.constant 0 : index
    %58 = vector.load %arg5[%c0_38, %c1, %c0_39, %c0_40] : memref<1x4x32x8xf32, #tpu.memory_space<vmem>>, vector<1x1x32x8xf32>
    %59 = vector.shape_cast %58 : vector<1x1x32x8xf32> to vector<32x8xf32>
    %cst_41 = arith.constant dense<0.000000e+00> : vector<8x8xf32>
    %60 = tpu.matmul %27, %59, %cst_41 {dimension_numbers = #tpu.dot_dimension_numbers<[1], [0], [0], [1], [0, 0, 1, 1], [], []>} : vector<8x32xf32>, vector<32x8xf32>, vector<8x8xf32> -> vector<8x8xf32>
    %c0_42 = arith.constant 0 : index
    %c1_43 = arith.constant 1 : index
    %c0_44 = arith.constant 0 : index
    %c0_45 = arith.constant 0 : index
    %61 = vector.load %arg6[%c0_42, %c1_43, %c0_44, %c0_45] : memref<1x4x32x8xf32, #tpu.memory_space<vmem>>, vector<1x1x32x8xf32>
    %62 = vector.shape_cast %61 : vector<1x1x32x8xf32> to vector<32x8xf32>
    %cst_46 = arith.constant dense<0.000000e+00> : vector<8x8xf32>
    %63 = tpu.matmul %27, %62, %cst_46 {dimension_numbers = #tpu.dot_dimension_numbers<[1], [0], [0], [1], [0, 0, 1, 1], [], []>} : vector<8x32xf32>, vector<32x8xf32>, vector<8x8xf32> -> vector<8x8xf32>
    %c0_47 = arith.constant 0 : index
    %c1_48 = arith.constant 1 : index
    %c0_49 = arith.constant 0 : index
    %c0_50 = arith.constant 0 : index
    %64 = vector.load %arg7[%c0_47, %c1_48, %c0_49, %c0_50] : memref<1x4x32x8xf32, #tpu.memory_space<vmem>>, vector<1x1x32x8xf32>
    %65 = vector.shape_cast %64 : vector<1x1x32x8xf32> to vector<32x8xf32>
    %cst_51 = arith.constant dense<0.000000e+00> : vector<8x8xf32>
    %66 = tpu.matmul %27, %65, %cst_51 {dimension_numbers = #tpu.dot_dimension_numbers<[1], [0], [0], [1], [0, 0, 1, 1], [], []>} : vector<8x32xf32>, vector<32x8xf32>, vector<8x8xf32> -> vector<8x8xf32>
    %cst_52 = arith.constant dense<0.000000e+00> : vector<8x8xf32>
    %67 = tpu.matmul %60, %63, %cst_52 {dimension_numbers = #tpu.dot_dimension_numbers<[1], [1], [0], [0], [0, 0, 1, 0], [], []>} : vector<8x8xf32>, vector<8x8xf32>, vector<8x8xf32> -> vector<8x8xf32>
    %cst_53 = arith.constant dense<0xFF800000> : vector<8xf32>
    %68 = vector.multi_reduction <maximumf>, %67, %cst_53 [1] : vector<8x8xf32> to vector<8xf32>
    %69 = vector.shape_cast %68 : vector<8xf32> to vector<8x1xf32>
    %70 = vector.broadcast %69 : vector<8x1xf32> to vector<8x8xf32>
    %71 = arith.subf %67, %70 : vector<8x8xf32>
    %72 = math.exp %71 : vector<8x8xf32>
    %cst_54 = arith.constant dense<0.000000e+00> : vector<8xf32>
    %73 = vector.multi_reduction <add>, %72, %cst_54 [1] : vector<8x8xf32> to vector<8xf32>
    %74 = vector.shape_cast %73 : vector<8xf32> to vector<8x1xf32>
    %75 = tpu.reciprocal %74 {approx = true} : vector<8x1xf32> -> vector<8x1xf32>
    %76 = arith.mulf %74, %75 : vector<8x1xf32>
    %cst_55 = arith.constant 2.000000e+00 : f32
    %77 = vector.broadcast %cst_55 : f32 to vector<8x1xf32>
    %78 = arith.subf %77, %76 : vector<8x1xf32>
    %79 = arith.mulf %75, %78 : vector<8x1xf32>
    %80 = vector.broadcast %79 : vector<8x1xf32> to vector<8x8xf32>
    %81 = arith.mulf %72, %80 : vector<8x8xf32>
    %cst_56 = arith.constant dense<0.000000e+00> : vector<8x8xf32>
    %82 = tpu.matmul %81, %66, %cst_56 {dimension_numbers = #tpu.dot_dimension_numbers<[1], [0], [0], [1], [0, 0, 1, 1], [], []>} : vector<8x8xf32>, vector<8x8xf32>, vector<8x8xf32> -> vector<8x8xf32>
    %c0_57 = arith.constant 0 : index
    %c1_58 = arith.constant 1 : index
    %c0_59 = arith.constant 0 : index
    %c0_60 = arith.constant 0 : index
    %83 = vector.load %arg8[%c0_57, %c1_58, %c0_59, %c0_60] : memref<1x4x8x32xf32, #tpu.memory_space<vmem>>, vector<1x1x8x32xf32>
    %84 = vector.shape_cast %83 : vector<1x1x8x32xf32> to vector<8x32xf32>
    %cst_61 = arith.constant dense<0.000000e+00> : vector<8x32xf32>
    %85 = tpu.matmul %82, %84, %cst_61 {dimension_numbers = #tpu.dot_dimension_numbers<[1], [0], [0], [1], [0, 0, 1, 1], [], []>} : vector<8x8xf32>, vector<8x32xf32>, vector<8x32xf32> -> vector<8x32xf32>
    %86 = arith.addf %57, %85 : vector<8x32xf32>
    %c0_62 = arith.constant 0 : index
    %c2 = arith.constant 2 : index
    %c0_63 = arith.constant 0 : index
    %c0_64 = arith.constant 0 : index
    %87 = vector.load %arg5[%c0_62, %c2, %c0_63, %c0_64] : memref<1x4x32x8xf32, #tpu.memory_space<vmem>>, vector<1x1x32x8xf32>
    %88 = vector.shape_cast %87 : vector<1x1x32x8xf32> to vector<32x8xf32>
    %cst_65 = arith.constant dense<0.000000e+00> : vector<8x8xf32>
    %89 = tpu.matmul %27, %88, %cst_65 {dimension_numbers = #tpu.dot_dimension_numbers<[1], [0], [0], [1], [0, 0, 1, 1], [], []>} : vector<8x32xf32>, vector<32x8xf32>, vector<8x8xf32> -> vector<8x8xf32>
    %c0_66 = arith.constant 0 : index
    %c2_67 = arith.constant 2 : index
    %c0_68 = arith.constant 0 : index
    %c0_69 = arith.constant 0 : index
    %90 = vector.load %arg6[%c0_66, %c2_67, %c0_68, %c0_69] : memref<1x4x32x8xf32, #tpu.memory_space<vmem>>, vector<1x1x32x8xf32>
    %91 = vector.shape_cast %90 : vector<1x1x32x8xf32> to vector<32x8xf32>
    %cst_70 = arith.constant dense<0.000000e+00> : vector<8x8xf32>
    %92 = tpu.matmul %27, %91, %cst_70 {dimension_numbers = #tpu.dot_dimension_numbers<[1], [0], [0], [1], [0, 0, 1, 1], [], []>} : vector<8x32xf32>, vector<32x8xf32>, vector<8x8xf32> -> vector<8x8xf32>
    %c0_71 = arith.constant 0 : index
    %c2_72 = arith.constant 2 : index
    %c0_73 = arith.constant 0 : index
    %c0_74 = arith.constant 0 : index
    %93 = vector.load %arg7[%c0_71, %c2_72, %c0_73, %c0_74] : memref<1x4x32x8xf32, #tpu.memory_space<vmem>>, vector<1x1x32x8xf32>
    %94 = vector.shape_cast %93 : vector<1x1x32x8xf32> to vector<32x8xf32>
    %cst_75 = arith.constant dense<0.000000e+00> : vector<8x8xf32>
    %95 = tpu.matmul %27, %94, %cst_75 {dimension_numbers = #tpu.dot_dimension_numbers<[1], [0], [0], [1], [0, 0, 1, 1], [], []>} : vector<8x32xf32>, vector<32x8xf32>, vector<8x8xf32> -> vector<8x8xf32>
    %cst_76 = arith.constant dense<0.000000e+00> : vector<8x8xf32>
    %96 = tpu.matmul %89, %92, %cst_76 {dimension_numbers = #tpu.dot_dimension_numbers<[1], [1], [0], [0], [0, 0, 1, 0], [], []>} : vector<8x8xf32>, vector<8x8xf32>, vector<8x8xf32> -> vector<8x8xf32>
    %cst_77 = arith.constant dense<0xFF800000> : vector<8xf32>
    %97 = vector.multi_reduction <maximumf>, %96, %cst_77 [1] : vector<8x8xf32> to vector<8xf32>
    %98 = vector.shape_cast %97 : vector<8xf32> to vector<8x1xf32>
    %99 = vector.broadcast %98 : vector<8x1xf32> to vector<8x8xf32>
    %100 = arith.subf %96, %99 : vector<8x8xf32>
    %101 = math.exp %100 : vector<8x8xf32>
    %cst_78 = arith.constant dense<0.000000e+00> : vector<8xf32>
    %102 = vector.multi_reduction <add>, %101, %cst_78 [1] : vector<8x8xf32> to vector<8xf32>
    %103 = vector.shape_cast %102 : vector<8xf32> to vector<8x1xf32>
    %104 = tpu.reciprocal %103 {approx = true} : vector<8x1xf32> -> vector<8x1xf32>
    %105 = arith.mulf %103, %104 : vector<8x1xf32>
    %cst_79 = arith.constant 2.000000e+00 : f32
    %106 = vector.broadcast %cst_79 : f32 to vector<8x1xf32>
    %107 = arith.subf %106, %105 : vector<8x1xf32>
    %108 = arith.mulf %104, %107 : vector<8x1xf32>
    %109 = vector.broadcast %108 : vector<8x1xf32> to vector<8x8xf32>
    %110 = arith.mulf %101, %109 : vector<8x8xf32>
    %cst_80 = arith.constant dense<0.000000e+00> : vector<8x8xf32>
    %111 = tpu.matmul %110, %95, %cst_80 {dimension_numbers = #tpu.dot_dimension_numbers<[1], [0], [0], [1], [0, 0, 1, 1], [], []>} : vector<8x8xf32>, vector<8x8xf32>, vector<8x8xf32> -> vector<8x8xf32>
    %c0_81 = arith.constant 0 : index
    %c2_82 = arith.constant 2 : index
    %c0_83 = arith.constant 0 : index
    %c0_84 = arith.constant 0 : index
    %112 = vector.load %arg8[%c0_81, %c2_82, %c0_83, %c0_84] : memref<1x4x8x32xf32, #tpu.memory_space<vmem>>, vector<1x1x8x32xf32>
    %113 = vector.shape_cast %112 : vector<1x1x8x32xf32> to vector<8x32xf32>
    %cst_85 = arith.constant dense<0.000000e+00> : vector<8x32xf32>
    %114 = tpu.matmul %111, %113, %cst_85 {dimension_numbers = #tpu.dot_dimension_numbers<[1], [0], [0], [1], [0, 0, 1, 1], [], []>} : vector<8x8xf32>, vector<8x32xf32>, vector<8x32xf32> -> vector<8x32xf32>
    %115 = arith.addf %86, %114 : vector<8x32xf32>
    %c0_86 = arith.constant 0 : index
    %c3 = arith.constant 3 : index
    %c0_87 = arith.constant 0 : index
    %c0_88 = arith.constant 0 : index
    %116 = vector.load %arg5[%c0_86, %c3, %c0_87, %c0_88] : memref<1x4x32x8xf32, #tpu.memory_space<vmem>>, vector<1x1x32x8xf32>
    %117 = vector.shape_cast %116 : vector<1x1x32x8xf32> to vector<32x8xf32>
    %cst_89 = arith.constant dense<0.000000e+00> : vector<8x8xf32>
    %118 = tpu.matmul %27, %117, %cst_89 {dimension_numbers = #tpu.dot_dimension_numbers<[1], [0], [0], [1], [0, 0, 1, 1], [], []>} : vector<8x32xf32>, vector<32x8xf32>, vector<8x8xf32> -> vector<8x8xf32>
    %c0_90 = arith.constant 0 : index
    %c3_91 = arith.constant 3 : index
    %c0_92 = arith.constant 0 : index
    %c0_93 = arith.constant 0 : index
    %119 = vector.load %arg6[%c0_90, %c3_91, %c0_92, %c0_93] : memref<1x4x32x8xf32, #tpu.memory_space<vmem>>, vector<1x1x32x8xf32>
    %120 = vector.shape_cast %119 : vector<1x1x32x8xf32> to vector<32x8xf32>
    %cst_94 = arith.constant dense<0.000000e+00> : vector<8x8xf32>
    %121 = tpu.matmul %27, %120, %cst_94 {dimension_numbers = #tpu.dot_dimension_numbers<[1], [0], [0], [1], [0, 0, 1, 1], [], []>} : vector<8x32xf32>, vector<32x8xf32>, vector<8x8xf32> -> vector<8x8xf32>
    %c0_95 = arith.constant 0 : index
    %c3_96 = arith.constant 3 : index
    %c0_97 = arith.constant 0 : index
    %c0_98 = arith.constant 0 : index
    %122 = vector.load %arg7[%c0_95, %c3_96, %c0_97, %c0_98] : memref<1x4x32x8xf32, #tpu.memory_space<vmem>>, vector<1x1x32x8xf32>
    %123 = vector.shape_cast %122 : vector<1x1x32x8xf32> to vector<32x8xf32>
    %cst_99 = arith.constant dense<0.000000e+00> : vector<8x8xf32>
    %124 = tpu.matmul %27, %123, %cst_99 {dimension_numbers = #tpu.dot_dimension_numbers<[1], [0], [0], [1], [0, 0, 1, 1], [], []>} : vector<8x32xf32>, vector<32x8xf32>, vector<8x8xf32> -> vector<8x8xf32>
    %cst_100 = arith.constant dense<0.000000e+00> : vector<8x8xf32>
    %125 = tpu.matmul %118, %121, %cst_100 {dimension_numbers = #tpu.dot_dimension_numbers<[1], [1], [0], [0], [0, 0, 1, 0], [], []>} : vector<8x8xf32>, vector<8x8xf32>, vector<8x8xf32> -> vector<8x8xf32>
    %cst_101 = arith.constant dense<0xFF800000> : vector<8xf32>
    %126 = vector.multi_reduction <maximumf>, %125, %cst_101 [1] : vector<8x8xf32> to vector<8xf32>
    %127 = vector.shape_cast %126 : vector<8xf32> to vector<8x1xf32>
    %128 = vector.broadcast %127 : vector<8x1xf32> to vector<8x8xf32>
    %129 = arith.subf %125, %128 : vector<8x8xf32>
    %130 = math.exp %129 : vector<8x8xf32>
    %cst_102 = arith.constant dense<0.000000e+00> : vector<8xf32>
    %131 = vector.multi_reduction <add>, %130, %cst_102 [1] : vector<8x8xf32> to vector<8xf32>
    %132 = vector.shape_cast %131 : vector<8xf32> to vector<8x1xf32>
    %133 = tpu.reciprocal %132 {approx = true} : vector<8x1xf32> -> vector<8x1xf32>
    %134 = arith.mulf %132, %133 : vector<8x1xf32>
    %cst_103 = arith.constant 2.000000e+00 : f32
    %135 = vector.broadcast %cst_103 : f32 to vector<8x1xf32>
    %136 = arith.subf %135, %134 : vector<8x1xf32>
    %137 = arith.mulf %133, %136 : vector<8x1xf32>
    %138 = vector.broadcast %137 : vector<8x1xf32> to vector<8x8xf32>
    %139 = arith.mulf %130, %138 : vector<8x8xf32>
    %cst_104 = arith.constant dense<0.000000e+00> : vector<8x8xf32>
    %140 = tpu.matmul %139, %124, %cst_104 {dimension_numbers = #tpu.dot_dimension_numbers<[1], [0], [0], [1], [0, 0, 1, 1], [], []>} : vector<8x8xf32>, vector<8x8xf32>, vector<8x8xf32> -> vector<8x8xf32>
    %c0_105 = arith.constant 0 : index
    %c3_106 = arith.constant 3 : index
    %c0_107 = arith.constant 0 : index
    %c0_108 = arith.constant 0 : index
    %141 = vector.load %arg8[%c0_105, %c3_106, %c0_107, %c0_108] : memref<1x4x8x32xf32, #tpu.memory_space<vmem>>, vector<1x1x8x32xf32>
    %142 = vector.shape_cast %141 : vector<1x1x8x32xf32> to vector<8x32xf32>
    %cst_109 = arith.constant dense<0.000000e+00> : vector<8x32xf32>
    %143 = tpu.matmul %140, %142, %cst_109 {dimension_numbers = #tpu.dot_dimension_numbers<[1], [0], [0], [1], [0, 0, 1, 1], [], []>} : vector<8x8xf32>, vector<8x32xf32>, vector<8x32xf32> -> vector<8x32xf32>
    %144 = arith.addf %115, %143 : vector<8x32xf32>
    %145 = arith.addf %3, %144 : vector<8x32xf32>
    %c0_110 = arith.constant 0 : index
    %c0_111 = arith.constant 0 : index
    %c0_112 = arith.constant 0 : index
    %146 = vector.load %arg9[%c0_110, %c0_111, %c0_112] : memref<1x1x32xf32, #tpu.memory_space<vmem>>, vector<1x1x32xf32>
    %147 = vector.shape_cast %146 : vector<1x1x32xf32> to vector<1x32xf32>
    %148 = vector.broadcast %147 : vector<1x32xf32> to vector<8x32xf32>
    %149 = arith.addf %145, %148 : vector<8x32xf32>
    %c0_113 = arith.constant 0 : index
    %c0_114 = arith.constant 0 : index
    %c0_115 = arith.constant 0 : index
    %150 = vector.load %arg10[%c0_113, %c0_114, %c0_115] : memref<1x1x32xf32, #tpu.memory_space<vmem>>, vector<1x1x32xf32>
    %151 = vector.shape_cast %150 : vector<1x1x32xf32> to vector<1x32xf32>
    %c0_116 = arith.constant 0 : index
    %c0_117 = arith.constant 0 : index
    %c0_118 = arith.constant 0 : index
    %152 = vector.load %arg11[%c0_116, %c0_117, %c0_118] : memref<1x1x32xf32, #tpu.memory_space<vmem>>, vector<1x1x32xf32>
    %153 = vector.shape_cast %152 : vector<1x1x32xf32> to vector<1x32xf32>
    %cst_119 = arith.constant dense<0.000000e+00> : vector<8xf32>
    %154 = vector.multi_reduction <add>, %149, %cst_119 [1] : vector<8x32xf32> to vector<8xf32>
    %155 = vector.shape_cast %154 : vector<8xf32> to vector<8x1xf32>
    %cst_120 = arith.constant 3.200000e+01 : f32
    %156 = vector.broadcast %cst_120 : f32 to vector<8x1xf32>
    %157 = arith.divf %155, %156 : vector<8x1xf32>
    %158 = vector.broadcast %157 : vector<8x1xf32> to vector<8x32xf32>
    %159 = arith.subf %149, %158 : vector<8x32xf32>
    %160 = arith.mulf %159, %159 : vector<8x32xf32>
    %cst_121 = arith.constant dense<0.000000e+00> : vector<8xf32>
    %161 = vector.multi_reduction <add>, %160, %cst_121 [1] : vector<8x32xf32> to vector<8xf32>
    %162 = vector.shape_cast %161 : vector<8xf32> to vector<8x1xf32>
    %cst_122 = arith.constant 3.200000e+01 : f32
    %163 = vector.broadcast %cst_122 : f32 to vector<8x1xf32>
    %164 = arith.divf %162, %163 : vector<8x1xf32>
    %cst_123 = arith.constant 9.99999974E-6 : f32
    %165 = vector.broadcast %cst_123 : f32 to vector<8x1xf32>
    %166 = arith.addf %164, %165 : vector<8x1xf32>
    %167 = math.rsqrt %166 : vector<8x1xf32>
    %168 = vector.broadcast %167 : vector<8x1xf32> to vector<8x32xf32>
    %169 = arith.mulf %159, %168 : vector<8x32xf32>
    %170 = vector.broadcast %151 : vector<1x32xf32> to vector<8x32xf32>
    %171 = arith.mulf %169, %170 : vector<8x32xf32>
    %172 = vector.broadcast %153 : vector<1x32xf32> to vector<8x32xf32>
    %173 = arith.addf %171, %172 : vector<8x32xf32>
    %c0_124 = arith.constant 0 : index
    %c0_125 = arith.constant 0 : index
    %c0_126 = arith.constant 0 : index
    %174 = vector.load %arg12[%c0_124, %c0_125, %c0_126] : memref<1x32x64xf32, #tpu.memory_space<vmem>>, vector<1x32x64xf32>
    %175 = vector.shape_cast %174 : vector<1x32x64xf32> to vector<32x64xf32>
    %cst_127 = arith.constant dense<0.000000e+00> : vector<8x64xf32>
    %176 = tpu.matmul %173, %175, %cst_127 {dimension_numbers = #tpu.dot_dimension_numbers<[1], [0], [0], [1], [0, 0, 1, 1], [], []>} : vector<8x32xf32>, vector<32x64xf32>, vector<8x64xf32> -> vector<8x64xf32>
    %c0_128 = arith.constant 0 : index
    %c0_129 = arith.constant 0 : index
    %c0_130 = arith.constant 0 : index
    %177 = vector.load %arg13[%c0_128, %c0_129, %c0_130] : memref<1x1x64xf32, #tpu.memory_space<vmem>>, vector<1x1x64xf32>
    %178 = vector.shape_cast %177 : vector<1x1x64xf32> to vector<1x64xf32>
    %179 = vector.broadcast %178 : vector<1x64xf32> to vector<8x64xf32>
    %180 = arith.addf %176, %179 : vector<8x64xf32>
    %cst_131 = arith.constant 5.000000e-01 : f32
    %181 = vector.broadcast %cst_131 : f32 to vector<8x64xf32>
    %182 = arith.mulf %180, %181 : vector<8x64xf32>
    %cst_132 = arith.constant 0.707106769 : f32
    %183 = vector.broadcast %cst_132 : f32 to vector<8x64xf32>
    %184 = arith.mulf %180, %183 : vector<8x64xf32>
    %185 = math.absf %184 : vector<8x64xf32>
    %cst_133 = arith.constant 0.327591091 : f32
    %186 = vector.broadcast %cst_133 : f32 to vector<8x64xf32>
    %187 = arith.mulf %186, %185 : vector<8x64xf32>
    %cst_134 = arith.constant 1.000000e+00 : f32
    %188 = vector.broadcast %cst_134 : f32 to vector<8x64xf32>
    %189 = arith.addf %188, %187 : vector<8x64xf32>
    %190 = tpu.reciprocal %189 {approx = true} : vector<8x64xf32> -> vector<8x64xf32>
    %191 = arith.mulf %189, %190 : vector<8x64xf32>
    %cst_135 = arith.constant 2.000000e+00 : f32
    %192 = vector.broadcast %cst_135 : f32 to vector<8x64xf32>
    %193 = arith.subf %192, %191 : vector<8x64xf32>
    %194 = arith.mulf %190, %193 : vector<8x64xf32>
    %cst_136 = arith.constant 1.06140542 : f32
    %195 = vector.broadcast %cst_136 : f32 to vector<8x64xf32>
    %196 = arith.mulf %195, %194 : vector<8x64xf32>
    %cst_137 = arith.constant -1.45315206 : f32
    %197 = vector.broadcast %cst_137 : f32 to vector<8x64xf32>
    %198 = arith.addf %196, %197 : vector<8x64xf32>
    %199 = arith.mulf %198, %194 : vector<8x64xf32>
    %cst_138 = arith.constant 1.42141378 : f32
    %200 = vector.broadcast %cst_138 : f32 to vector<8x64xf32>
    %201 = arith.addf %199, %200 : vector<8x64xf32>
    %202 = arith.mulf %201, %194 : vector<8x64xf32>
    %cst_139 = arith.constant -0.284496725 : f32
    %203 = vector.broadcast %cst_139 : f32 to vector<8x64xf32>
    %204 = arith.addf %202, %203 : vector<8x64xf32>
    %205 = arith.mulf %204, %194 : vector<8x64xf32>
    %cst_140 = arith.constant 0.254829586 : f32
    %206 = vector.broadcast %cst_140 : f32 to vector<8x64xf32>
    %207 = arith.addf %205, %206 : vector<8x64xf32>
    %208 = arith.mulf %207, %194 : vector<8x64xf32>
    %cst_141 = arith.constant 0.000000e+00 : f32
    %209 = vector.broadcast %cst_141 : f32 to vector<8x64xf32>
    %210 = arith.subf %209, %185 : vector<8x64xf32>
    %211 = arith.mulf %210, %185 : vector<8x64xf32>
    %212 = math.exp %211 : vector<8x64xf32>
    %213 = arith.mulf %208, %212 : vector<8x64xf32>
    %cst_142 = arith.constant 1.000000e+00 : f32
    %214 = vector.broadcast %cst_142 : f32 to vector<8x64xf32>
    %215 = arith.subf %214, %213 : vector<8x64xf32>
    %cst_143 = arith.constant 0.000000e+00 : f32
    %216 = vector.broadcast %cst_143 : f32 to vector<8x64xf32>
    %217 = arith.cmpf oge, %184, %216 : vector<8x64xf32>
    %cst_144 = arith.constant 0.000000e+00 : f32
    %218 = vector.broadcast %cst_144 : f32 to vector<8x64xf32>
    %219 = arith.subf %218, %215 : vector<8x64xf32>
    %220 = arith.select %217, %215, %219 : vector<8x64xi1>, vector<8x64xf32>
    %cst_145 = arith.constant 1.000000e+00 : f32
    %221 = vector.broadcast %cst_145 : f32 to vector<8x64xf32>
    %222 = arith.addf %221, %220 : vector<8x64xf32>
    %223 = arith.mulf %182, %222 : vector<8x64xf32>
    %c0_146 = arith.constant 0 : index
    %c0_147 = arith.constant 0 : index
    %c0_148 = arith.constant 0 : index
    %224 = vector.load %arg14[%c0_146, %c0_147, %c0_148] : memref<1x64x32xf32, #tpu.memory_space<vmem>>, vector<1x64x32xf32>
    %225 = vector.shape_cast %224 : vector<1x64x32xf32> to vector<64x32xf32>
    %cst_149 = arith.constant dense<0.000000e+00> : vector<8x32xf32>
    %226 = tpu.matmul %223, %225, %cst_149 {dimension_numbers = #tpu.dot_dimension_numbers<[1], [0], [0], [1], [0, 0, 1, 1], [], []>} : vector<8x64xf32>, vector<64x32xf32>, vector<8x32xf32> -> vector<8x32xf32>
    %227 = arith.addf %149, %226 : vector<8x32xf32>
    %c0_150 = arith.constant 0 : index
    %c0_151 = arith.constant 0 : index
    %c0_152 = arith.constant 0 : index
    %228 = vector.load %arg15[%c0_150, %c0_151, %c0_152] : memref<1x1x32xf32, #tpu.memory_space<vmem>>, vector<1x1x32xf32>
    %229 = vector.shape_cast %228 : vector<1x1x32xf32> to vector<1x32xf32>
    %230 = vector.broadcast %229 : vector<1x32xf32> to vector<8x32xf32>
    %231 = arith.addf %227, %230 : vector<8x32xf32>
    %c0_153 = arith.constant 0 : index
    %c0_154 = arith.constant 0 : index
    %232 = vector.load %arg17[%c0_153, %c0_154] : memref<8x32xf32, #tpu.memory_space<vmem>>, vector<8x32xf32>
    tpu.vector_store %arg17[%c0_153, %c0_154], %231 {strides = array<i32>} : memref<8x32xf32, #tpu.memory_space<vmem>>, vector<8x32xf32>,
    %c1_i32 = arith.constant 1 : i32
    %233 = arith.cmpi eq, %arg1, %c1_i32 : i32
    %234 = arith.extui %233 : i1 to i32
    %c0_i32_155 = arith.constant 0 : i32
    %235 = arith.cmpi ne, %234, %c0_i32_155 : i32
    scf.if %235 {
      %c0_156 = arith.constant 0 : index
      %c0_157 = arith.constant 0 : index
      %c0_158 = arith.constant 0 : index
      %236 = vector.load %arg16[%c0_156, %c0_157, %c0_158] : memref<1x8x32xf32, #tpu.memory_space<vmem>>, vector<1x8x32xf32>
      %237 = vector.shape_cast %236 : vector<1x8x32xf32> to vector<8x32xf32>
      %238 = vector.shape_cast %231 : vector<8x32xf32> to vector<1x8x32xf32>
      tpu.vector_store %arg16[%c0_156, %c0_157, %c0_158], %238 {strides = array<i32>} : memref<1x8x32xf32, #tpu.memory_space<vmem>>, vector<1x8x32xf32>,
    } else {
    }
    return
  }
  func.func @transform_0(%arg0: i32, %arg1: i32) -> (i32, i32, i32) {
    %c0_i32 = arith.constant 0 : i32
    %c0_i32_0 = arith.constant 0 : i32
    %c0_i32_1 = arith.constant 0 : i32
    return %arg0, %c0_i32, %c0_i32_0 : i32, i32, i32
  }
  func.func @transform_1(%arg0: i32, %arg1: i32) -> (i32, i32, i32) {
    %c0_i32 = arith.constant 0 : i32
    %c0_i32_0 = arith.constant 0 : i32
    %c0_i32_1 = arith.constant 0 : i32
    return %arg1, %c0_i32, %c0_i32_0 : i32, i32, i32
  }
  func.func @transform_2(%arg0: i32, %arg1: i32) -> (i32, i32, i32) {
    %c0_i32 = arith.constant 0 : i32
    %c0_i32_0 = arith.constant 0 : i32
    %c0_i32_1 = arith.constant 0 : i32
    return %arg1, %c0_i32, %c0_i32_0 : i32, i32, i32
  }
  func.func @transform_3(%arg0: i32, %arg1: i32) -> (i32, i32, i32, i32) {
    %c0_i32 = arith.constant 0 : i32
    %c0_i32_0 = arith.constant 0 : i32
    %c0_i32_1 = arith.constant 0 : i32
    %c0_i32_2 = arith.constant 0 : i32
    return %arg1, %c0_i32, %c0_i32_0, %c0_i32_1 : i32, i32, i32, i32
  }
  func.func @transform_4(%arg0: i32, %arg1: i32) -> (i32, i32, i32, i32) {
    %c0_i32 = arith.constant 0 : i32
    %c0_i32_0 = arith.constant 0 : i32
    %c0_i32_1 = arith.constant 0 : i32
    %c0_i32_2 = arith.constant 0 : i32
    return %arg1, %c0_i32, %c0_i32_0, %c0_i32_1 : i32, i32, i32, i32
  }
  func.func @transform_5(%arg0: i32, %arg1: i32) -> (i32, i32, i32, i32) {
    %c0_i32 = arith.constant 0 : i32
    %c0_i32_0 = arith.constant 0 : i32
    %c0_i32_1 = arith.constant 0 : i32
    %c0_i32_2 = arith.constant 0 : i32
    return %arg1, %c0_i32, %c0_i32_0, %c0_i32_1 : i32, i32, i32, i32
  }
  func.func @transform_6(%arg0: i32, %arg1: i32) -> (i32, i32, i32, i32) {
    %c0_i32 = arith.constant 0 : i32
    %c0_i32_0 = arith.constant 0 : i32
    %c0_i32_1 = arith.constant 0 : i32
    %c0_i32_2 = arith.constant 0 : i32
    return %arg1, %c0_i32, %c0_i32_0, %c0_i32_1 : i32, i32, i32, i32
  }
  func.func @transform_7(%arg0: i32, %arg1: i32) -> (i32, i32, i32) {
    %c0_i32 = arith.constant 0 : i32
    %c0_i32_0 = arith.constant 0 : i32
    %c0_i32_1 = arith.constant 0 : i32
    return %arg1, %c0_i32, %c0_i32_0 : i32, i32, i32
  }
  func.func @transform_8(%arg0: i32, %arg1: i32) -> (i32, i32, i32) {
    %c0_i32 = arith.constant 0 : i32
    %c0_i32_0 = arith.constant 0 : i32
    %c0_i32_1 = arith.constant 0 : i32
    return %arg1, %c0_i32, %c0_i32_0 : i32, i32, i32
  }
  func.func @transform_9(%arg0: i32, %arg1: i32) -> (i32, i32, i32) {
    %c0_i32 = arith.constant 0 : i32
    %c0_i32_0 = arith.constant 0 : i32
    %c0_i32_1 = arith.constant 0 : i32
    return %arg1, %c0_i32, %c0_i32_0 : i32, i32, i32
  }
  func.func @transform_10(%arg0: i32, %arg1: i32) -> (i32, i32, i32) {
    %c0_i32 = arith.constant 0 : i32
    %c0_i32_0 = arith.constant 0 : i32
    %c0_i32_1 = arith.constant 0 : i32
    return %arg1, %c0_i32, %c0_i32_0 : i32, i32, i32
  }
  func.func @transform_11(%arg0: i32, %arg1: i32) -> (i32, i32, i32) {
    %c0_i32 = arith.constant 0 : i32
    %c0_i32_0 = arith.constant 0 : i32
    %c0_i32_1 = arith.constant 0 : i32
    return %arg1, %c0_i32, %c0_i32_0 : i32, i32, i32
  }
  func.func @transform_12(%arg0: i32, %arg1: i32) -> (i32, i32, i32) {
    %c0_i32 = arith.constant 0 : i32
    %c0_i32_0 = arith.constant 0 : i32
    %c0_i32_1 = arith.constant 0 : i32
    return %arg1, %c0_i32, %c0_i32_0 : i32, i32, i32
  }
  func.func @transform_13(%arg0: i32, %arg1: i32) -> (i32, i32, i32) {
    %c0_i32 = arith.constant 0 : i32
    %c0_i32_0 = arith.constant 0 : i32
    %c0_i32_1 = arith.constant 0 : i32
    return %arg1, %c0_i32, %c0_i32_0 : i32, i32, i32
  }
  func.func @transform_14(%arg0: i32, %arg1: i32) -> (i32, i32, i32) {
    %c0_i32 = arith.constant 0 : i32
    %c0_i32_0 = arith.constant 0 : i32
    %c0_i32_1 = arith.constant 0 : i32
    return %arg0, %c0_i32, %c0_i32_0 : i32, i32, i32
  }
}

</mosaic_0001>

<llo_original>
// kernel: transformer_forward.3
$region0: #{transformer_forward.3}
  #allocation0 [shape = 'u32[]', space=smem, size = 0x4, offset = 0x4, fixed_abs, tag = 'smem constant byte address 0x4 - core index']
  #allocation1 [shape = 'u32[144,128]{1,0:T(1,128)}', space=vmem, size = 0x12000, scoped, tag = 'internal scratch']
  %s0 = inlined_call_operand.vmem [shape: f32[16,32], index: 0, kind: input, shape index: {}]
  %s1 = inlined_call_operand.vmem [shape: f32[32,32], index: 1, kind: input, shape index: {}]
  %s2 = inlined_call_operand.vmem [shape: f32[1,32], index: 2, kind: input, shape index: {}]
  %s3 = inlined_call_operand.hbm [shape: f32[16,32], index: 3, kind: output, shape index: {}]
  %s4 = sld [smem:[#allocation0]]
  $region22: #{transformer_forward.3} parent=0
    _
  %s6 = ssub.s32 1, %s4
  %s7 = scalar_select 0, %s6, %s4
  $region1: #{transformer_forward.3} parent=0
    #allocation2 [shape = 'u8[8192]{0}', space=vmem, size = 0x2000, scoped, tag = 'output window, operand 0, single buffered']
    #allocation3 [shape = 's32[1]{0}', space=sflag, size = 0x4, scoped, tag = 'scoped memory for transformer_forward.3']
    %8 = vsyncpa [#allocation3], 0
    // Predicated region
    $region2: #{transformer_forward.3} parent=1 // pred_check
      _
    $region3: #{transformer_forward.3} parent=1 // pred_check_branch
      %10 = sbr.rel (0) target = $region5
    $region4: #{transformer_forward.3} parent=1 // pred_region
      _
    $region5: #{transformer_forward.3} parent=1 // pred_fallthru
      _
    // Predicated region
    $region6: #{transformer_forward.3} parent=1 // pred_check
      _
    $region7: #{transformer_forward.3} parent=1 // pred_check_branch
      %12 = sbr.rel (0) target = $region9
    $region8: #{transformer_forward.3} parent=1 // pred_region
      _
    $region9: #{transformer_forward.3} parent=1 // pred_fallthru
      _
    // Predicated region
    $region10: #{transformer_forward.3} parent=1 // pred_check
      _
    $region11: #{transformer_forward.3} parent=1 // pred_check_branch
      %14 = sbr.rel (0) target = $region13
    $region12: #{transformer_forward.3} parent=1 // pred_region
      _
    $region13: #{transformer_forward.3} parent=1 // pred_fallthru
      _
    %v15 = vld [vmem:[%s0] sm:$0xff]
    %v16 = vld [vmem:[%s0 + $0x8] sm:$0xff]
    %v17 = vmul.f32 %v15, 0.5
    %v18 = vmul.f32 %v16, 0.5
    %v19 = vmul.f32 %v15, 0.70710677
    %v20 = vmul.f32 %v16, 0.70710677
    %v21 = vand.u32 2147483647, %v19
    %v22 = vand.u32 2147483647, %v20
    %v23 = vmul.f32 %v21, 0.3275911
    %v24 = vmul.f32 %v22, 0.3275911
    %v25 = vadd.f32 %v23, 1.0
    %v26 = vadd.f32 %v24, 1.0
    %v27 = vrcp.pop %v25
    %v28 = vrcp.pop %v26
    %v29 = vmul.f32 %v25, %v27
    %v30 = vmul.f32 %v26, %v28
    %v31 = vsub.f32 2.0, %v29
    %v32 = vsub.f32 2.0, %v30
    %v33 = vmul.f32 %v27, %v31
    %v34 = vmul.f32 %v28, %v32
    %v35 = vmul.f32 %v33, 1.0614054
    %v36 = vmul.f32 %v34, 1.0614054
    %v37 = vadd.f32 %v35, -1.4531521
    %v38 = vadd.f32 %v36, -1.4531521
    %v39 = vmul.f32 %v37, %v33
    %v40 = vmul.f32 %v38, %v34
    %v41 = vadd.f32 %v39, 1.4214138
    %v42 = vadd.f32 %v40, 1.4214138
    %v43 = vmul.f32 %v41, %v33
    %v44 = vmul.f32 %v42, %v34
    %v45 = vadd.f32 %v43, -0.28449672
    %v46 = vadd.f32 %v44, -0.28449672
    %v47 = vmul.f32 %v45, %v33
    %v48 = vmul.f32 %v46, %v34
    %v49 = vadd.f32 %v47, 0.2548296
    %v50 = vadd.f32 %v48, 0.2548296
    %v51 = vmul.f32 %v49, %v33
    %v52 = vmul.f32 %v50, %v34
    %v53 = vsub.f32 0.0, %v21
    %v54 = vsub.f32 0.0, %v22
    %v55 = vmul.f32 %v53, %v21
    %v56 = vmul.f32 %v54, %v22
    %v57 = vmul.f32 %v55, 1.442695
    %v58 = vpow.pop %v57
    %v59 = vmul.f32 %v56, 1.442695
    %v60 = vpow.pop %v59
    %v61 = vmul.f32 %v51, %v58
    %v62 = vmul.f32 %v52, %v60
    %v63 = vsub.f32 1.0, %v61
    %v64 = vsub.f32 1.0, %v62
    %vm65 = vcmp.ge.f32.partialorder %v19, 0.0
    %vm66 = vcmp.ge.f32.partialorder %v20, 0.0
    %v67 = vsub.f32 0.0, %v63
    %v68 = vsub.f32 0.0, %v64
    %v69 = vsel %vm65, %v63, %v67
    %v70 = vsel %vm66, %v64, %v68
    %v71 = vadd.f32 %v69, 1.0
    %v72 = vadd.f32 %v70, 1.0
    %v73 = vmul.f32 %v17, %v71
    %v74 = vmul.f32 %v18, %v72
    %v75 = vld [vmem:[%s1] sm:$0xff]
    %v76 = vld [vmem:[%s1 + $0x8] sm:$0xff]
    %v77 = vld [vmem:[%s1 + $0x10] sm:$0xff]
    %v78 = vld [vmem:[%s1 + $0x18] sm:$0xff]
    %v79 = vld [vmem:[%s2] sm:$0x1]
    %v81 = vlaneseq
    %v82 = vshrl.u32 %v81, 7
    %v83 = vsub.s32 0, %v82
    %v84 = vrot.slane %v79, %v83
    %vm86 = vcmask 261120
    %v88 = vsel %vm86, %v73, 0
    %v91 = vsel %vm86, %v74, 0
    %93 = vmatprep.subr.mxu0 0.0
    %94 = vmatpush1.msra.mxu0 %v75
    %95 = vmatprep.subr.mxu0 0.0
    %96 = vmatpush1.msra.mxu0 %v76
    %97 = vmatprep.subr.mxu0 0.0
    %98 = vmatpush1.msra.mxu0 %v77
    %99 = vmatprep.subr.mxu0 0.0
    %100 = vmatpush1.msra.mxu0 %v78
    %101 = vmatprep.subr.mxu0 0.0
    %102 = vmatpush1.msra.mxu0 0.0
    %103 = vmatprep.subr.mxu0 0.0
    %104 = vmatpush1.msra.mxu0 0.0
    %105 = vmatprep.subr.mxu0 0.0
    %106 = vmatpush1.msra.mxu0 0.0
    %107 = vmatprep.subr.mxu0 0.0
    %108 = vmatpush1.msra.mxu0 0.0
    %109 = vmatprep.subr.mxu0 0.0
    %110 = vmatpush1.msra.mxu0 0.0
    %111 = vmatprep.subr.mxu0 0.0
    %112 = vmatpush1.msra.mxu0 0.0
    %113 = vmatprep.subr.mxu0 0.0
    %114 = vmatpush1.msra.mxu0 0.0
    %115 = vmatprep.subr.mxu0 0.0
    %116 = vmatpush1.msra.mxu0 0.0
    %117 = vmatprep.subr.mxu0 0.0
    %118 = vmatpush1.msra.mxu0 0.0
    %119 = vmatprep.subr.mxu0 0.0
    %120 = vmatpush1.msra.mxu0 0.0
    %121 = vmatprep.subr.mxu0 0.0
    %122 = vmatpush1.msra.mxu0 0.0
    %123 = vmatprep.subr.mxu0 0.0
    %124 = vmatpush1.msra.mxu0 0.0
    %125 = vmatprep.subr.mxu0 0.0
    %126 = vmatpush1.msra.mxu0 0.0
    %127 = vmatprep.subr.mxu0 0.0
    %128 = vmatpush1.msra.mxu0 0.0
    %129 = vmatprep.subr.mxu0 0.0
    %130 = vmatpush1.msra.mxu0 0.0
    %131 = vmatprep.subr.mxu0 0.0
    %132 = vmatpush1.msra.mxu0 0.0
    %133 = vmatprep.subr.mxu0 0.0
    %134 = vmatpush1.msra.mxu0 0.0
    %135 = vmatprep.subr.mxu0 0.0
    %136 = vmatpush1.msra.mxu0 0.0
    %137 = vmatprep.subr.mxu0 0.0
    %138 = vmatpush1.msra.mxu0 0.0
    %139 = vmatprep.subr.mxu0 0.0
    %140 = vmatpush1.msra.mxu0 0.0
    %141 = vmatprep.subr.mxu0 0.0
    %142 = vmatpush1.msra.mxu0 0.0
    %143 = vmatprep.subr.mxu0 0.0
    %144 = vmatpush1.msra.mxu0 0.0
    %145 = vmatprep.subr.mxu0 0.0
    %146 = vmatpush1.msra.mxu0 0.0
    %147 = vmatprep.subr.mxu0 0.0
    %148 = vmatpush1.msra.mxu0 0.0
    %149 = vmatprep.subr.mxu0 0.0
    %150 = vmatpush1.msra.mxu0 0.0
    %151 = vmatprep.subr.mxu0 0.0
    %152 = vmatpush1.msra.mxu0 0.0
    %153 = vmatprep.subr.mxu0 0.0
    %154 = vmatpush1.msra.mxu0 0.0
    %155 = vmatprep.subr.mxu0 0.0
    %156 = vmatpush1.msra.mxu0 0.0
    %157 = vmatprep.mubr.f32.mxu0 0.0
    %158 = vmatmul.mubr.f32.gmra.mrb[0].mxu0 %v88
    %v159 = vpop.f32.mrb[0].mxu0
    %v160 = vadd.f32 %v84, %v159
    %v161 = vpop.f32.mrb[0].mxu0
    %162 = vmatprep.mubr.f32.mxu0 0.0
    %163 = vmatmul.mubr.f32.gmra.mrb[0].mxu0 %v91
    %v164 = vpop.f32.mrb[0].mxu0
    %v165 = vadd.f32 %v84, %v164
    %v166 = vpop.f32.mrb[0].mxu0
    %167 = vdwg.mxu0
    %168 = vst.msk [vmem:[#allocation2] sm:$0xff] %vm86, %v160
    %169 = vst.msk [vmem:[#allocation2 + $0x8] sm:$0xff] %vm86, %v165
    // Predicated region
    $region14: #{transformer_forward.3} parent=1 // pred_check
      _
    $region15: #{transformer_forward.3} parent=1 // pred_check_branch
      %171 = sbr.rel (0) target = $region17
    $region16: #{transformer_forward.3} parent=1 // pred_region
      %s173 = ssub.s32 256, 256
      %174 = vsyncadd [#allocation3], %s173
      %s175 = sshll.u32 [#allocation2], 4
      %s176 = int_to_ptr.vmem [resolvable:$true] %s175
      %181 = dma.vmem_to_hbm [thread:$0]  %s176, 256, %s3, [#allocation3], 128, 128, 8
    $region17: #{transformer_forward.3} parent=1 // pred_fallthru
      _
    // Predicated region
    $region18: #{transformer_forward.3} parent=1 // pred_check
      _
    $region19: #{transformer_forward.3} parent=1 // pred_check_branch
      %183 = sbr.rel (0) target = $region21
    $region20: #{transformer_forward.3} parent=1 // pred_region
      %184 = dma.done [#allocation3], 256
    $region21: #{transformer_forward.3} parent=1 // pred_fallthru
      _
    %185 = vsyncpa [#allocation3], 1

// kernel: transformer_forward.2
$region0: #{transformer_forward.2}
  #allocation0 [shape = 'u32[]', space=smem, size = 0x4, offset = 0x4, fixed_abs, tag = 'smem constant byte address 0x4 - core index']
  #allocation1 [shape = 'u32[144,128]{1,0:T(1,128)}', space=vmem, size = 0x12000, scoped, tag = 'internal scratch']
  #allocation2 [shape = 'f32[8,32]{1,0:T(8,128)}', space=vmem, size = 0x1000, scoped, tag = 'scratch operand']
  %s0 = inlined_call_operand.vmem [shape: f32[2,8,32], index: 0, kind: input, shape index: {}]
  %s1 = inlined_call_operand.vmem [shape: f32[2,1,32], index: 1, kind: input, shape index: {}]
  %s2 = inlined_call_operand.vmem [shape: f32[2,1,32], index: 2, kind: input, shape index: {}]
  %s3 = inlined_call_operand.vmem [shape: f32[2,4,32,8], index: 3, kind: input, shape index: {}]
  %s4 = inlined_call_operand.vmem [shape: f32[2,4,32,8], index: 4, kind: input, shape index: {}]
  %s5 = inlined_call_operand.vmem [shape: f32[2,4,32,8], index: 5, kind: input, shape index: {}]
  %s6 = inlined_call_operand.vmem [shape: f32[2,4,8,32], index: 6, kind: input, shape index: {}]
  %s7 = inlined_call_operand.vmem [shape: f32[2,1,32], index: 7, kind: input, shape index: {}]
  %s8 = inlined_call_operand.vmem [shape: f32[2,1,32], index: 8, kind: input, shape index: {}]
  %s9 = inlined_call_operand.vmem [shape: f32[2,1,32], index: 9, kind: input, shape index: {}]
  %s10 = inlined_call_operand.vmem [shape: f32[2,32,64], index: 10, kind: input, shape index: {}]
  %s11 = inlined_call_operand.vmem [shape: f32[2,1,64], index: 11, kind: input, shape index: {}]
  %s12 = inlined_call_operand.vmem [shape: f32[2,64,32], index: 12, kind: input, shape index: {}]
  %s13 = inlined_call_operand.vmem [shape: f32[2,1,32], index: 13, kind: input, shape index: {}]
  %s14 = inlined_call_operand.vmem [shape: f32[2,8,32], index: 14, kind: output, shape index: {}]
  %s15 = sld [smem:[#allocation0]]
  $region97: #{transformer_forward.2} parent=0
    _
  %s17 = ssub.s32 1, %s15
  %s18 = scalar_select 0, %s17, %s15
  loop: start=0, step=1, limit=6
  $region2: #{transformer_forward.2} parent=0 // loop_pre_header
    _
  $region3: #{transformer_forward.2} parent=0 // loop_header
    %s20 = sphi 0, %s24
    %p21 = scmp.ge.s32.totalorder %s20, 6
    %s27 = sphi 0, %s39
    %s28 = sphi 0, %s35
    %s29 = sphi 0, %s27
    %s30 = sphi 0, %s28
    %s31 = sphi 0, %s29
    %s32 = sphi 0, %s30
    %s42 = sphi 0, %s44
    %s45 = sphi 0, %s42
    %s46 = sphi 0, %s45
    %s62 = sphi 0, %s46
    %s68 = sphi 0, %s70
    %s71 = sphi 0, %s68
    %s72 = sphi 0, %s71
    %s88 = sphi 0, %s72
    %s94 = sphi 0, %s96
    %s97 = sphi 0, %s94
    %s98 = sphi 0, %s97
    %s114 = sphi 0, %s98
    %s120 = sphi 0, %s122
    %s123 = sphi 0, %s120
    %s124 = sphi 0, %s123
    %s140 = sphi 0, %s124
    %s146 = sphi 0, %s148
    %s149 = sphi 0, %s146
    %s150 = sphi 0, %s149
    %s166 = sphi 0, %s150
    %s172 = sphi 0, %s174
    %s175 = sphi 0, %s172
    %s176 = sphi 0, %s175
    %s192 = sphi 0, %s176
    %s198 = sphi 0, %s200
    %s201 = sphi 0, %s198
    %s202 = sphi 0, %s201
    %s218 = sphi 0, %s202
    %s224 = sphi 0, %s226
    %s227 = sphi 0, %s224
    %s228 = sphi 0, %s227
    %s244 = sphi 0, %s228
    %s250 = sphi 0, %s252
    %s253 = sphi 0, %s250
    %s254 = sphi 0, %s253
    %s270 = sphi 0, %s254
    %s276 = sphi 0, %s278
    %s279 = sphi 0, %s276
    %s280 = sphi 0, %s279
    %s296 = sphi 0, %s280
    %s302 = sphi 0, %s304
    %s305 = sphi 0, %s302
    %s306 = sphi 0, %s305
    %s322 = sphi 0, %s306
    %s328 = sphi 0, %s330
    %s331 = sphi 0, %s328
    %s332 = sphi 0, %s331
    %s348 = sphi 0, %s332
    %s354 = sphi 0, %s356
    %s357 = sphi 0, %s354
    %s358 = sphi 0, %s357
    %s374 = sphi 0, %s358
    %s380 = sphi 0, %s382
    %s383 = sphi 0, %s380
    %s384 = sphi 0, %s383
    %s400 = sphi 0, %s384
    %s406 = sphi 0, %s408
    %s409 = sphi 0, %s406
    %s410 = sphi 0, %s409
    %s426 = sphi 0, %s410
  $region4: #{transformer_forward.2} parent=0 // loop_header_branch
    %23 = sbr.rel (%p21) target = $region8
  $region5: #{transformer_forward.2} parent=0 // loop_body
    %s25 = ssub.s32 %s20, 1
    %s26 = ssub.s32 %s20, 2
    %s33 = sadd.s32 1, %s28
    %p34 = scmp.ge.s32.totalorder %s33, 2
    %s35 = scalar_select %p34, 0, %s33
    %s36 = sadd.s32 1, %s27
    %s37 = scalar_select %p34, %s36, %s27
    %p38 = scmp.ge.s32.totalorder %s37, 2
    %s39 = scalar_select %p38, 0, %s37
    %s40 = ssub.s32 %s27, %s39
    %p41 = scmp.eq.s32.totalorder %s40, 0
    %s43 = sadd.s32 %s42, 1
    %s44 = scalar_select %p41, %s42, %s43
    %p47 = pneg %p41
    %p48 = scmp.eq.s32.totalorder %s20, 3
    %p49 = por %p47, %p48
    %p50 = scmp.ne.s32.totalorder %s42, %s45
    %p51 = scmp.eq.s32.totalorder %s20, 0
    %p52 = por %p50, %p51
    %p53 = scmp.ne.s32.totalorder %s42, %s45
    %p54 = scmp.eq.s32.totalorder %s25, 3
    %p55 = por %p53, %p54
    %p56 = scmp.ne.s32.totalorder %s45, %s46
    %p57 = scmp.eq.s32.totalorder %s25, 0
    %p58 = por %p56, %p57
    %p59 = scmp.ne.s32.totalorder %s45, %s46
    %p60 = scmp.eq.s32.totalorder %s26, 3
    %p61 = por %p59, %p60
    %p63 = scmp.ne.s32.totalorder %s46, %s62
    %p64 = scmp.eq.s32.totalorder %s26, 0
    %p65 = por %p63, %p64
    %s66 = ssub.s32 %s28, %s35
    %p67 = scmp.eq.s32.totalorder %s66, 0
    %s69 = sadd.s32 %s68, 1
    %s70 = scalar_select %p67, %s68, %s69
    %p73 = pneg %p67
    %p74 = scmp.eq.s32.totalorder %s20, 3
    %p75 = por %p73, %p74
    %p76 = scmp.ne.s32.totalorder %s68, %s71
    %p77 = scmp.eq.s32.totalorder %s20, 0
    %p78 = por %p76, %p77
    %p79 = scmp.ne.s32.totalorder %s68, %s71
    %p80 = scmp.eq.s32.totalorder %s25, 3
    %p81 = por %p79, %p80
    %p82 = scmp.ne.s32.totalorder %s71, %s72
    %p83 = scmp.eq.s32.totalorder %s25, 0
    %p84 = por %p82, %p83
    %p85 = scmp.ne.s32.totalorder %s71, %s72
    %p86 = scmp.eq.s32.totalorder %s26, 3
    %p87 = por %p85, %p86
    %p89 = scmp.ne.s32.totalorder %s72, %s88
    %p90 = scmp.eq.s32.totalorder %s26, 0
    %p91 = por %p89, %p90
    %s92 = ssub.s32 %s28, %s35
    %p93 = scmp.eq.s32.totalorder %s92, 0
    %s95 = sadd.s32 %s94, 1
    %s96 = scalar_select %p93, %s94, %s95
    %p99 = pneg %p93
    %p100 = scmp.eq.s32.totalorder %s20, 3
    %p101 = por %p99, %p100
    %p102 = scmp.ne.s32.totalorder %s94, %s97
    %p103 = scmp.eq.s32.totalorder %s20, 0
    %p104 = por %p102, %p103
    %p105 = scmp.ne.s32.totalorder %s94, %s97
    %p106 = scmp.eq.s32.totalorder %s25, 3
    %p107 = por %p105, %p106
    %p108 = scmp.ne.s32.totalorder %s97, %s98
    %p109 = scmp.eq.s32.totalorder %s25, 0
    %p110 = por %p108, %p109
    %p111 = scmp.ne.s32.totalorder %s97, %s98
    %p112 = scmp.eq.s32.totalorder %s26, 3
    %p113 = por %p111, %p112
    %p115 = scmp.ne.s32.totalorder %s98, %s114
    %p116 = scmp.eq.s32.totalorder %s26, 0
    %p117 = por %p115, %p116
    %s118 = ssub.s32 %s28, %s35
    %p119 = scmp.eq.s32.totalorder %s118, 0
    %s121 = sadd.s32 %s120, 1
    %s122 = scalar_select %p119, %s120, %s121
    %p125 = pneg %p119
    %p126 = scmp.eq.s32.totalorder %s20, 3
    %p127 = por %p125, %p126
    %p128 = scmp.ne.s32.totalorder %s120, %s123
    %p129 = scmp.eq.s32.totalorder %s20, 0
    %p130 = por %p128, %p129
    %p131 = scmp.ne.s32.totalorder %s120, %s123
    %p132 = scmp.eq.s32.totalorder %s25, 3
    %p133 = por %p131, %p132
    %p134 = scmp.ne.s32.totalorder %s123, %s124
    %p135 = scmp.eq.s32.totalorder %s25, 0
    %p136 = por %p134, %p135
    %p137 = scmp.ne.s32.totalorder %s123, %s124
    %p138 = scmp.eq.s32.totalorder %s26, 3
    %p139 = por %p137, %p138
    %p141 = scmp.ne.s32.totalorder %s124, %s140
    %p142 = scmp.eq.s32.totalorder %s26, 0
    %p143 = por %p141, %p142
    %s144 = ssub.s32 %s28, %s35
    %p145 = scmp.eq.s32.totalorder %s144, 0
    %s147 = sadd.s32 %s146, 1
    %s148 = scalar_select %p145, %s146, %s147
    %p151 = pneg %p145
    %p152 = scmp.eq.s32.totalorder %s20, 3
    %p153 = por %p151, %p152
    %p154 = scmp.ne.s32.totalorder %s146, %s149
    %p155 = scmp.eq.s32.totalorder %s20, 0
    %p156 = por %p154, %p155
    %p157 = scmp.ne.s32.totalorder %s146, %s149
    %p158 = scmp.eq.s32.totalorder %s25, 3
    %p159 = por %p157, %p158
    %p160 = scmp.ne.s32.totalorder %s149, %s150
    %p161 = scmp.eq.s32.totalorder %s25, 0
    %p162 = por %p160, %p161
    %p163 = scmp.ne.s32.totalorder %s149, %s150
    %p164 = scmp.eq.s32.totalorder %s26, 3
    %p165 = por %p163, %p164
    %p167 = scmp.ne.s32.totalorder %s150, %s166
    %p168 = scmp.eq.s32.totalorder %s26, 0
    %p169 = por %p167, %p168
    %s170 = ssub.s32 %s28, %s35
    %p171 = scmp.eq.s32.totalorder %s170, 0
    %s173 = sadd.s32 %s172, 1
    %s174 = scalar_select %p171, %s172, %s173
    %p177 = pneg %p171
    %p178 = scmp.eq.s32.totalorder %s20, 3
    %p179 = por %p177, %p178
    %p180 = scmp.ne.s32.totalorder %s172, %s175
    %p181 = scmp.eq.s32.totalorder %s20, 0
    %p182 = por %p180, %p181
    %p183 = scmp.ne.s32.totalorder %s172, %s175
    %p184 = scmp.eq.s32.totalorder %s25, 3
    %p185 = por %p183, %p184
    %p186 = scmp.ne.s32.totalorder %s175, %s176
    %p187 = scmp.eq.s32.totalorder %s25, 0
    %p188 = por %p186, %p187
    %p189 = scmp.ne.s32.totalorder %s175, %s176
    %p190 = scmp.eq.s32.totalorder %s26, 3
    %p191 = por %p189, %p190
    %p193 = scmp.ne.s32.totalorder %s176, %s192
    %p194 = scmp.eq.s32.totalorder %s26, 0
    %p195 = por %p193, %p194
    %s196 = ssub.s32 %s28, %s35
    %p197 = scmp.eq.s32.totalorder %s196, 0
    %s199 = sadd.s32 %s198, 1
    %s200 = scalar_select %p197, %s198, %s199
    %p203 = pneg %p197
    %p204 = scmp.eq.s32.totalorder %s20, 3
    %p205 = por %p203, %p204
    %p206 = scmp.ne.s32.totalorder %s198, %s201
    %p207 = scmp.eq.s32.totalorder %s20, 0
    %p208 = por %p206, %p207
    %p209 = scmp.ne.s32.totalorder %s198, %s201
    %p210 = scmp.eq.s32.totalorder %s25, 3
    %p211 = por %p209, %p210
    %p212 = scmp.ne.s32.totalorder %s201, %s202
    %p213 = scmp.eq.s32.totalorder %s25, 0
    %p214 = por %p212, %p213
    %p215 = scmp.ne.s32.totalorder %s201, %s202
    %p216 = scmp.eq.s32.totalorder %s26, 3
    %p217 = por %p215, %p216
    %p219 = scmp.ne.s32.totalorder %s202, %s218
    %p220 = scmp.eq.s32.totalorder %s26, 0
    %p221 = por %p219, %p220
    %s222 = ssub.s32 %s28, %s35
    %p223 = scmp.eq.s32.totalorder %s222, 0
    %s225 = sadd.s32 %s224, 1
    %s226 = scalar_select %p223, %s224, %s225
    %p229 = pneg %p223
    %p230 = scmp.eq.s32.totalorder %s20, 3
    %p231 = por %p229, %p230
    %p232 = scmp.ne.s32.totalorder %s224, %s227
    %p233 = scmp.eq.s32.totalorder %s20, 0
    %p234 = por %p232, %p233
    %p235 = scmp.ne.s32.totalorder %s224, %s227
    %p236 = scmp.eq.s32.totalorder %s25, 3
    %p237 = por %p235, %p236
    %p238 = scmp.ne.s32.totalorder %s227, %s228
    %p239 = scmp.eq.s32.totalorder %s25, 0
    %p240 = por %p238, %p239
    %p241 = scmp.ne.s32.totalorder %s227, %s228
    %p242 = scmp.eq.s32.totalorder %s26, 3
    %p243 = por %p241, %p242
    %p245 = scmp.ne.s32.totalorder %s228, %s244
    %p246 = scmp.eq.s32.totalorder %s26, 0
    %p247 = por %p245, %p246
    %s248 = ssub.s32 %s28, %s35
    %p249 = scmp.eq.s32.totalorder %s248, 0
    %s251 = sadd.s32 %s250, 1
    %s252 = scalar_select %p249, %s250, %s251
    %p255 = pneg %p249
    %p256 = scmp.eq.s32.totalorder %s20, 3
    %p257 = por %p255, %p256
    %p258 = scmp.ne.s32.totalorder %s250, %s253
    %p259 = scmp.eq.s32.totalorder %s20, 0
    %p260 = por %p258, %p259
    %p261 = scmp.ne.s32.totalorder %s250, %s253
    %p262 = scmp.eq.s32.totalorder %s25, 3
    %p263 = por %p261, %p262
    %p264 = scmp.ne.s32.totalorder %s253, %s254
    %p265 = scmp.eq.s32.totalorder %s25, 0
    %p266 = por %p264, %p265
    %p267 = scmp.ne.s32.totalorder %s253, %s254
    %p268 = scmp.eq.s32.totalorder %s26, 3
    %p269 = por %p267, %p268
    %p271 = scmp.ne.s32.totalorder %s254, %s270
    %p272 = scmp.eq.s32.totalorder %s26, 0
    %p273 = por %p271, %p272
    %s274 = ssub.s32 %s28, %s35
    %p275 = scmp.eq.s32.totalorder %s274, 0
    %s277 = sadd.s32 %s276, 1
    %s278 = scalar_select %p275, %s276, %s277
    %p281 = pneg %p275
    %p282 = scmp.eq.s32.totalorder %s20, 3
    %p283 = por %p281, %p282
    %p284 = scmp.ne.s32.totalorder %s276, %s279
    %p285 = scmp.eq.s32.totalorder %s20, 0
    %p286 = por %p284, %p285
    %p287 = scmp.ne.s32.totalorder %s276, %s279
    %p288 = scmp.eq.s32.totalorder %s25, 3
    %p289 = por %p287, %p288
    %p290 = scmp.ne.s32.totalorder %s279, %s280
    %p291 = scmp.eq.s32.totalorder %s25, 0
    %p292 = por %p290, %p291
    %p293 = scmp.ne.s32.totalorder %s279, %s280
    %p294 = scmp.eq.s32.totalorder %s26, 3
    %p295 = por %p293, %p294
    %p297 = scmp.ne.s32.totalorder %s280, %s296
    %p298 = scmp.eq.s32.totalorder %s26, 0
    %p299 = por %p297, %p298
    %s300 = ssub.s32 %s28, %s35
    %p301 = scmp.eq.s32.totalorder %s300, 0
    %s303 = sadd.s32 %s302, 1
    %s304 = scalar_select %p301, %s302, %s303
    %p307 = pneg %p301
    %p308 = scmp.eq.s32.totalorder %s20, 3
    %p309 = por %p307, %p308
    %p310 = scmp.ne.s32.totalorder %s302, %s305
    %p311 = scmp.eq.s32.totalorder %s20, 0
    %p312 = por %p310, %p311
    %p313 = scmp.ne.s32.totalorder %s302, %s305
    %p314 = scmp.eq.s32.totalorder %s25, 3
    %p315 = por %p313, %p314
    %p316 = scmp.ne.s32.totalorder %s305, %s306
    %p317 = scmp.eq.s32.totalorder %s25, 0
    %p318 = por %p316, %p317
    %p319 = scmp.ne.s32.totalorder %s305, %s306
    %p320 = scmp.eq.s32.totalorder %s26, 3
    %p321 = por %p319, %p320
    %p323 = scmp.ne.s32.totalorder %s306, %s322
    %p324 = scmp.eq.s32.totalorder %s26, 0
    %p325 = por %p323, %p324
    %s326 = ssub.s32 %s28, %s35
    %p327 = scmp.eq.s32.totalorder %s326, 0
    %s329 = sadd.s32 %s328, 1
    %s330 = scalar_select %p327, %s328, %s329
    %p333 = pneg %p327
    %p334 = scmp.eq.s32.totalorder %s20, 3
    %p335 = por %p333, %p334
    %p336 = scmp.ne.s32.totalorder %s328, %s331
    %p337 = scmp.eq.s32.totalorder %s20, 0
    %p338 = por %p336, %p337
    %p339 = scmp.ne.s32.totalorder %s328, %s331
    %p340 = scmp.eq.s32.totalorder %s25, 3
    %p341 = por %p339, %p340
    %p342 = scmp.ne.s32.totalorder %s331, %s332
    %p343 = scmp.eq.s32.totalorder %s25, 0
    %p344 = por %p342, %p343
    %p345 = scmp.ne.s32.totalorder %s331, %s332
    %p346 = scmp.eq.s32.totalorder %s26, 3
    %p347 = por %p345, %p346
    %p349 = scmp.ne.s32.totalorder %s332, %s348
    %p350 = scmp.eq.s32.totalorder %s26, 0
    %p351 = por %p349, %p350
    %s352 = ssub.s32 %s28, %s35
    %p353 = scmp.eq.s32.totalorder %s352, 0
    %s355 = sadd.s32 %s354, 1
    %s356 = scalar_select %p353, %s354, %s355
    %p359 = pneg %p353
    %p360 = scmp.eq.s32.totalorder %s20, 3
    %p361 = por %p359, %p360
    %p362 = scmp.ne.s32.totalorder %s354, %s357
    %p363 = scmp.eq.s32.totalorder %s20, 0
    %p364 = por %p362, %p363
    %p365 = scmp.ne.s32.totalorder %s354, %s357
    %p366 = scmp.eq.s32.totalorder %s25, 3
    %p367 = por %p365, %p366
    %p368 = scmp.ne.s32.totalorder %s357, %s358
    %p369 = scmp.eq.s32.totalorder %s25, 0
    %p370 = por %p368, %p369
    %p371 = scmp.ne.s32.totalorder %s357, %s358
    %p372 = scmp.eq.s32.totalorder %s26, 3
    %p373 = por %p371, %p372
    %p375 = scmp.ne.s32.totalorder %s358, %s374
    %p376 = scmp.eq.s32.totalorder %s26, 0
    %p377 = por %p375, %p376
    %s378 = ssub.s32 %s28, %s35
    %p379 = scmp.eq.s32.totalorder %s378, 0
    %s381 = sadd.s32 %s380, 1
    %s382 = scalar_select %p379, %s380, %s381
    %p385 = pneg %p379
    %p386 = scmp.eq.s32.totalorder %s20, 3
    %p387 = por %p385, %p386
    %p388 = scmp.ne.s32.totalorder %s380, %s383
    %p389 = scmp.eq.s32.totalorder %s20, 0
    %p390 = por %p388, %p389
    %p391 = scmp.ne.s32.totalorder %s380, %s383
    %p392 = scmp.eq.s32.totalorder %s25, 3
    %p393 = por %p391, %p392
    %p394 = scmp.ne.s32.totalorder %s383, %s384
    %p395 = scmp.eq.s32.totalorder %s25, 0
    %p396 = por %p394, %p395
    %p397 = scmp.ne.s32.totalorder %s383, %s384
    %p398 = scmp.eq.s32.totalorder %s26, 3
    %p399 = por %p397, %p398
    %p401 = scmp.ne.s32.totalorder %s384, %s400
    %p402 = scmp.eq.s32.totalorder %s26, 0
    %p403 = por %p401, %p402
    %s404 = ssub.s32 %s27, %s39
    %p405 = scmp.eq.s32.totalorder %s404, 0
    %s407 = sadd.s32 %s406, 1
    %s408 = scalar_select %p405, %s406, %s407
    %p411 = pneg %p405
    %p412 = scmp.eq.s32.totalorder %s20, 3
    %p413 = por %p411, %p412
    %p414 = scmp.ne.s32.totalorder %s406, %s409
    %p415 = scmp.eq.s32.totalorder %s20, 0
    %p416 = por %p414, %p415
    %p417 = scmp.ne.s32.totalorder %s406, %s409
    %p418 = scmp.eq.s32.totalorder %s25, 3
    %p419 = por %p417, %p418
    %p420 = scmp.ne.s32.totalorder %s409, %s410
    %p421 = scmp.eq.s32.totalorder %s25, 0
    %p422 = por %p420, %p421
    %p423 = scmp.ne.s32.totalorder %s409, %s410
    %p424 = scmp.eq.s32.totalorder %s26, 3
    %p425 = por %p423, %p424
    %p427 = scmp.ne.s32.totalorder %s410, %s426
    %p428 = scmp.eq.s32.totalorder %s26, 0
    %p429 = por %p427, %p428
    %p430 = scmp.le.s32.totalorder 1, %s20
    %p431 = scmp.lt.s32.totalorder %s20, 5
    %p432 = pnand %p430, %p431
    %p433 = pneg %p432
    // Predicated region
    $region9: #{transformer_forward.2} parent=5 // pred_check
      _
    $region10: #{transformer_forward.2} parent=5 // pred_check_branch
      %435 = sbr.rel (%p432) target = $region12
    $region11: #{transformer_forward.2} parent=5 // pred_region
      %s436 = ssub.s32 %s20, 1
    $region12: #{transformer_forward.2} parent=5 // pred_fallthru
      _
    %p437 = scmp.lt.s32.totalorder %s20, 4
    // Predicated region
    $region13: #{transformer_forward.2} parent=5 // pred_check
      %p438 = pneg %p437
    $region14: #{transformer_forward.2} parent=5 // pred_check_branch
      %440 = sbr.rel (%p438) target = $region16
    $region15: #{transformer_forward.2} parent=5 // pred_region
      // Predicated region
      $region17: #{transformer_forward.2} parent=15 // pred_check
        %p441 = pneg %p52
      $region18: #{transformer_forward.2} parent=15 // pred_check_branch
        %443 = sbr.rel (%p441) target = $region20
      $region19: #{transformer_forward.2} parent=15 // pred_region
        %p444 = scmp.lt.s32.totalorder %s27, 1
        %s445 = scalar_select %p444, %s27, 1
        %s446 = smul.addr %s445, 8
        %s447 = scalar_lea.vmem %s0, %s446
      $region20: #{transformer_forward.2} parent=15 // pred_fallthru
        _
      // Predicated region
      $region21: #{transformer_forward.2} parent=15 // pred_check
        %p448 = pneg %p78
      $region22: #{transformer_forward.2} parent=15 // pred_check_branch
        %450 = sbr.rel (%p448) target = $region24
      $region23: #{transformer_forward.2} parent=15 // pred_region
        %p451 = scmp.lt.s32.totalorder %s28, 1
        %s452 = scalar_select %p451, %s28, 1
        %s453 = scalar_lea.vmem %s1, %s452
      $region24: #{transformer_forward.2} parent=15 // pred_fallthru
        _
      // Predicated region
      $region25: #{transformer_forward.2} parent=15 // pred_check
        %p454 = pneg %p104
      $region26: #{transformer_forward.2} parent=15 // pred_check_branch
        %456 = sbr.rel (%p454) target = $region28
      $region27: #{transformer_forward.2} parent=15 // pred_region
        %p457 = scmp.lt.s32.totalorder %s28, 1
        %s458 = scalar_select %p457, %s28, 1
        %s459 = scalar_lea.vmem %s2, %s458
      $region28: #{transformer_forward.2} parent=15 // pred_fallthru
        _
      // Predicated region
      $region29: #{transformer_forward.2} parent=15 // pred_check
        %p460 = pneg %p130
      $region30: #{transformer_forward.2} parent=15 // pred_check_branch
        %462 = sbr.rel (%p460) target = $region32
      $region31: #{transformer_forward.2} parent=15 // pred_region
        %p463 = scmp.lt.s32.totalorder %s28, 1
        %s464 = scalar_select %p463, %s28, 1
        %s465 = smul.addr %s464, 16
        %s466 = smul.addr %s465, 8
        %s467 = scalar_lea.vmem %s3, %s466
      $region32: #{transformer_forward.2} parent=15 // pred_fallthru
        _
      // Predicated region
      $region33: #{transformer_forward.2} parent=15 // pred_check
        %p468 = pneg %p156
      $region34: #{transformer_forward.2} parent=15 // pred_check_branch
        %470 = sbr.rel (%p468) target = $region36
      $region35: #{transformer_forward.2} parent=15 // pred_region
        %p471 = scmp.lt.s32.totalorder %s28, 1
        %s472 = scalar_select %p471, %s28, 1
        %s473 = smul.addr %s472, 16
        %s474 = smul.addr %s473, 8
        %s475 = scalar_lea.vmem %s4, %s474
      $region36: #{transformer_forward.2} parent=15 // pred_fallthru
        _
      // Predicated region
      $region37: #{transformer_forward.2} parent=15 // pred_check
        %p476 = pneg %p182
      $region38: #{transformer_forward.2} parent=15 // pred_check_branch
        %478 = sbr.rel (%p476) target = $region40
      $region39: #{transformer_forward.2} parent=15 // pred_region
        %p479 = scmp.lt.s32.totalorder %s28, 1
        %s480 = scalar_select %p479, %s28, 1
        %s481 = smul.addr %s480, 16
        %s482 = smul.addr %s481, 8
        %s483 = scalar_lea.vmem %s5, %s482
      $region40: #{transformer_forward.2} parent=15 // pred_fallthru
        _
      // Predicated region
      $region41: #{transformer_forward.2} parent=15 // pred_check
        %p484 = pneg %p208
      $region42: #{transformer_forward.2} parent=15 // pred_check_branch
        %486 = sbr.rel (%p484) target = $region44
      $region43: #{transformer_forward.2} parent=15 // pred_region
        %p487 = scmp.lt.s32.totalorder %s28, 1
        %s488 = scalar_select %p487, %s28, 1
        %s489 = smul.addr %s488, 4
        %s490 = smul.addr %s489, 8
        %s491 = scalar_lea.vmem %s6, %s490
      $region44: #{transformer_forward.2} parent=15 // pred_fallthru
        _
      // Predicated region
      $region45: #{transformer_forward.2} parent=15 // pred_check
        %p492 = pneg %p234
      $region46: #{transformer_forward.2} parent=15 // pred_check_branch
        %494 = sbr.rel (%p492) target = $region48
      $region47: #{transformer_forward.2} parent=15 // pred_region
        %p495 = scmp.lt.s32.totalorder %s28, 1
        %s496 = scalar_select %p495, %s28, 1
        %s497 = scalar_lea.vmem %s7, %s496
      $region48: #{transformer_forward.2} parent=15 // pred_fallthru
        _
      // Predicated region
      $region49: #{transformer_forward.2} parent=15 // pred_check
        %p498 = pneg %p260
      $region50: #{transformer_forward.2} parent=15 // pred_check_branch
        %500 = sbr.rel (%p498) target = $region52
      $region51: #{transformer_forward.2} parent=15 // pred_region
        %p501 = scmp.lt.s32.totalorder %s28, 1
        %s502 = scalar_select %p501, %s28, 1
        %s503 = scalar_lea.vmem %s8, %s502
      $region52: #{transformer_forward.2} parent=15 // pred_fallthru
        _
      // Predicated region
      $region53: #{transformer_forward.2} parent=15 // pred_check
        %p504 = pneg %p286
      $region54: #{transformer_forward.2} parent=15 // pred_check_branch
        %506 = sbr.rel (%p504) target = $region56
      $region55: #{transformer_forward.2} parent=15 // pred_region
        %p507 = scmp.lt.s32.totalorder %s28, 1
        %s508 = scalar_select %p507, %s28, 1
        %s509 = scalar_lea.vmem %s9, %s508
      $region56: #{transformer_forward.2} parent=15 // pred_fallthru
        _
      // Predicated region
      $region57: #{transformer_forward.2} parent=15 // pred_check
        %p510 = pneg %p312
      $region58: #{transformer_forward.2} parent=15 // pred_check_branch
        %512 = sbr.rel (%p510) target = $region60
      $region59: #{transformer_forward.2} parent=15 // pred_region
        %p513 = scmp.lt.s32.totalorder %s28, 1
        %s514 = scalar_select %p513, %s28, 1
        %s515 = smul.addr %s514, 4
        %s516 = smul.addr %s515, 8
        %s517 = scalar_lea.vmem %s10, %s516
      $region60: #{transformer_forward.2} parent=15 // pred_fallthru
        _
      // Predicated region
      $region61: #{transformer_forward.2} parent=15 // pred_check
        %p518 = pneg %p338
      $region62: #{transformer_forward.2} parent=15 // pred_check_branch
        %520 = sbr.rel (%p518) target = $region64
      $region63: #{transformer_forward.2} parent=15 // pred_region
        %p521 = scmp.lt.s32.totalorder %s28, 1
        %s522 = scalar_select %p521, %s28, 1
        %s523 = scalar_lea.vmem %s11, %s522
      $region64: #{transformer_forward.2} parent=15 // pred_fallthru
        _
      // Predicated region
      $region65: #{transformer_forward.2} parent=15 // pred_check
        %p524 = pneg %p364
      $region66: #{transformer_forward.2} parent=15 // pred_check_branch
        %526 = sbr.rel (%p524) target = $region68
      $region67: #{transformer_forward.2} parent=15 // pred_region
        %p527 = scmp.lt.s32.totalorder %s28, 1
        %s528 = scalar_select %p527, %s28, 1
        %s529 = smul.addr %s528, 8
        %s530 = smul.addr %s529, 8
        %s531 = scalar_lea.vmem %s12, %s530
      $region68: #{transformer_forward.2} parent=15 // pred_fallthru
        _
      // Predicated region
      $region69: #{transformer_forward.2} parent=15 // pred_check
        %p532 = pneg %p390
      $region70: #{transformer_forward.2} parent=15 // pred_check_branch
        %534 = sbr.rel (%p532) target = $region72
      $region71: #{transformer_forward.2} parent=15 // pred_region
        %p535 = scmp.lt.s32.totalorder %s28, 1
        %s536 = scalar_select %p535, %s28, 1
        %s537 = scalar_lea.vmem %s13, %s536
      $region72: #{transformer_forward.2} parent=15 // pred_fallthru
        _
    $region16: #{transformer_forward.2} parent=5 // pred_fallthru
      _
    %p538 = scmp.le.s32.totalorder 1, %s20
    %p539 = scmp.lt.s32.totalorder %s20, 5
    %p540 = pnand %p538, %p539
    %p541 = pneg %p540
    // Predicated region
    $region73: #{transformer_forward.2} parent=5 // pred_check
      _
    $region74: #{transformer_forward.2} parent=5 // pred_check_branch
      %543 = sbr.rel (%p540) target = $region76
    $region75: #{transformer_forward.2} parent=5 // pred_region
      %s544 = ssub.s32 %s20, 1
      %p545 = scmp.lt.s32.totalorder %s29, 1
      %s546 = scalar_select %p545, %s29, 1
      %s547 = smul.addr %s546, 8
      %s548 = scalar_lea.vmem %s0, %s547
      %p549 = pneg %p58
      %p550 = pneg %p55
      %p551 = scmp.lt.s32.totalorder %s30, 1
      %s552 = scalar_select %p551, %s30, 1
      %s553 = scalar_lea.vmem %s1, %s552
      %p554 = pneg %p84
      %p555 = pneg %p81
      %p556 = scmp.lt.s32.totalorder %s30, 1
      %s557 = scalar_select %p556, %s30, 1
      %s558 = scalar_lea.vmem %s2, %s557
      %p559 = pneg %p110
      %p560 = pneg %p107
      %p561 = scmp.lt.s32.totalorder %s30, 1
      %s562 = scalar_select %p561, %s30, 1
      %s563 = smul.addr %s562, 16
      %s564 = smul.addr %s563, 8
      %s565 = scalar_lea.vmem %s3, %s564
      %p566 = pneg %p136
      %p567 = pneg %p133
      %p568 = scmp.lt.s32.totalorder %s30, 1
      %s569 = scalar_select %p568, %s30, 1
      %s570 = smul.addr %s569, 16
      %s571 = smul.addr %s570, 8
      %s572 = scalar_lea.vmem %s4, %s571
      %p573 = pneg %p162
      %p574 = pneg %p159
      %p575 = scmp.lt.s32.totalorder %s30, 1
      %s576 = scalar_select %p575, %s30, 1
      %s577 = smul.addr %s576, 16
      %s578 = smul.addr %s577, 8
      %s579 = scalar_lea.vmem %s5, %s578
      %p580 = pneg %p188
      %p581 = pneg %p185
      %p582 = scmp.lt.s32.totalorder %s30, 1
      %s583 = scalar_select %p582, %s30, 1
      %s584 = smul.addr %s583, 4
      %s585 = smul.addr %s584, 8
      %s586 = scalar_lea.vmem %s6, %s585
      %p587 = pneg %p214
      %p588 = pneg %p211
      %p589 = scmp.lt.s32.totalorder %s30, 1
      %s590 = scalar_select %p589, %s30, 1
      %s591 = scalar_lea.vmem %s7, %s590
      %p592 = pneg %p240
      %p593 = pneg %p237
      %p594 = scmp.lt.s32.totalorder %s30, 1
      %s595 = scalar_select %p594, %s30, 1
      %s596 = scalar_lea.vmem %s8, %s595
      %p597 = pneg %p266
      %p598 = pneg %p263
      %p599 = scmp.lt.s32.totalorder %s30, 1
      %s600 = scalar_select %p599, %s30, 1
      %s601 = scalar_lea.vmem %s9, %s600
      %p602 = pneg %p292
      %p603 = pneg %p289
      %p604 = scmp.lt.s32.totalorder %s30, 1
      %s605 = scalar_select %p604, %s30, 1
      %s606 = smul.addr %s605, 4
      %s607 = smul.addr %s606, 8
      %s608 = scalar_lea.vmem %s10, %s607
      %p609 = pneg %p318
      %p610 = pneg %p315
      %p611 = scmp.lt.s32.totalorder %s30, 1
      %s612 = scalar_select %p611, %s30, 1
      %s613 = scalar_lea.vmem %s11, %s612
      %p614 = pneg %p344
      %p615 = pneg %p341
      %p616 = scmp.lt.s32.totalorder %s30, 1
      %s617 = scalar_select %p616, %s30, 1
      %s618 = smul.addr %s617, 8
      %s619 = smul.addr %s618, 8
      %s620 = scalar_lea.vmem %s12, %s619
      %p621 = pneg %p370
      %p622 = pneg %p367
      %p623 = scmp.lt.s32.totalorder %s30, 1
      %s624 = scalar_select %p623, %s30, 1
      %s625 = scalar_lea.vmem %s13, %s624
      %p626 = pneg %p396
      %p627 = pneg %p393
      %p628 = pneg %p422
      %p629 = pneg %p419
      %p630 = scmp.lt.s32.totalorder %s29, 1
      %s631 = scalar_select %p630, %s29, 1
      %s632 = smul.addr %s631, 8
      %s633 = scalar_lea.vmem %s14, %s632
      %p634 = scmp.lt.s32.totalorder %s29, 1
      %s635 = scalar_select %p634, %s29, 1
      %s636 = smul.addr %s635, 8
      %s637 = scalar_lea.vmem %s0, %s636
      %p638 = scmp.lt.s32.totalorder %s30, 1
      %s639 = scalar_select %p638, %s30, 1
      %s640 = scalar_lea.vmem %s1, %s639
      %p641 = scmp.lt.s32.totalorder %s30, 1
      %s642 = scalar_select %p641, %s30, 1
      %s643 = scalar_lea.vmem %s2, %s642
      %p644 = scmp.lt.s32.totalorder %s30, 1
      %s645 = scalar_select %p644, %s30, 1
      %s646 = smul.addr %s645, 16
      %s647 = smul.addr %s646, 8
      %s648 = scalar_lea.vmem %s3, %s647
      %p649 = scmp.lt.s32.totalorder %s30, 1
      %s650 = scalar_select %p649, %s30, 1
      %s651 = smul.addr %s650, 16
      %s652 = smul.addr %s651, 8
      %s653 = scalar_lea.vmem %s4, %s652
      %p654 = scmp.lt.s32.totalorder %s30, 1
      %s655 = scalar_select %p654, %s30, 1
      %s656 = smul.addr %s655, 16
      %s657 = smul.addr %s656, 8
      %s658 = scalar_lea.vmem %s5, %s657
      %p659 = scmp.lt.s32.totalorder %s30, 1
      %s660 = scalar_select %p659, %s30, 1
      %s661 = smul.addr %s660, 4
      %s662 = smul.addr %s661, 8
      %s663 = scalar_lea.vmem %s6, %s662
      %p664 = scmp.lt.s32.totalorder %s30, 1
      %s665 = scalar_select %p664, %s30, 1
      %s666 = scalar_lea.vmem %s7, %s665
      %p667 = scmp.lt.s32.totalorder %s30, 1
      %s668 = scalar_select %p667, %s30, 1
      %s669 = scalar_lea.vmem %s8, %s668
      %p670 = scmp.lt.s32.totalorder %s30, 1
      %s671 = scalar_select %p670, %s30, 1
      %s672 = scalar_lea.vmem %s9, %s671
      %p673 = scmp.lt.s32.totalorder %s30, 1
      %s674 = scalar_select %p673, %s30, 1
      %s675 = smul.addr %s674, 4
      %s676 = smul.addr %s675, 8
      %s677 = scalar_lea.vmem %s10, %s676
      %p678 = scmp.lt.s32.totalorder %s30, 1
      %s679 = scalar_select %p678, %s30, 1
      %s680 = scalar_lea.vmem %s11, %s679
      %p681 = scmp.lt.s32.totalorder %s30, 1
      %s682 = scalar_select %p681, %s30, 1
      %s683 = smul.addr %s682, 8
      %s684 = smul.addr %s683, 8
      %s685 = scalar_lea.vmem %s12, %s684
      %p686 = scmp.lt.s32.totalorder %s30, 1
      %s687 = scalar_select %p686, %s30, 1
      %s688 = scalar_lea.vmem %s13, %s687
      %p689 = scmp.lt.s32.totalorder %s29, 1
      %s690 = scalar_select %p689, %s29, 1
      %s691 = smul.addr %s690, 8
      %s692 = scalar_lea.vmem %s14, %s691
      %p693 = scmp.eq.s32.totalorder %s30, 0
      // Predicated region
      $region77: #{transformer_forward.2} parent=75 // pred_check
        %p694 = pneg %p693
      $region78: #{transformer_forward.2} parent=75 // pred_check_branch
        %696 = sbr.rel (%p694) target = $region80
      $region79: #{transformer_forward.2} parent=75 // pred_region
        %v697 = vld [vmem:[%s637] sm:$0xff]
        %vm698 = vcmask 261120
        %699 = vst.msk [vmem:[#allocation2] sm:$0xff] %vm698, %v697
      $region80: #{transformer_forward.2} parent=75 // pred_fallthru
        _
      %v700 = vld [vmem:[#allocation2] sm:$0xff]
      %v701 = vld [vmem:[%s640] sm:$0x1]
      %v702 = vld [vmem:[%s643] sm:$0x1]
      %vm703 = vcmask 261120
      %v704 = vsel %vm703, %v700, 0.0
      %705 = vadd.xlane.f32.xlu0 %v704
      %v706 = vpop.xlane.xlu0 %705
      %v707 = vrcp.pop 32.0
      %v708 = vmul.f32 %v706, %v707
      %v709 = vsub.f32 %v700, %v708
      %v710 = vmul.f32 %v709, %v709
      %v711 = vsel %vm703, %v710, 0.0
      %712 = vadd.xlane.f32.xlu0 %v711
      %v713 = vpop.xlane.xlu0 %712
      %v714 = vmul.f32 %v713, %v707
      %v715 = vadd.f32 %v714, 1e-05
      %v716 = vrsqrt.pop %v715
      %v717 = vmul.f32 %v709, %v716
      %v719 = vlaneseq
      %v720 = vshrl.u32 %v719, 7
      %v721 = vsub.s32 0, %v720
      %v722 = vrot.slane %v701, %v721
      %v724 = vmul.f32 %v717, %v722
      %v726 = vlaneseq
      %v727 = vshrl.u32 %v726, 7
      %v728 = vsub.s32 0, %v727
      %v729 = vrot.slane %v702, %v728
      %v731 = vadd.f32 %v724, %v729
      %v732 = vld [vmem:[%s648] sm:$0xff]
      %v733 = vld [vmem:[%s648 + $0x8] sm:$0xff]
      %v734 = vld [vmem:[%s648 + $0x10] sm:$0xff]
      %v735 = vld [vmem:[%s648 + $0x18] sm:$0xff]
      %v737 = vsel %vm703, %v731, 0
      %739 = vmatprep.subr.mxu0 0.0
      %740 = vmatpush1.msra.mxu0 %v732
      %741 = vmatprep.subr.mxu0 0.0
      %742 = vmatpush1.msra.mxu0 %v733
      %743 = vmatprep.subr.mxu0 0.0
      %744 = vmatpush1.msra.mxu0 %v734
      %745 = vmatprep.subr.mxu0 0.0
      %746 = vmatpush1.msra.mxu0 %v735
      %747 = vmatprep.subr.mxu0 0.0
      %748 = vmatpush1.msra.mxu0 0.0
      %749 = vmatprep.subr.mxu0 0.0
      %750 = vmatpush1.msra.mxu0 0.0
      %751 = vmatprep.subr.mxu0 0.0
      %752 = vmatpush1.msra.mxu0 0.0
      %753 = vmatprep.subr.mxu0 0.0
      %754 = vmatpush1.msra.mxu0 0.0
      %755 = vmatprep.subr.mxu0 0.0
      %756 = vmatpush1.msra.mxu0 0.0
      %757 = vmatprep.subr.mxu0 0.0
      %758 = vmatpush1.msra.mxu0 0.0
      %759 = vmatprep.subr.mxu0 0.0
      %760 = vmatpush1.msra.mxu0 0.0
      %761 = vmatprep.subr.mxu0 0.0
      %762 = vmatpush1.msra.mxu0 0.0
      %763 = vmatprep.subr.mxu0 0.0
      %764 = vmatpush1.msra.mxu0 0.0
      %765 = vmatprep.subr.mxu0 0.0
      %766 = vmatpush1.msra.mxu0 0.0
      %767 = vmatprep.subr.mxu0 0.0
      %768 = vmatpush1.msra.mxu0 0.0
      %769 = vmatprep.subr.mxu0 0.0
      %770 = vmatpush1.msra.mxu0 0.0
      %771 = vmatprep.subr.mxu0 0.0
      %772 = vmatpush1.msra.mxu0 0.0
      %773 = vmatprep.subr.mxu0 0.0
      %774 = vmatpush1.msra.mxu0 0.0
      %775 = vmatprep.subr.mxu0 0.0
      %776 = vmatpush1.msra.mxu0 0.0
      %777 = vmatprep.subr.mxu0 0.0
      %778 = vmatpush1.msra.mxu0 0.0
      %779 = vmatprep.subr.mxu0 0.0
      %780 = vmatpush1.msra.mxu0 0.0
      %781 = vmatprep.subr.mxu0 0.0
      %782 = vmatpush1.msra.mxu0 0.0
      %783 = vmatprep.subr.mxu0 0.0
      %784 = vmatpush1.msra.mxu0 0.0
      %785 = vmatprep.subr.mxu0 0.0
      %786 = vmatpush1.msra.mxu0 0.0
      %787 = vmatprep.subr.mxu0 0.0
      %788 = vmatpush1.msra.mxu0 0.0
      %789 = vmatprep.subr.mxu0 0.0
      %790 = vmatpush1.msra.mxu0 0.0
      %791 = vmatprep.subr.mxu0 0.0
      %792 = vmatpush1.msra.mxu0 0.0
      %793 = vmatprep.subr.mxu0 0.0
      %794 = vmatpush1.msra.mxu0 0.0
      %795 = vmatprep.subr.mxu0 0.0
      %796 = vmatpush1.msra.mxu0 0.0
      %797 = vmatprep.subr.mxu0 0.0
      %798 = vmatpush1.msra.mxu0 0.0
      %799 = vmatprep.subr.mxu0 0.0
      %800 = vmatpush1.msra.mxu0 0.0
      %801 = vmatprep.subr.mxu0 0.0
      %802 = vmatpush1.msra.mxu0 0.0
      %803 = vmatprep.mubr.f32.mxu0 0.0
      %804 = vmatmul.mubr.f32.gmra.mrb[0].mxu0 %v737
      %v805 = vpop.f32.mrb[0].mxu0
      %v806 = vadd.f32 0.0, %v805
      %v807 = vpop.f32.mrb[0].mxu0
      %808 = vdwg.mxu0
      %v809 = vld [vmem:[%s653] sm:$0xff]
      %v810 = vld [vmem:[%s653 + $0x8] sm:$0xff]
      %v811 = vld [vmem:[%s653 + $0x10] sm:$0xff]
      %v812 = vld [vmem:[%s653 + $0x18] sm:$0xff]
      %813 = vmatprep.subr.mxu0 0.0
      %814 = vmatpush1.msra.mxu0 %v809
      %815 = vmatprep.subr.mxu0 0.0
      %816 = vmatpush1.msra.mxu0 %v810
      %817 = vmatprep.subr.mxu0 0.0
      %818 = vmatpush1.msra.mxu0 %v811
      %819 = vmatprep.subr.mxu0 0.0
      %820 = vmatpush1.msra.mxu0 %v812
      %821 = vmatprep.subr.mxu0 0.0
      %822 = vmatpush1.msra.mxu0 0.0
      %823 = vmatprep.subr.mxu0 0.0
      %824 = vmatpush1.msra.mxu0 0.0
      %825 = vmatprep.subr.mxu0 0.0
      %826 = vmatpush1.msra.mxu0 0.0
      %827 = vmatprep.subr.mxu0 0.0
      %828 = vmatpush1.msra.mxu0 0.0
      %829 = vmatprep.subr.mxu0 0.0
      %830 = vmatpush1.msra.mxu0 0.0
      %831 = vmatprep.subr.mxu0 0.0
      %832 = vmatpush1.msra.mxu0 0.0
      %833 = vmatprep.subr.mxu0 0.0
      %834 = vmatpush1.msra.mxu0 0.0
      %835 = vmatprep.subr.mxu0 0.0
      %836 = vmatpush1.msra.mxu0 0.0
      %837 = vmatprep.subr.mxu0 0.0
      %838 = vmatpush1.msra.mxu0 0.0
      %839 = vmatprep.subr.mxu0 0.0
      %840 = vmatpush1.msra.mxu0 0.0
      %841 = vmatprep.subr.mxu0 0.0
      %842 = vmatpush1.msra.mxu0 0.0
      %843 = vmatprep.subr.mxu0 0.0
      %844 = vmatpush1.msra.mxu0 0.0
      %845 = vmatprep.subr.mxu0 0.0
      %846 = vmatpush1.msra.mxu0 0.0
      %847 = vmatprep.subr.mxu0 0.0
      %848 = vmatpush1.msra.mxu0 0.0
      %849 = vmatprep.subr.mxu0 0.0
      %850 = vmatpush1.msra.mxu0 0.0
      %851 = vmatprep.subr.mxu0 0.0
      %852 = vmatpush1.msra.mxu0 0.0
      %853 = vmatprep.subr.mxu0 0.0
      %854 = vmatpush1.msra.mxu0 0.0
      %855 = vmatprep.subr.mxu0 0.0
      %856 = vmatpush1.msra.mxu0 0.0
      %857 = vmatprep.subr.mxu0 0.0
      %858 = vmatpush1.msra.mxu0 0.0
      %859 = vmatprep.subr.mxu0 0.0
      %860 = vmatpush1.msra.mxu0 0.0
      %861 = vmatprep.subr.mxu0 0.0
      %862 = vmatpush1.msra.mxu0 0.0
      %863 = vmatprep.subr.mxu0 0.0
      %864 = vmatpush1.msra.mxu0 0.0
      %865 = vmatprep.subr.mxu0 0.0
      %866 = vmatpush1.msra.mxu0 0.0
      %867 = vmatprep.subr.mxu0 0.0
      %868 = vmatpush1.msra.mxu0 0.0
      %869 = vmatprep.subr.mxu0 0.0
      %870 = vmatpush1.msra.mxu0 0.0
      %871 = vmatprep.subr.mxu0 0.0
      %872 = vmatpush1.msra.mxu0 0.0
      %873 = vmatprep.subr.mxu0 0.0
      %874 = vmatpush1.msra.mxu0 0.0
      %875 = vmatprep.subr.mxu0 0.0
      %876 = vmatpush1.msra.mxu0 0.0
      %877 = vmatprep.mubr.f32.mxu0 0.0
      %878 = vmatmul.mubr.f32.gmra.mrb[0].mxu0 %v737
      %v879 = vpop.f32.mrb[0].mxu0
      %v880 = vadd.f32 0.0, %v879
      %v881 = vpop.f32.mrb[0].mxu0
      %882 = vdwg.mxu0
      %v883 = vld [vmem:[%s658] sm:$0xff]
      %v884 = vld [vmem:[%s658 + $0x8] sm:$0xff]
      %v885 = vld [vmem:[%s658 + $0x10] sm:$0xff]
      %v886 = vld [vmem:[%s658 + $0x18] sm:$0xff]
      %887 = vmatprep.subr.mxu0 0.0
      %888 = vmatpush1.msra.mxu0 %v883
      %889 = vmatprep.subr.mxu0 0.0
      %890 = vmatpush1.msra.mxu0 %v884
      %891 = vmatprep.subr.mxu0 0.0
      %892 = vmatpush1.msra.mxu0 %v885
      %893 = vmatprep.subr.mxu0 0.0
      %894 = vmatpush1.msra.mxu0 %v886
      %895 = vmatprep.subr.mxu0 0.0
      %896 = vmatpush1.msra.mxu0 0.0
      %897 = vmatprep.subr.mxu0 0.0
      %898 = vmatpush1.msra.mxu0 0.0
      %899 = vmatprep.subr.mxu0 0.0
      %900 = vmatpush1.msra.mxu0 0.0
      %901 = vmatprep.subr.mxu0 0.0
      %902 = vmatpush1.msra.mxu0 0.0
      %903 = vmatprep.subr.mxu0 0.0
      %904 = vmatpush1.msra.mxu0 0.0
      %905 = vmatprep.subr.mxu0 0.0
      %906 = vmatpush1.msra.mxu0 0.0
      %907 = vmatprep.subr.mxu0 0.0
      %908 = vmatpush1.msra.mxu0 0.0
      %909 = vmatprep.subr.mxu0 0.0
      %910 = vmatpush1.msra.mxu0 0.0
      %911 = vmatprep.subr.mxu0 0.0
      %912 = vmatpush1.msra.mxu0 0.0
      %913 = vmatprep.subr.mxu0 0.0
      %914 = vmatpush1.msra.mxu0 0.0
      %915 = vmatprep.subr.mxu0 0.0
      %916 = vmatpush1.msra.mxu0 0.0
      %917 = vmatprep.subr.mxu0 0.0
      %918 = vmatpush1.msra.mxu0 0.0
      %919 = vmatprep.subr.mxu0 0.0
      %920 = vmatpush1.msra.mxu0 0.0
      %921 = vmatprep.subr.mxu0 0.0
      %922 = vmatpush1.msra.mxu0 0.0
      %923 = vmatprep.subr.mxu0 0.0
      %924 = vmatpush1.msra.mxu0 0.0
      %925 = vmatprep.subr.mxu0 0.0
      %926 = vmatpush1.msra.mxu0 0.0
      %927 = vmatprep.subr.mxu0 0.0
      %928 = vmatpush1.msra.mxu0 0.0
      %929 = vmatprep.subr.mxu0 0.0
      %930 = vmatpush1.msra.mxu0 0.0
      %931 = vmatprep.subr.mxu0 0.0
      %932 = vmatpush1.msra.mxu0 0.0
      %933 = vmatprep.subr.mxu0 0.0
      %934 = vmatpush1.msra.mxu0 0.0
      %935 = vmatprep.subr.mxu0 0.0
      %936 = vmatpush1.msra.mxu0 0.0
      %937 = vmatprep.subr.mxu0 0.0
      %938 = vmatpush1.msra.mxu0 0.0
      %939 = vmatprep.subr.mxu0 0.0
      %940 = vmatpush1.msra.mxu0 0.0
      %941 = vmatprep.subr.mxu0 0.0
      %942 = vmatpush1.msra.mxu0 0.0
      %943 = vmatprep.subr.mxu0 0.0
      %944 = vmatpush1.msra.mxu0 0.0
      %945 = vmatprep.subr.mxu0 0.0
      %946 = vmatpush1.msra.mxu0 0.0
      %947 = vmatprep.subr.mxu0 0.0
      %948 = vmatpush1.msra.mxu0 0.0
      %949 = vmatprep.subr.mxu0 0.0
      %950 = vmatpush1.msra.mxu0 0.0
      %951 = vmatprep.mubr.f32.mxu0 0.0
      %952 = vmatmul.mubr.f32.gmra.mrb[0].mxu0 %v737
      %v953 = vpop.f32.mrb[0].mxu0
      %v954 = vadd.f32 0.0, %v953
      %v955 = vpop.f32.mrb[0].mxu0
      %956 = vdwg.mxu0
      %vm957 = vcmask 64512
      %v959 = vsel %vm957, %v806, 0
      %v962 = vsel %vm957, %v880, 0
      %964 = vmatprep.subr.mxu0 0.0
      %965 = vmatpush1.xpose.msra.mxu0 %v962
      %966 = vmatprep.subr.mxu0 0.0
      %967 = vmatpush1.xpose.msra.mxu0 0.0
      %968 = vmatprep.subr.mxu0 0.0
      %969 = vmatpush1.xpose.msra.mxu0 0.0
      %970 = vmatprep.subr.mxu0 0.0
      %971 = vmatpush1.xpose.msra.mxu0 0.0
      %972 = vmatprep.subr.mxu0 0.0
      %973 = vmatpush1.xpose.msra.mxu0 0.0
      %974 = vmatprep.subr.mxu0 0.0
      %975 = vmatpush1.xpose.msra.mxu0 0.0
      %976 = vmatprep.subr.mxu0 0.0
      %977 = vmatpush1.xpose.msra.mxu0 0.0
      %978 = vmatprep.subr.mxu0 0.0
      %979 = vmatpush1.xpose.msra.mxu0 0.0
      %980 = vmatprep.subr.mxu0 0.0
      %981 = vmatpush1.xpose.msra.mxu0 0.0
      %982 = vmatprep.subr.mxu0 0.0
      %983 = vmatpush1.xpose.msra.mxu0 0.0
      %984 = vmatprep.subr.mxu0 0.0
      %985 = vmatpush1.xpose.msra.mxu0 0.0
      %986 = vmatprep.subr.mxu0 0.0
      %987 = vmatpush1.xpose.msra.mxu0 0.0
      %988 = vmatprep.subr.mxu0 0.0
      %989 = vmatpush1.xpose.msra.mxu0 0.0
      %990 = vmatprep.subr.mxu0 0.0
      %991 = vmatpush1.xpose.msra.mxu0 0.0
      %992 = vmatprep.subr.mxu0 0.0
      %993 = vmatpush1.xpose.msra.mxu0 0.0
      %994 = vmatprep.subr.mxu0 0.0
      %995 = vmatpush1.xpose.msra.mxu0 0.0
      %996 = vmatprep.subr.mxu0 0.0
      %997 = vmatpush1.xpose.msra.mxu0 0.0
      %998 = vmatprep.subr.mxu0 0.0
      %999 = vmatpush1.xpose.msra.mxu0 0.0
      %1000 = vmatprep.subr.mxu0 0.0
      %1001 = vmatpush1.xpose.msra.mxu0 0.0
      %1002 = vmatprep.subr.mxu0 0.0
      %1003 = vmatpush1.xpose.msra.mxu0 0.0
      %1004 = vmatprep.subr.mxu0 0.0
      %1005 = vmatpush1.xpose.msra.mxu0 0.0
      %1006 = vmatprep.subr.mxu0 0.0
      %1007 = vmatpush1.xpose.msra.mxu0 0.0
      %1008 = vmatprep.subr.mxu0 0.0
      %1009 = vmatpush1.xpose.msra.mxu0 0.0
      %1010 = vmatprep.subr.mxu0 0.0
      %1011 = vmatpush1.xpose.msra.mxu0 0.0
      %1012 = vmatprep.subr.mxu0 0.0
      %1013 = vmatpush1.xpose.msra.mxu0 0.0
      %1014 = vmatprep.subr.mxu0 0.0
      %1015 = vmatpush1.xpose.msra.mxu0 0.0
      %1016 = vmatprep.subr.mxu0 0.0
      %1017 = vmatpush1.xpose.msra.mxu0 0.0
      %1018 = vmatprep.subr.mxu0 0.0
      %1019 = vmatpush1.xpose.msra.mxu0 0.0
      %1020 = vmatprep.subr.mxu0 0.0
      %1021 = vmatpush1.xpose.msra.mxu0 0.0
      %1022 = vmatprep.subr.mxu0 0.0
      %1023 = vmatpush1.xpose.msra.mxu0 0.0
      %1024 = vmatprep.subr.mxu0 0.0
      %1025 = vmatpush1.xpose.msra.mxu0 0.0
      %1026 = vmatprep.subr.mxu0 0.0
      %1027 = vmatpush1.xpose.msra.mxu0 0.0
      %1028 = vmatprep.mubr.f32.mxu0 0.0
      %1029 = vmatmul.mubr.f32.gmra.mrb[0].mxu0 %v959
      %v1030 = vpop.f32.mrb[0].mxu0
      %v1031 = vadd.f32 0.0, %v1030
      %v1032 = vpop.f32.mrb[0].mxu0
      %1033 = vdwg.mxu0
      %v1034 = vsel %vm957, %v1031, -inf
      %1035 = vmax.xlane.f32.xlu0 %v1034
      %v1036 = vpop.xlane.xlu0 %1035
      %v1037 = vsub.f32 %v1031, %v1036
      %v1038 = vmul.f32 %v1037, 1.442695
      %v1039 = vpow.pop %v1038
      %v1040 = vsel %vm957, %v1039, 0.0
      %1041 = vadd.xlane.f32.xlu0 %v1040
      %v1042 = vpop.xlane.xlu0 %1041
      %v1043 = vrcp.pop %v1042
      %v1044 = vmul.f32 %v1042, %v1043
      %v1045 = vsub.f32 2.0, %v1044
      %v1046 = vmul.f32 %v1043, %v1045
      %v1047 = vmul.f32 %v1039, %v1046
      %v1049 = vsel %vm957, %v1047, 0
      %1051 = vmatprep.subr.mxu0 0.0
      %1052 = vmatpush1.msra.mxu0 %v954
      %1053 = vmatprep.subr.mxu0 0.0
      %1054 = vmatpush1.msra.mxu0 0.0
      %1055 = vmatprep.subr.mxu0 0.0
      %1056 = vmatpush1.msra.mxu0 0.0
      %1057 = vmatprep.subr.mxu0 0.0
      %1058 = vmatpush1.msra.mxu0 0.0
      %1059 = vmatprep.subr.mxu0 0.0
      %1060 = vmatpush1.msra.mxu0 0.0
      %1061 = vmatprep.subr.mxu0 0.0
      %1062 = vmatpush1.msra.mxu0 0.0
      %1063 = vmatprep.subr.mxu0 0.0
      %1064 = vmatpush1.msra.mxu0 0.0
      %1065 = vmatprep.subr.mxu0 0.0
      %1066 = vmatpush1.msra.mxu0 0.0
      %1067 = vmatprep.subr.mxu0 0.0
      %1068 = vmatpush1.msra.mxu0 0.0
      %1069 = vmatprep.subr.mxu0 0.0
      %1070 = vmatpush1.msra.mxu0 0.0
      %1071 = vmatprep.subr.mxu0 0.0
      %1072 = vmatpush1.msra.mxu0 0.0
      %1073 = vmatprep.subr.mxu0 0.0
      %1074 = vmatpush1.msra.mxu0 0.0
      %1075 = vmatprep.subr.mxu0 0.0
      %1076 = vmatpush1.msra.mxu0 0.0
      %1077 = vmatprep.subr.mxu0 0.0
      %1078 = vmatpush1.msra.mxu0 0.0
      %1079 = vmatprep.subr.mxu0 0.0
      %1080 = vmatpush1.msra.mxu0 0.0
      %1081 = vmatprep.subr.mxu0 0.0
      %1082 = vmatpush1.msra.mxu0 0.0
      %1083 = vmatprep.subr.mxu0 0.0
      %1084 = vmatpush1.msra.mxu0 0.0
      %1085 = vmatprep.subr.mxu0 0.0
      %1086 = vmatpush1.msra.mxu0 0.0
      %1087 = vmatprep.subr.mxu0 0.0
      %1088 = vmatpush1.msra.mxu0 0.0
      %1089 = vmatprep.subr.mxu0 0.0
      %1090 = vmatpush1.msra.mxu0 0.0
      %1091 = vmatprep.subr.mxu0 0.0
      %1092 = vmatpush1.msra.mxu0 0.0
      %1093 = vmatprep.subr.mxu0 0.0
      %1094 = vmatpush1.msra.mxu0 0.0
      %1095 = vmatprep.subr.mxu0 0.0
      %1096 = vmatpush1.msra.mxu0 0.0
      %1097 = vmatprep.subr.mxu0 0.0
      %1098 = vmatpush1.msra.mxu0 0.0
      %1099 = vmatprep.subr.mxu0 0.0
      %1100 = vmatpush1.msra.mxu0 0.0
      %1101 = vmatprep.subr.mxu0 0.0
      %1102 = vmatpush1.msra.mxu0 0.0
      %1103 = vmatprep.subr.mxu0 0.0
      %1104 = vmatpush1.msra.mxu0 0.0
      %1105 = vmatprep.subr.mxu0 0.0
      %1106 = vmatpush1.msra.mxu0 0.0
      %1107 = vmatprep.subr.mxu0 0.0
      %1108 = vmatpush1.msra.mxu0 0.0
      %1109 = vmatprep.subr.mxu0 0.0
      %1110 = vmatpush1.msra.mxu0 0.0
      %1111 = vmatprep.subr.mxu0 0.0
      %1112 = vmatpush1.msra.mxu0 0.0
      %1113 = vmatprep.subr.mxu0 0.0
      %1114 = vmatpush1.msra.mxu0 0.0
      %1115 = vmatprep.mubr.f32.mxu0 0.0
      %1116 = vmatmul.mubr.f32.gmra.mrb[0].mxu0 %v1049
      %v1117 = vpop.f32.mrb[0].mxu0
      %v1118 = vadd.f32 0.0, %v1117
      %v1119 = vpop.f32.mrb[0].mxu0
      %1120 = vdwg.mxu0
      %v1121 = vld [vmem:[%s663] sm:$0xff]
      %s1122 = scalar_lea.vmem %s648, 32
      %v1123 = vld [vmem:[%s1122] sm:$0xff]
      %v1124 = vld [vmem:[%s1122 + $0x8] sm:$0xff]
      %v1125 = vld [vmem:[%s1122 + $0x10] sm:$0xff]
      %v1126 = vld [vmem:[%s1122 + $0x18] sm:$0xff]
      %1127 = vmatprep.subr.mxu0 0.0
      %1128 = vmatpush1.msra.mxu0 %v1123
      %1129 = vmatprep.subr.mxu0 0.0
      %1130 = vmatpush1.msra.mxu0 %v1124
      %1131 = vmatprep.subr.mxu0 0.0
      %1132 = vmatpush1.msra.mxu0 %v1125
      %1133 = vmatprep.subr.mxu0 0.0
      %1134 = vmatpush1.msra.mxu0 %v1126
      %1135 = vmatprep.subr.mxu0 0.0
      %1136 = vmatpush1.msra.mxu0 0.0
      %1137 = vmatprep.subr.mxu0 0.0
      %1138 = vmatpush1.msra.mxu0 0.0
      %1139 = vmatprep.subr.mxu0 0.0
      %1140 = vmatpush1.msra.mxu0 0.0
      %1141 = vmatprep.subr.mxu0 0.0
      %1142 = vmatpush1.msra.mxu0 0.0
      %1143 = vmatprep.subr.mxu0 0.0
      %1144 = vmatpush1.msra.mxu0 0.0
      %1145 = vmatprep.subr.mxu0 0.0
      %1146 = vmatpush1.msra.mxu0 0.0
      %1147 = vmatprep.subr.mxu0 0.0
      %1148 = vmatpush1.msra.mxu0 0.0
      %1149 = vmatprep.subr.mxu0 0.0
      %1150 = vmatpush1.msra.mxu0 0.0
      %1151 = vmatprep.subr.mxu0 0.0
      %1152 = vmatpush1.msra.mxu0 0.0
      %1153 = vmatprep.subr.mxu0 0.0
      %1154 = vmatpush1.msra.mxu0 0.0
      %1155 = vmatprep.subr.mxu0 0.0
      %1156 = vmatpush1.msra.mxu0 0.0
      %1157 = vmatprep.subr.mxu0 0.0
      %1158 = vmatpush1.msra.mxu0 0.0
      %1159 = vmatprep.subr.mxu0 0.0
      %1160 = vmatpush1.msra.mxu0 0.0
      %1161 = vmatprep.subr.mxu0 0.0
      %1162 = vmatpush1.msra.mxu0 0.0
      %1163 = vmatprep.subr.mxu0 0.0
      %1164 = vmatpush1.msra.mxu0 0.0
      %1165 = vmatprep.subr.mxu0 0.0
      %1166 = vmatpush1.msra.mxu0 0.0
      %1167 = vmatprep.subr.mxu0 0.0
      %1168 = vmatpush1.msra.mxu0 0.0
      %1169 = vmatprep.subr.mxu0 0.0
      %1170 = vmatpush1.msra.mxu0 0.0
      %1171 = vmatprep.subr.mxu0 0.0
      %1172 = vmatpush1.msra.mxu0 0.0
      %1173 = vmatprep.subr.mxu0 0.0
      %1174 = vmatpush1.msra.mxu0 0.0
      %1175 = vmatprep.subr.mxu0 0.0
      %1176 = vmatpush1.msra.mxu0 0.0
      %1177 = vmatprep.subr.mxu0 0.0
      %1178 = vmatpush1.msra.mxu0 0.0
      %1179 = vmatprep.subr.mxu0 0.0
      %1180 = vmatpush1.msra.mxu0 0.0
      %1181 = vmatprep.subr.mxu0 0.0
      %1182 = vmatpush1.msra.mxu0 0.0
      %1183 = vmatprep.subr.mxu0 0.0
      %1184 = vmatpush1.msra.mxu0 0.0
      %1185 = vmatprep.subr.mxu0 0.0
      %1186 = vmatpush1.msra.mxu0 0.0
      %1187 = vmatprep.subr.mxu0 0.0
      %1188 = vmatpush1.msra.mxu0 0.0
      %1189 = vmatprep.subr.mxu0 0.0
      %1190 = vmatpush1.msra.mxu0 0.0
      %1191 = vmatprep.mubr.f32.mxu0 0.0
      %1192 = vmatmul.mubr.f32.gmra.mrb[0].mxu0 %v737
      %v1193 = vpop.f32.mrb[0].mxu0
      %v1194 = vadd.f32 0.0, %v1193
      %v1195 = vpop.f32.mrb[0].mxu0
      %1196 = vdwg.mxu0
      %s1197 = scalar_lea.vmem %s653, 32
      %v1198 = vld [vmem:[%s1197] sm:$0xff]
      %v1199 = vld [vmem:[%s1197 + $0x8] sm:$0xff]
      %v1200 = vld [vmem:[%s1197 + $0x10] sm:$0xff]
      %v1201 = vld [vmem:[%s1197 + $0x18] sm:$0xff]
      %1202 = vmatprep.subr.mxu0 0.0
      %1203 = vmatpush1.msra.mxu0 %v1198
      %1204 = vmatprep.subr.mxu0 0.0
      %1205 = vmatpush1.msra.mxu0 %v1199
      %1206 = vmatprep.subr.mxu0 0.0
      %1207 = vmatpush1.msra.mxu0 %v1200
      %1208 = vmatprep.subr.mxu0 0.0
      %1209 = vmatpush1.msra.mxu0 %v1201
      %1210 = vmatprep.subr.mxu0 0.0
      %1211 = vmatpush1.msra.mxu0 0.0
      %1212 = vmatprep.subr.mxu0 0.0
      %1213 = vmatpush1.msra.mxu0 0.0
      %1214 = vmatprep.subr.mxu0 0.0
      %1215 = vmatpush1.msra.mxu0 0.0
      %1216 = vmatprep.subr.mxu0 0.0
      %1217 = vmatpush1.msra.mxu0 0.0
      %1218 = vmatprep.subr.mxu0 0.0
      %1219 = vmatpush1.msra.mxu0 0.0
      %1220 = vmatprep.subr.mxu0 0.0
      %1221 = vmatpush1.msra.mxu0 0.0
      %1222 = vmatprep.subr.mxu0 0.0
      %1223 = vmatpush1.msra.mxu0 0.0
      %1224 = vmatprep.subr.mxu0 0.0
      %1225 = vmatpush1.msra.mxu0 0.0
      %1226 = vmatprep.subr.mxu0 0.0
      %1227 = vmatpush1.msra.mxu0 0.0
      %1228 = vmatprep.subr.mxu0 0.0
      %1229 = vmatpush1.msra.mxu0 0.0
      %1230 = vmatprep.subr.mxu0 0.0
      %1231 = vmatpush1.msra.mxu0 0.0
      %1232 = vmatprep.subr.mxu0 0.0
      %1233 = vmatpush1.msra.mxu0 0.0
      %1234 = vmatprep.subr.mxu0 0.0
      %1235 = vmatpush1.msra.mxu0 0.0
      %1236 = vmatprep.subr.mxu0 0.0
      %1237 = vmatpush1.msra.mxu0 0.0
      %1238 = vmatprep.subr.mxu0 0.0
      %1239 = vmatpush1.msra.mxu0 0.0
      %1240 = vmatprep.subr.mxu0 0.0
      %1241 = vmatpush1.msra.mxu0 0.0
      %1242 = vmatprep.subr.mxu0 0.0
      %1243 = vmatpush1.msra.mxu0 0.0
      %1244 = vmatprep.subr.mxu0 0.0
      %1245 = vmatpush1.msra.mxu0 0.0
      %1246 = vmatprep.subr.mxu0 0.0
      %1247 = vmatpush1.msra.mxu0 0.0
      %1248 = vmatprep.subr.mxu0 0.0
      %1249 = vmatpush1.msra.mxu0 0.0
      %1250 = vmatprep.subr.mxu0 0.0
      %1251 = vmatpush1.msra.mxu0 0.0
      %1252 = vmatprep.subr.mxu0 0.0
      %1253 = vmatpush1.msra.mxu0 0.0
      %1254 = vmatprep.subr.mxu0 0.0
      %1255 = vmatpush1.msra.mxu0 0.0
      %1256 = vmatprep.subr.mxu0 0.0
      %1257 = vmatpush1.msra.mxu0 0.0
      %1258 = vmatprep.subr.mxu0 0.0
      %1259 = vmatpush1.msra.mxu0 0.0
      %1260 = vmatprep.subr.mxu0 0.0
      %1261 = vmatpush1.msra.mxu0 0.0
      %1262 = vmatprep.subr.mxu0 0.0
      %1263 = vmatpush1.msra.mxu0 0.0
      %1264 = vmatprep.subr.mxu0 0.0
      %1265 = vmatpush1.msra.mxu0 0.0
      %1266 = vmatprep.mubr.f32.mxu0 0.0
      %1267 = vmatmul.mubr.f32.gmra.mrb[0].mxu0 %v737
      %v1268 = vpop.f32.mrb[0].mxu0
      %v1269 = vadd.f32 0.0, %v1268
      %v1270 = vpop.f32.mrb[0].mxu0
      %1271 = vdwg.mxu0
      %s1272 = scalar_lea.vmem %s658, 32
      %v1273 = vld [vmem:[%s1272] sm:$0xff]
      %v1274 = vld [vmem:[%s1272 + $0x8] sm:$0xff]
      %v1275 = vld [vmem:[%s1272 + $0x10] sm:$0xff]
      %v1276 = vld [vmem:[%s1272 + $0x18] sm:$0xff]
      %1277 = vmatprep.subr.mxu0 0.0
      %1278 = vmatpush1.msra.mxu0 %v1273
      %1279 = vmatprep.subr.mxu0 0.0
      %1280 = vmatpush1.msra.mxu0 %v1274
      %1281 = vmatprep.subr.mxu0 0.0
      %1282 = vmatpush1.msra.mxu0 %v1275
      %1283 = vmatprep.subr.mxu0 0.0
      %1284 = vmatpush1.msra.mxu0 %v1276
      %1285 = vmatprep.subr.mxu0 0.0
      %1286 = vmatpush1.msra.mxu0 0.0
      %1287 = vmatprep.subr.mxu0 0.0
      %1288 = vmatpush1.msra.mxu0 0.0
      %1289 = vmatprep.subr.mxu0 0.0
      %1290 = vmatpush1.msra.mxu0 0.0
      %1291 = vmatprep.subr.mxu0 0.0
      %1292 = vmatpush1.msra.mxu0 0.0
      %1293 = vmatprep.subr.mxu0 0.0
      %1294 = vmatpush1.msra.mxu0 0.0
      %1295 = vmatprep.subr.mxu0 0.0
      %1296 = vmatpush1.msra.mxu0 0.0
      %1297 = vmatprep.subr.mxu0 0.0
      %1298 = vmatpush1.msra.mxu0 0.0
      %1299 = vmatprep.subr.mxu0 0.0
      %1300 = vmatpush1.msra.mxu0 0.0
      %1301 = vmatprep.subr.mxu0 0.0
      %1302 = vmatpush1.msra.mxu0 0.0
      %1303 = vmatprep.subr.mxu0 0.0
      %1304 = vmatpush1.msra.mxu0 0.0
      %1305 = vmatprep.subr.mxu0 0.0
      %1306 = vmatpush1.msra.mxu0 0.0
      %1307 = vmatprep.subr.mxu0 0.0
      %1308 = vmatpush1.msra.mxu0 0.0
      %1309 = vmatprep.subr.mxu0 0.0
      %1310 = vmatpush1.msra.mxu0 0.0
      %1311 = vmatprep.subr.mxu0 0.0
      %1312 = vmatpush1.msra.mxu0 0.0
      %1313 = vmatprep.subr.mxu0 0.0
      %1314 = vmatpush1.msra.mxu0 0.0
      %1315 = vmatprep.subr.mxu0 0.0
      %1316 = vmatpush1.msra.mxu0 0.0
      %1317 = vmatprep.subr.mxu0 0.0
      %1318 = vmatpush1.msra.mxu0 0.0
      %1319 = vmatprep.subr.mxu0 0.0
      %1320 = vmatpush1.msra.mxu0 0.0
      %1321 = vmatprep.subr.mxu0 0.0
      %1322 = vmatpush1.msra.mxu0 0.0
      %1323 = vmatprep.subr.mxu0 0.0
      %1324 = vmatpush1.msra.mxu0 0.0
      %1325 = vmatprep.subr.mxu0 0.0
      %1326 = vmatpush1.msra.mxu0 0.0
      %1327 = vmatprep.subr.mxu0 0.0
      %1328 = vmatpush1.msra.mxu0 0.0
      %1329 = vmatprep.subr.mxu0 0.0
      %1330 = vmatpush1.msra.mxu0 0.0
      %1331 = vmatprep.subr.mxu0 0.0
      %1332 = vmatpush1.msra.mxu0 0.0
      %1333 = vmatprep.subr.mxu0 0.0
      %1334 = vmatpush1.msra.mxu0 0.0
      %1335 = vmatprep.subr.mxu0 0.0
      %1336 = vmatpush1.msra.mxu0 0.0
      %1337 = vmatprep.subr.mxu0 0.0
      %1338 = vmatpush1.msra.mxu0 0.0
      %1339 = vmatprep.subr.mxu0 0.0
      %1340 = vmatpush1.msra.mxu0 0.0
      %1341 = vmatprep.mubr.f32.mxu0 0.0
      %1342 = vmatmul.mubr.f32.gmra.mrb[0].mxu0 %v737
      %v1343 = vpop.f32.mrb[0].mxu0
      %v1344 = vadd.f32 0.0, %v1343
      %v1345 = vpop.f32.mrb[0].mxu0
      %1346 = vdwg.mxu0
      %v1348 = vsel %vm957, %v1194, 0
      %v1351 = vsel %vm957, %v1269, 0
      %1353 = vmatprep.subr.mxu0 0.0
      %1354 = vmatpush1.xpose.msra.mxu0 %v1351
      %1355 = vmatprep.subr.mxu0 0.0
      %1356 = vmatpush1.xpose.msra.mxu0 0.0
      %1357 = vmatprep.subr.mxu0 0.0
      %1358 = vmatpush1.xpose.msra.mxu0 0.0
      %1359 = vmatprep.subr.mxu0 0.0
      %1360 = vmatpush1.xpose.msra.mxu0 0.0
      %1361 = vmatprep.subr.mxu0 0.0
      %1362 = vmatpush1.xpose.msra.mxu0 0.0
      %1363 = vmatprep.subr.mxu0 0.0
      %1364 = vmatpush1.xpose.msra.mxu0 0.0
      %1365 = vmatprep.subr.mxu0 0.0
      %1366 = vmatpush1.xpose.msra.mxu0 0.0
      %1367 = vmatprep.subr.mxu0 0.0
      %1368 = vmatpush1.xpose.msra.mxu0 0.0
      %1369 = vmatprep.subr.mxu0 0.0
      %1370 = vmatpush1.xpose.msra.mxu0 0.0
      %1371 = vmatprep.subr.mxu0 0.0
      %1372 = vmatpush1.xpose.msra.mxu0 0.0
      %1373 = vmatprep.subr.mxu0 0.0
      %1374 = vmatpush1.xpose.msra.mxu0 0.0
      %1375 = vmatprep.subr.mxu0 0.0
      %1376 = vmatpush1.xpose.msra.mxu0 0.0
      %1377 = vmatprep.subr.mxu0 0.0
      %1378 = vmatpush1.xpose.msra.mxu0 0.0
      %1379 = vmatprep.subr.mxu0 0.0
      %1380 = vmatpush1.xpose.msra.mxu0 0.0
      %1381 = vmatprep.subr.mxu0 0.0
      %1382 = vmatpush1.xpose.msra.mxu0 0.0
      %1383 = vmatprep.subr.mxu0 0.0
      %1384 = vmatpush1.xpose.msra.mxu0 0.0
      %1385 = vmatprep.subr.mxu0 0.0
      %1386 = vmatpush1.xpose.msra.mxu0 0.0
      %1387 = vmatprep.subr.mxu0 0.0
      %1388 = vmatpush1.xpose.msra.mxu0 0.0
      %1389 = vmatprep.subr.mxu0 0.0
      %1390 = vmatpush1.xpose.msra.mxu0 0.0
      %1391 = vmatprep.subr.mxu0 0.0
      %1392 = vmatpush1.xpose.msra.mxu0 0.0
      %1393 = vmatprep.subr.mxu0 0.0
      %1394 = vmatpush1.xpose.msra.mxu0 0.0
      %1395 = vmatprep.subr.mxu0 0.0
      %1396 = vmatpush1.xpose.msra.mxu0 0.0
      %1397 = vmatprep.subr.mxu0 0.0
      %1398 = vmatpush1.xpose.msra.mxu0 0.0
      %1399 = vmatprep.subr.mxu0 0.0
      %1400 = vmatpush1.xpose.msra.mxu0 0.0
      %1401 = vmatprep.subr.mxu0 0.0
      %1402 = vmatpush1.xpose.msra.mxu0 0.0
      %1403 = vmatprep.subr.mxu0 0.0
      %1404 = vmatpush1.xpose.msra.mxu0 0.0
      %1405 = vmatprep.subr.mxu0 0.0
      %1406 = vmatpush1.xpose.msra.mxu0 0.0
      %1407 = vmatprep.subr.mxu0 0.0
      %1408 = vmatpush1.xpose.msra.mxu0 0.0
      %1409 = vmatprep.subr.mxu0 0.0
      %1410 = vmatpush1.xpose.msra.mxu0 0.0
      %1411 = vmatprep.subr.mxu0 0.0
      %1412 = vmatpush1.xpose.msra.mxu0 0.0
      %1413 = vmatprep.subr.mxu0 0.0
      %1414 = vmatpush1.xpose.msra.mxu0 0.0
      %1415 = vmatprep.subr.mxu0 0.0
      %1416 = vmatpush1.xpose.msra.mxu0 0.0
      %1417 = vmatprep.mubr.f32.mxu0 0.0
      %1418 = vmatmul.mubr.f32.gmra.mrb[0].mxu0 %v1348
      %v1419 = vpop.f32.mrb[0].mxu0
      %v1420 = vadd.f32 0.0, %v1419
      %v1421 = vpop.f32.mrb[0].mxu0
      %1422 = vdwg.mxu0
      %v1423 = vsel %vm957, %v1420, -inf
      %1424 = vmax.xlane.f32.xlu0 %v1423
      %v1425 = vpop.xlane.xlu0 %1424
      %v1426 = vsub.f32 %v1420, %v1425
      %v1427 = vmul.f32 %v1426, 1.442695
      %v1428 = vpow.pop %v1427
      %v1429 = vsel %vm957, %v1428, 0.0
      %1430 = vadd.xlane.f32.xlu0 %v1429
      %v1431 = vpop.xlane.xlu0 %1430
      %v1432 = vrcp.pop %v1431
      %v1433 = vmul.f32 %v1431, %v1432
      %v1434 = vsub.f32 2.0, %v1433
      %v1435 = vmul.f32 %v1432, %v1434
      %v1436 = vmul.f32 %v1428, %v1435
      %v1438 = vsel %vm957, %v1436, 0
      %1440 = vmatprep.subr.mxu0 0.0
      %1441 = vmatpush1.msra.mxu0 %v1344
      %1442 = vmatprep.subr.mxu0 0.0
      %1443 = vmatpush1.msra.mxu0 0.0
      %1444 = vmatprep.subr.mxu0 0.0
      %1445 = vmatpush1.msra.mxu0 0.0
      %1446 = vmatprep.subr.mxu0 0.0
      %1447 = vmatpush1.msra.mxu0 0.0
      %1448 = vmatprep.subr.mxu0 0.0
      %1449 = vmatpush1.msra.mxu0 0.0
      %1450 = vmatprep.subr.mxu0 0.0
      %1451 = vmatpush1.msra.mxu0 0.0
      %1452 = vmatprep.subr.mxu0 0.0
      %1453 = vmatpush1.msra.mxu0 0.0
      %1454 = vmatprep.subr.mxu0 0.0
      %1455 = vmatpush1.msra.mxu0 0.0
      %1456 = vmatprep.subr.mxu0 0.0
      %1457 = vmatpush1.msra.mxu0 0.0
      %1458 = vmatprep.subr.mxu0 0.0
      %1459 = vmatpush1.msra.mxu0 0.0
      %1460 = vmatprep.subr.mxu0 0.0
      %1461 = vmatpush1.msra.mxu0 0.0
      %1462 = vmatprep.subr.mxu0 0.0
      %1463 = vmatpush1.msra.mxu0 0.0
      %1464 = vmatprep.subr.mxu0 0.0
      %1465 = vmatpush1.msra.mxu0 0.0
      %1466 = vmatprep.subr.mxu0 0.0
      %1467 = vmatpush1.msra.mxu0 0.0
      %1468 = vmatprep.subr.mxu0 0.0
      %1469 = vmatpush1.msra.mxu0 0.0
      %1470 = vmatprep.subr.mxu0 0.0
      %1471 = vmatpush1.msra.mxu0 0.0
      %1472 = vmatprep.subr.mxu0 0.0
      %1473 = vmatpush1.msra.mxu0 0.0
      %1474 = vmatprep.subr.mxu0 0.0
      %1475 = vmatpush1.msra.mxu0 0.0
      %1476 = vmatprep.subr.mxu0 0.0
      %1477 = vmatpush1.msra.mxu0 0.0
      %1478 = vmatprep.subr.mxu0 0.0
      %1479 = vmatpush1.msra.mxu0 0.0
      %1480 = vmatprep.subr.mxu0 0.0
      %1481 = vmatpush1.msra.mxu0 0.0
      %1482 = vmatprep.subr.mxu0 0.0
      %1483 = vmatpush1.msra.mxu0 0.0
      %1484 = vmatprep.subr.mxu0 0.0
      %1485 = vmatpush1.msra.mxu0 0.0
      %1486 = vmatprep.subr.mxu0 0.0
      %1487 = vmatpush1.msra.mxu0 0.0
      %1488 = vmatprep.subr.mxu0 0.0
      %1489 = vmatpush1.msra.mxu0 0.0
      %1490 = vmatprep.subr.mxu0 0.0
      %1491 = vmatpush1.msra.mxu0 0.0
      %1492 = vmatprep.subr.mxu0 0.0
      %1493 = vmatpush1.msra.mxu0 0.0
      %1494 = vmatprep.subr.mxu0 0.0
      %1495 = vmatpush1.msra.mxu0 0.0
      %1496 = vmatprep.subr.mxu0 0.0
      %1497 = vmatpush1.msra.mxu0 0.0
      %1498 = vmatprep.subr.mxu0 0.0
      %1499 = vmatpush1.msra.mxu0 0.0
      %1500 = vmatprep.subr.mxu0 0.0
      %1501 = vmatpush1.msra.mxu0 0.0
      %1502 = vmatprep.subr.mxu0 0.0
      %1503 = vmatpush1.msra.mxu0 0.0
      %1504 = vmatprep.mubr.f32.mxu0 0.0
      %1505 = vmatmul.mubr.f32.gmra.mrb[0].mxu0 %v1438
      %v1506 = vpop.f32.mrb[0].mxu0
      %v1507 = vadd.f32 0.0, %v1506
      %v1508 = vpop.f32.mrb[0].mxu0
      %1509 = vdwg.mxu0
      %s1510 = scalar_lea.vmem %s663, 8
      %v1511 = vld [vmem:[%s1510] sm:$0xff]
      %v1513 = vsel %vm957, %v1507, 0
      %1515 = vmatprep.subr.mxu0 0.0
      %1516 = vmatpush1.msra.mxu0 %v1511
      %1517 = vmatprep.subr.mxu0 0.0
      %1518 = vmatpush1.msra.mxu0 0.0
      %1519 = vmatprep.subr.mxu0 0.0
      %1520 = vmatpush1.msra.mxu0 0.0
      %1521 = vmatprep.subr.mxu0 0.0
      %1522 = vmatpush1.msra.mxu0 0.0
      %1523 = vmatprep.subr.mxu0 0.0
      %1524 = vmatpush1.msra.mxu0 0.0
      %1525 = vmatprep.subr.mxu0 0.0
      %1526 = vmatpush1.msra.mxu0 0.0
      %1527 = vmatprep.subr.mxu0 0.0
      %1528 = vmatpush1.msra.mxu0 0.0
      %1529 = vmatprep.subr.mxu0 0.0
      %1530 = vmatpush1.msra.mxu0 0.0
      %1531 = vmatprep.subr.mxu0 0.0
      %1532 = vmatpush1.msra.mxu0 0.0
      %1533 = vmatprep.subr.mxu0 0.0
      %1534 = vmatpush1.msra.mxu0 0.0
      %1535 = vmatprep.subr.mxu0 0.0
      %1536 = vmatpush1.msra.mxu0 0.0
      %1537 = vmatprep.subr.mxu0 0.0
      %1538 = vmatpush1.msra.mxu0 0.0
      %1539 = vmatprep.subr.mxu0 0.0
      %1540 = vmatpush1.msra.mxu0 0.0
      %1541 = vmatprep.subr.mxu0 0.0
      %1542 = vmatpush1.msra.mxu0 0.0
      %1543 = vmatprep.subr.mxu0 0.0
      %1544 = vmatpush1.msra.mxu0 0.0
      %1545 = vmatprep.subr.mxu0 0.0
      %1546 = vmatpush1.msra.mxu0 0.0
      %1547 = vmatprep.subr.mxu0 0.0
      %1548 = vmatpush1.msra.mxu0 0.0
      %1549 = vmatprep.subr.mxu0 0.0
      %1550 = vmatpush1.msra.mxu0 0.0
      %1551 = vmatprep.subr.mxu0 0.0
      %1552 = vmatpush1.msra.mxu0 0.0
      %1553 = vmatprep.subr.mxu0 0.0
      %1554 = vmatpush1.msra.mxu0 0.0
      %1555 = vmatprep.subr.mxu0 0.0
      %1556 = vmatpush1.msra.mxu0 0.0
      %1557 = vmatprep.subr.mxu0 0.0
      %1558 = vmatpush1.msra.mxu0 0.0
      %1559 = vmatprep.subr.mxu0 0.0
      %1560 = vmatpush1.msra.mxu0 0.0
      %1561 = vmatprep.subr.mxu0 0.0
      %1562 = vmatpush1.msra.mxu0 0.0
      %1563 = vmatprep.subr.mxu0 0.0
      %1564 = vmatpush1.msra.mxu0 0.0
      %1565 = vmatprep.subr.mxu0 0.0
      %1566 = vmatpush1.msra.mxu0 0.0
      %1567 = vmatprep.subr.mxu0 0.0
      %1568 = vmatpush1.msra.mxu0 0.0
      %1569 = vmatprep.subr.mxu0 0.0
      %1570 = vmatpush1.msra.mxu0 0.0
      %1571 = vmatprep.subr.mxu0 0.0
      %1572 = vmatpush1.msra.mxu0 0.0
      %1573 = vmatprep.subr.mxu0 0.0
      %1574 = vmatpush1.msra.mxu0 0.0
      %1575 = vmatprep.subr.mxu0 0.0
      %1576 = vmatpush1.msra.mxu0 0.0
      %1577 = vmatprep.subr.mxu0 0.0
      %1578 = vmatpush1.msra.mxu0 0.0
      %1579 = vmatprep.mubr.f32.mxu0 0.0
      %1580 = vmatmul.mubr.f32.gmra.mrb[0].mxu0 %v1513
      %v1581 = vpop.f32.mrb[0].mxu0
      %v1582 = vadd.f32 0.0, %v1581
      %v1583 = vpop.f32.mrb[0].mxu0
      %1584 = vdwg.mxu0
      %v1586 = vsel %vm957, %v1118, 0
      %1588 = vmatprep.subr.mxu0 0.0
      %1589 = vmatpush1.msra.mxu0 %v1121
      %1590 = vmatprep.subr.mxu0 0.0
      %1591 = vmatpush1.msra.mxu0 0.0
      %1592 = vmatprep.subr.mxu0 0.0
      %1593 = vmatpush1.msra.mxu0 0.0
      %1594 = vmatprep.subr.mxu0 0.0
      %1595 = vmatpush1.msra.mxu0 0.0
      %1596 = vmatprep.subr.mxu0 0.0
      %1597 = vmatpush1.msra.mxu0 0.0
      %1598 = vmatprep.subr.mxu0 0.0
      %1599 = vmatpush1.msra.mxu0 0.0
      %1600 = vmatprep.subr.mxu0 0.0
      %1601 = vmatpush1.msra.mxu0 0.0
      %1602 = vmatprep.subr.mxu0 0.0
      %1603 = vmatpush1.msra.mxu0 0.0
      %1604 = vmatprep.subr.mxu0 0.0
      %1605 = vmatpush1.msra.mxu0 0.0
      %1606 = vmatprep.subr.mxu0 0.0
      %1607 = vmatpush1.msra.mxu0 0.0
      %1608 = vmatprep.subr.mxu0 0.0
      %1609 = vmatpush1.msra.mxu0 0.0
      %1610 = vmatprep.subr.mxu0 0.0
      %1611 = vmatpush1.msra.mxu0 0.0
      %1612 = vmatprep.subr.mxu0 0.0
      %1613 = vmatpush1.msra.mxu0 0.0
      %1614 = vmatprep.subr.mxu0 0.0
      %1615 = vmatpush1.msra.mxu0 0.0
      %1616 = vmatprep.subr.mxu0 0.0
      %1617 = vmatpush1.msra.mxu0 0.0
      %1618 = vmatprep.subr.mxu0 0.0
      %1619 = vmatpush1.msra.mxu0 0.0
      %1620 = vmatprep.subr.mxu0 0.0
      %1621 = vmatpush1.msra.mxu0 0.0
      %1622 = vmatprep.subr.mxu0 0.0
      %1623 = vmatpush1.msra.mxu0 0.0
      %1624 = vmatprep.subr.mxu0 0.0
      %1625 = vmatpush1.msra.mxu0 0.0
      %1626 = vmatprep.subr.mxu0 0.0
      %1627 = vmatpush1.msra.mxu0 0.0
      %1628 = vmatprep.subr.mxu0 0.0
      %1629 = vmatpush1.msra.mxu0 0.0
      %1630 = vmatprep.subr.mxu0 0.0
      %1631 = vmatpush1.msra.mxu0 0.0
      %1632 = vmatprep.subr.mxu0 0.0
      %1633 = vmatpush1.msra.mxu0 0.0
      %1634 = vmatprep.subr.mxu0 0.0
      %1635 = vmatpush1.msra.mxu0 0.0
      %1636 = vmatprep.subr.mxu0 0.0
      %1637 = vmatpush1.msra.mxu0 0.0
      %1638 = vmatprep.subr.mxu0 0.0
      %1639 = vmatpush1.msra.mxu0 0.0
      %1640 = vmatprep.subr.mxu0 0.0
      %1641 = vmatpush1.msra.mxu0 0.0
      %1642 = vmatprep.subr.mxu0 0.0
      %1643 = vmatpush1.msra.mxu0 0.0
      %1644 = vmatprep.subr.mxu0 0.0
      %1645 = vmatpush1.msra.mxu0 0.0
      %1646 = vmatprep.subr.mxu0 0.0
      %1647 = vmatpush1.msra.mxu0 0.0
      %1648 = vmatprep.subr.mxu0 0.0
      %1649 = vmatpush1.msra.mxu0 0.0
      %1650 = vmatprep.subr.mxu0 0.0
      %1651 = vmatpush1.msra.mxu0 0.0
      %1652 = vmatprep.mubr.f32.mxu0 0.0
      %1653 = vmatmul.mubr.f32.gmra.mrb[0].mxu0 %v1586
      %v1654 = vpop.f32.mrb[0].mxu0
      %v1655 = vadd.f32 %v1582, %v1654
      %v1656 = vpop.f32.mrb[0].mxu0
      %1657 = vdwg.mxu0
      %s1658 = scalar_lea.vmem %s648, 64
      %v1659 = vld [vmem:[%s1658] sm:$0xff]
      %v1660 = vld [vmem:[%s1658 + $0x8] sm:$0xff]
      %v1661 = vld [vmem:[%s1658 + $0x10] sm:$0xff]
      %v1662 = vld [vmem:[%s1658 + $0x18] sm:$0xff]
      %1663 = vmatprep.subr.mxu0 0.0
      %1664 = vmatpush1.msra.mxu0 %v1659
      %1665 = vmatprep.subr.mxu0 0.0
      %1666 = vmatpush1.msra.mxu0 %v1660
      %1667 = vmatprep.subr.mxu0 0.0
      %1668 = vmatpush1.msra.mxu0 %v1661
      %1669 = vmatprep.subr.mxu0 0.0
      %1670 = vmatpush1.msra.mxu0 %v1662
      %1671 = vmatprep.subr.mxu0 0.0
      %1672 = vmatpush1.msra.mxu0 0.0
      %1673 = vmatprep.subr.mxu0 0.0
      %1674 = vmatpush1.msra.mxu0 0.0
      %1675 = vmatprep.subr.mxu0 0.0
      %1676 = vmatpush1.msra.mxu0 0.0
      %1677 = vmatprep.subr.mxu0 0.0
      %1678 = vmatpush1.msra.mxu0 0.0
      %1679 = vmatprep.subr.mxu0 0.0
      %1680 = vmatpush1.msra.mxu0 0.0
      %1681 = vmatprep.subr.mxu0 0.0
      %1682 = vmatpush1.msra.mxu0 0.0
      %1683 = vmatprep.subr.mxu0 0.0
      %1684 = vmatpush1.msra.mxu0 0.0
      %1685 = vmatprep.subr.mxu0 0.0
      %1686 = vmatpush1.msra.mxu0 0.0
      %1687 = vmatprep.subr.mxu0 0.0
      %1688 = vmatpush1.msra.mxu0 0.0
      %1689 = vmatprep.subr.mxu0 0.0
      %1690 = vmatpush1.msra.mxu0 0.0
      %1691 = vmatprep.subr.mxu0 0.0
      %1692 = vmatpush1.msra.mxu0 0.0
      %1693 = vmatprep.subr.mxu0 0.0
      %1694 = vmatpush1.msra.mxu0 0.0
      %1695 = vmatprep.subr.mxu0 0.0
      %1696 = vmatpush1.msra.mxu0 0.0
      %1697 = vmatprep.subr.mxu0 0.0
      %1698 = vmatpush1.msra.mxu0 0.0
      %1699 = vmatprep.subr.mxu0 0.0
      %1700 = vmatpush1.msra.mxu0 0.0
      %1701 = vmatprep.subr.mxu0 0.0
      %1702 = vmatpush1.msra.mxu0 0.0
      %1703 = vmatprep.subr.mxu0 0.0
      %1704 = vmatpush1.msra.mxu0 0.0
      %1705 = vmatprep.subr.mxu0 0.0
      %1706 = vmatpush1.msra.mxu0 0.0
      %1707 = vmatprep.subr.mxu0 0.0
      %1708 = vmatpush1.msra.mxu0 0.0
      %1709 = vmatprep.subr.mxu0 0.0
      %1710 = vmatpush1.msra.mxu0 0.0
      %1711 = vmatprep.subr.mxu0 0.0
      %1712 = vmatpush1.msra.mxu0 0.0
      %1713 = vmatprep.subr.mxu0 0.0
      %1714 = vmatpush1.msra.mxu0 0.0
      %1715 = vmatprep.subr.mxu0 0.0
      %1716 = vmatpush1.msra.mxu0 0.0
      %1717 = vmatprep.subr.mxu0 0.0
      %1718 = vmatpush1.msra.mxu0 0.0
      %1719 = vmatprep.subr.mxu0 0.0
      %1720 = vmatpush1.msra.mxu0 0.0
      %1721 = vmatprep.subr.mxu0 0.0
      %1722 = vmatpush1.msra.mxu0 0.0
      %1723 = vmatprep.subr.mxu0 0.0
      %1724 = vmatpush1.msra.mxu0 0.0
      %1725 = vmatprep.subr.mxu0 0.0
      %1726 = vmatpush1.msra.mxu0 0.0
      %1727 = vmatprep.mubr.f32.mxu0 0.0
      %1728 = vmatmul.mubr.f32.gmra.mrb[0].mxu0 %v737
      %v1729 = vpop.f32.mrb[0].mxu0
      %v1730 = vadd.f32 0.0, %v1729
      %v1731 = vpop.f32.mrb[0].mxu0
      %1732 = vdwg.mxu0
      %s1733 = scalar_lea.vmem %s653, 64
      %v1734 = vld [vmem:[%s1733] sm:$0xff]
      %v1735 = vld [vmem:[%s1733 + $0x8] sm:$0xff]
      %v1736 = vld [vmem:[%s1733 + $0x10] sm:$0xff]
      %v1737 = vld [vmem:[%s1733 + $0x18] sm:$0xff]
      %1738 = vmatprep.subr.mxu0 0.0
      %1739 = vmatpush1.msra.mxu0 %v1734
      %1740 = vmatprep.subr.mxu0 0.0
      %1741 = vmatpush1.msra.mxu0 %v1735
      %1742 = vmatprep.subr.mxu0 0.0
      %1743 = vmatpush1.msra.mxu0 %v1736
      %1744 = vmatprep.subr.mxu0 0.0
      %1745 = vmatpush1.msra.mxu0 %v1737
      %1746 = vmatprep.subr.mxu0 0.0
      %1747 = vmatpush1.msra.mxu0 0.0
      %1748 = vmatprep.subr.mxu0 0.0
      %1749 = vmatpush1.msra.mxu0 0.0
      %1750 = vmatprep.subr.mxu0 0.0
      %1751 = vmatpush1.msra.mxu0 0.0
      %1752 = vmatprep.subr.mxu0 0.0
      %1753 = vmatpush1.msra.mxu0 0.0
      %1754 = vmatprep.subr.mxu0 0.0
      %1755 = vmatpush1.msra.mxu0 0.0
      %1756 = vmatprep.subr.mxu0 0.0
      %1757 = vmatpush1.msra.mxu0 0.0
      %1758 = vmatprep.subr.mxu0 0.0
      %1759 = vmatpush1.msra.mxu0 0.0
      %1760 = vmatprep.subr.mxu0 0.0
      %1761 = vmatpush1.msra.mxu0 0.0
      %1762 = vmatprep.subr.mxu0 0.0
      %1763 = vmatpush1.msra.mxu0 0.0
      %1764 = vmatprep.subr.mxu0 0.0
      %1765 = vmatpush1.msra.mxu0 0.0
      %1766 = vmatprep.subr.mxu0 0.0
      %1767 = vmatpush1.msra.mxu0 0.0
      %1768 = vmatprep.subr.mxu0 0.0
      %1769 = vmatpush1.msra.mxu0 0.0
      %1770 = vmatprep.subr.mxu0 0.0
      %1771 = vmatpush1.msra.mxu0 0.0
      %1772 = vmatprep.subr.mxu0 0.0
      %1773 = vmatpush1.msra.mxu0 0.0
      %1774 = vmatprep.subr.mxu0 0.0
      %1775 = vmatpush1.msra.mxu0 0.0
      %1776 = vmatprep.subr.mxu0 0.0
      %1777 = vmatpush1.msra.mxu0 0.0
      %1778 = vmatprep.subr.mxu0 0.0
      %1779 = vmatpush1.msra.mxu0 0.0
      %1780 = vmatprep.subr.mxu0 0.0
      %1781 = vmatpush1.msra.mxu0 0.0
      %1782 = vmatprep.subr.mxu0 0.0
      %1783 = vmatpush1.msra.mxu0 0.0
      %1784 = vmatprep.subr.mxu0 0.0
      %1785 = vmatpush1.msra.mxu0 0.0
      %1786 = vmatprep.subr.mxu0 0.0
      %1787 = vmatpush1.msra.mxu0 0.0
      %1788 = vmatprep.subr.mxu0 0.0
      %1789 = vmatpush1.msra.mxu0 0.0
      %1790 = vmatprep.subr.mxu0 0.0
      %1791 = vmatpush1.msra.mxu0 0.0
      %1792 = vmatprep.subr.mxu0 0.0
      %1793 = vmatpush1.msra.mxu0 0.0
      %1794 = vmatprep.subr.mxu0 0.0
      %1795 = vmatpush1.msra.mxu0 0.0
      %1796 = vmatprep.subr.mxu0 0.0
      %1797 = vmatpush1.msra.mxu0 0.0
      %1798 = vmatprep.subr.mxu0 0.0
      %1799 = vmatpush1.msra.mxu0 0.0
      %1800 = vmatprep.subr.mxu0 0.0
      %1801 = vmatpush1.msra.mxu0 0.0
      %1802 = vmatprep.mubr.f32.mxu0 0.0
      %1803 = vmatmul.mubr.f32.gmra.mrb[0].mxu0 %v737
      %v1804 = vpop.f32.mrb[0].mxu0
      %v1805 = vadd.f32 0.0, %v1804
      %v1806 = vpop.f32.mrb[0].mxu0
      %1807 = vdwg.mxu0
      %s1808 = scalar_lea.vmem %s658, 64
      %v1809 = vld [vmem:[%s1808] sm:$0xff]
      %v1810 = vld [vmem:[%s1808 + $0x8] sm:$0xff]
      %v1811 = vld [vmem:[%s1808 + $0x10] sm:$0xff]
      %v1812 = vld [vmem:[%s1808 + $0x18] sm:$0xff]
      %1813 = vmatprep.subr.mxu0 0.0
      %1814 = vmatpush1.msra.mxu0 %v1809
      %1815 = vmatprep.subr.mxu0 0.0
      %1816 = vmatpush1.msra.mxu0 %v1810
      %1817 = vmatprep.subr.mxu0 0.0
      %1818 = vmatpush1.msra.mxu0 %v1811
      %1819 = vmatprep.subr.mxu0 0.0
      %1820 = vmatpush1.msra.mxu0 %v1812
      %1821 = vmatprep.subr.mxu0 0.0
      %1822 = vmatpush1.msra.mxu0 0.0
      %1823 = vmatprep.subr.mxu0 0.0
      %1824 = vmatpush1.msra.mxu0 0.0
      %1825 = vmatprep.subr.mxu0 0.0
      %1826 = vmatpush1.msra.mxu0 0.0
      %1827 = vmatprep.subr.mxu0 0.0
      %1828 = vmatpush1.msra.mxu0 0.0
      %1829 = vmatprep.subr.mxu0 0.0
      %1830 = vmatpush1.msra.mxu0 0.0
      %1831 = vmatprep.subr.mxu0 0.0
      %1832 = vmatpush1.msra.mxu0 0.0
      %1833 = vmatprep.subr.mxu0 0.0
      %1834 = vmatpush1.msra.mxu0 0.0
      %1835 = vmatprep.subr.mxu0 0.0
      %1836 = vmatpush1.msra.mxu0 0.0
      %1837 = vmatprep.subr.mxu0 0.0
      %1838 = vmatpush1.msra.mxu0 0.0
      %1839 = vmatprep.subr.mxu0 0.0
      %1840 = vmatpush1.msra.mxu0 0.0
      %1841 = vmatprep.subr.mxu0 0.0
      %1842 = vmatpush1.msra.mxu0 0.0
      %1843 = vmatprep.subr.mxu0 0.0
      %1844 = vmatpush1.msra.mxu0 0.0
      %1845 = vmatprep.subr.mxu0 0.0
      %1846 = vmatpush1.msra.mxu0 0.0
      %1847 = vmatprep.subr.mxu0 0.0
      %1848 = vmatpush1.msra.mxu0 0.0
      %1849 = vmatprep.subr.mxu0 0.0
      %1850 = vmatpush1.msra.mxu0 0.0
      %1851 = vmatprep.subr.mxu0 0.0
      %1852 = vmatpush1.msra.mxu0 0.0
      %1853 = vmatprep.subr.mxu0 0.0
      %1854 = vmatpush1.msra.mxu0 0.0
      %1855 = vmatprep.subr.mxu0 0.0
      %1856 = vmatpush1.msra.mxu0 0.0
      %1857 = vmatprep.subr.mxu0 0.0
      %1858 = vmatpush1.msra.mxu0 0.0
      %1859 = vmatprep.subr.mxu0 0.0
      %1860 = vmatpush1.msra.mxu0 0.0
      %1861 = vmatprep.subr.mxu0 0.0
      %1862 = vmatpush1.msra.mxu0 0.0
      %1863 = vmatprep.subr.mxu0 0.0
      %1864 = vmatpush1.msra.mxu0 0.0
      %1865 = vmatprep.subr.mxu0 0.0
      %1866 = vmatpush1.msra.mxu0 0.0
      %1867 = vmatprep.subr.mxu0 0.0
      %1868 = vmatpush1.msra.mxu0 0.0
      %1869 = vmatprep.subr.mxu0 0.0
      %1870 = vmatpush1.msra.mxu0 0.0
      %1871 = vmatprep.subr.mxu0 0.0
      %1872 = vmatpush1.msra.mxu0 0.0
      %1873 = vmatprep.subr.mxu0 0.0
      %1874 = vmatpush1.msra.mxu0 0.0
      %1875 = vmatprep.subr.mxu0 0.0
      %1876 = vmatpush1.msra.mxu0 0.0
      %1877 = vmatprep.mubr.f32.mxu0 0.0
      %1878 = vmatmul.mubr.f32.gmra.mrb[0].mxu0 %v737
      %v1879 = vpop.f32.mrb[0].mxu0
      %v1880 = vadd.f32 0.0, %v1879
      %v1881 = vpop.f32.mrb[0].mxu0
      %1882 = vdwg.mxu0
      %v1884 = vsel %vm957, %v1730, 0
      %v1887 = vsel %vm957, %v1805, 0
      %1889 = vmatprep.subr.mxu0 0.0
      %1890 = vmatpush1.xpose.msra.mxu0 %v1887
      %1891 = vmatprep.subr.mxu0 0.0
      %1892 = vmatpush1.xpose.msra.mxu0 0.0
      %1893 = vmatprep.subr.mxu0 0.0
      %1894 = vmatpush1.xpose.msra.mxu0 0.0
      %1895 = vmatprep.subr.mxu0 0.0
      %1896 = vmatpush1.xpose.msra.mxu0 0.0
      %1897 = vmatprep.subr.mxu0 0.0
      %1898 = vmatpush1.xpose.msra.mxu0 0.0
      %1899 = vmatprep.subr.mxu0 0.0
      %1900 = vmatpush1.xpose.msra.mxu0 0.0
      %1901 = vmatprep.subr.mxu0 0.0
      %1902 = vmatpush1.xpose.msra.mxu0 0.0
      %1903 = vmatprep.subr.mxu0 0.0
      %1904 = vmatpush1.xpose.msra.mxu0 0.0
      %1905 = vmatprep.subr.mxu0 0.0
      %1906 = vmatpush1.xpose.msra.mxu0 0.0
      %1907 = vmatprep.subr.mxu0 0.0
      %1908 = vmatpush1.xpose.msra.mxu0 0.0
      %1909 = vmatprep.subr.mxu0 0.0
      %1910 = vmatpush1.xpose.msra.mxu0 0.0
      %1911 = vmatprep.subr.mxu0 0.0
      %1912 = vmatpush1.xpose.msra.mxu0 0.0
      %1913 = vmatprep.subr.mxu0 0.0
      %1914 = vmatpush1.xpose.msra.mxu0 0.0
      %1915 = vmatprep.subr.mxu0 0.0
      %1916 = vmatpush1.xpose.msra.mxu0 0.0
      %1917 = vmatprep.subr.mxu0 0.0
      %1918 = vmatpush1.xpose.msra.mxu0 0.0
      %1919 = vmatprep.subr.mxu0 0.0
      %1920 = vmatpush1.xpose.msra.mxu0 0.0
      %1921 = vmatprep.subr.mxu0 0.0
      %1922 = vmatpush1.xpose.msra.mxu0 0.0
      %1923 = vmatprep.subr.mxu0 0.0
      %1924 = vmatpush1.xpose.msra.mxu0 0.0
      %1925 = vmatprep.subr.mxu0 0.0
      %1926 = vmatpush1.xpose.msra.mxu0 0.0
      %1927 = vmatprep.subr.mxu0 0.0
      %1928 = vmatpush1.xpose.msra.mxu0 0.0
      %1929 = vmatprep.subr.mxu0 0.0
      %1930 = vmatpush1.xpose.msra.mxu0 0.0
      %1931 = vmatprep.subr.mxu0 0.0
      %1932 = vmatpush1.xpose.msra.mxu0 0.0
      %1933 = vmatprep.subr.mxu0 0.0
      %1934 = vmatpush1.xpose.msra.mxu0 0.0
      %1935 = vmatprep.subr.mxu0 0.0
      %1936 = vmatpush1.xpose.msra.mxu0 0.0
      %1937 = vmatprep.subr.mxu0 0.0
      %1938 = vmatpush1.xpose.msra.mxu0 0.0
      %1939 = vmatprep.subr.mxu0 0.0
      %1940 = vmatpush1.xpose.msra.mxu0 0.0
      %1941 = vmatprep.subr.mxu0 0.0
      %1942 = vmatpush1.xpose.msra.mxu0 0.0
      %1943 = vmatprep.subr.mxu0 0.0
      %1944 = vmatpush1.xpose.msra.mxu0 0.0
      %1945 = vmatprep.subr.mxu0 0.0
      %1946 = vmatpush1.xpose.msra.mxu0 0.0
      %1947 = vmatprep.subr.mxu0 0.0
      %1948 = vmatpush1.xpose.msra.mxu0 0.0
      %1949 = vmatprep.subr.mxu0 0.0
      %1950 = vmatpush1.xpose.msra.mxu0 0.0
      %1951 = vmatprep.subr.mxu0 0.0
      %1952 = vmatpush1.xpose.msra.mxu0 0.0
      %1953 = vmatprep.mubr.f32.mxu0 0.0
      %1954 = vmatmul.mubr.f32.gmra.mrb[0].mxu0 %v1884
      %v1955 = vpop.f32.mrb[0].mxu0
      %v1956 = vadd.f32 0.0, %v1955
      %v1957 = vpop.f32.mrb[0].mxu0
      %1958 = vdwg.mxu0
      %v1959 = vsel %vm957, %v1956, -inf
      %1960 = vmax.xlane.f32.xlu0 %v1959
      %v1961 = vpop.xlane.xlu0 %1960
      %v1962 = vsub.f32 %v1956, %v1961
      %v1963 = vmul.f32 %v1962, 1.442695
      %v1964 = vpow.pop %v1963
      %v1965 = vsel %vm957, %v1964, 0.0
      %1966 = vadd.xlane.f32.xlu0 %v1965
      %v1967 = vpop.xlane.xlu0 %1966
      %v1968 = vrcp.pop %v1967
      %v1969 = vmul.f32 %v1967, %v1968
      %v1970 = vsub.f32 2.0, %v1969
      %v1971 = vmul.f32 %v1968, %v1970
      %v1972 = vmul.f32 %v1964, %v1971
      %v1974 = vsel %vm957, %v1972, 0
      %1976 = vmatprep.subr.mxu0 0.0
      %1977 = vmatpush1.msra.mxu0 %v1880
      %1978 = vmatprep.subr.mxu0 0.0
      %1979 = vmatpush1.msra.mxu0 0.0
      %1980 = vmatprep.subr.mxu0 0.0
      %1981 = vmatpush1.msra.mxu0 0.0
      %1982 = vmatprep.subr.mxu0 0.0
      %1983 = vmatpush1.msra.mxu0 0.0
      %1984 = vmatprep.subr.mxu0 0.0
      %1985 = vmatpush1.msra.mxu0 0.0
      %1986 = vmatprep.subr.mxu0 0.0
      %1987 = vmatpush1.msra.mxu0 0.0
      %1988 = vmatprep.subr.mxu0 0.0
      %1989 = vmatpush1.msra.mxu0 0.0
      %1990 = vmatprep.subr.mxu0 0.0
      %1991 = vmatpush1.msra.mxu0 0.0
      %1992 = vmatprep.subr.mxu0 0.0
      %1993 = vmatpush1.msra.mxu0 0.0
      %1994 = vmatprep.subr.mxu0 0.0
      %1995 = vmatpush1.msra.mxu0 0.0
      %1996 = vmatprep.subr.mxu0 0.0
      %1997 = vmatpush1.msra.mxu0 0.0
      %1998 = vmatprep.subr.mxu0 0.0
      %1999 = vmatpush1.msra.mxu0 0.0
      %2000 = vmatprep.subr.mxu0 0.0
      %2001 = vmatpush1.msra.mxu0 0.0
      %2002 = vmatprep.subr.mxu0 0.0
      %2003 = vmatpush1.msra.mxu0 0.0
      %2004 = vmatprep.subr.mxu0 0.0
      %2005 = vmatpush1.msra.mxu0 0.0
      %2006 = vmatprep.subr.mxu0 0.0
      %2007 = vmatpush1.msra.mxu0 0.0
      %2008 = vmatprep.subr.mxu0 0.0
      %2009 = vmatpush1.msra.mxu0 0.0
      %2010 = vmatprep.subr.mxu0 0.0
      %2011 = vmatpush1.msra.mxu0 0.0
      %2012 = vmatprep.subr.mxu0 0.0
      %2013 = vmatpush1.msra.mxu0 0.0
      %2014 = vmatprep.subr.mxu0 0.0
      %2015 = vmatpush1.msra.mxu0 0.0
      %2016 = vmatprep.subr.mxu0 0.0
      %2017 = vmatpush1.msra.mxu0 0.0
      %2018 = vmatprep.subr.mxu0 0.0
      %2019 = vmatpush1.msra.mxu0 0.0
      %2020 = vmatprep.subr.mxu0 0.0
      %2021 = vmatpush1.msra.mxu0 0.0
      %2022 = vmatprep.subr.mxu0 0.0
      %2023 = vmatpush1.msra.mxu0 0.0
      %2024 = vmatprep.subr.mxu0 0.0
      %2025 = vmatpush1.msra.mxu0 0.0
      %2026 = vmatprep.subr.mxu0 0.0
      %2027 = vmatpush1.msra.mxu0 0.0
      %2028 = vmatprep.subr.mxu0 0.0
      %2029 = vmatpush1.msra.mxu0 0.0
      %2030 = vmatprep.subr.mxu0 0.0
      %2031 = vmatpush1.msra.mxu0 0.0
      %2032 = vmatprep.subr.mxu0 0.0
      %2033 = vmatpush1.msra.mxu0 0.0
      %2034 = vmatprep.subr.mxu0 0.0
      %2035 = vmatpush1.msra.mxu0 0.0
      %2036 = vmatprep.subr.mxu0 0.0
      %2037 = vmatpush1.msra.mxu0 0.0
      %2038 = vmatprep.subr.mxu0 0.0
      %2039 = vmatpush1.msra.mxu0 0.0
      %2040 = vmatprep.mubr.f32.mxu0 0.0
      %2041 = vmatmul.mubr.f32.gmra.mrb[0].mxu0 %v1974
      %v2042 = vpop.f32.mrb[0].mxu0
      %v2043 = vadd.f32 0.0, %v2042
      %v2044 = vpop.f32.mrb[0].mxu0
      %2045 = vdwg.mxu0
      %s2046 = scalar_lea.vmem %s663, 16
      %v2047 = vld [vmem:[%s2046] sm:$0xff]
      %v2049 = vsel %vm957, %v2043, 0
      %2051 = vmatprep.subr.mxu0 0.0
      %2052 = vmatpush1.msra.mxu0 %v2047
      %2053 = vmatprep.subr.mxu0 0.0
      %2054 = vmatpush1.msra.mxu0 0.0
      %2055 = vmatprep.subr.mxu0 0.0
      %2056 = vmatpush1.msra.mxu0 0.0
      %2057 = vmatprep.subr.mxu0 0.0
      %2058 = vmatpush1.msra.mxu0 0.0
      %2059 = vmatprep.subr.mxu0 0.0
      %2060 = vmatpush1.msra.mxu0 0.0
      %2061 = vmatprep.subr.mxu0 0.0
      %2062 = vmatpush1.msra.mxu0 0.0
      %2063 = vmatprep.subr.mxu0 0.0
      %2064 = vmatpush1.msra.mxu0 0.0
      %2065 = vmatprep.subr.mxu0 0.0
      %2066 = vmatpush1.msra.mxu0 0.0
      %2067 = vmatprep.subr.mxu0 0.0
      %2068 = vmatpush1.msra.mxu0 0.0
      %2069 = vmatprep.subr.mxu0 0.0
      %2070 = vmatpush1.msra.mxu0 0.0
      %2071 = vmatprep.subr.mxu0 0.0
      %2072 = vmatpush1.msra.mxu0 0.0
      %2073 = vmatprep.subr.mxu0 0.0
      %2074 = vmatpush1.msra.mxu0 0.0
      %2075 = vmatprep.subr.mxu0 0.0
      %2076 = vmatpush1.msra.mxu0 0.0
      %2077 = vmatprep.subr.mxu0 0.0
      %2078 = vmatpush1.msra.mxu0 0.0
      %2079 = vmatprep.subr.mxu0 0.0
      %2080 = vmatpush1.msra.mxu0 0.0
      %2081 = vmatprep.subr.mxu0 0.0
      %2082 = vmatpush1.msra.mxu0 0.0
      %2083 = vmatprep.subr.mxu0 0.0
      %2084 = vmatpush1.msra.mxu0 0.0
      %2085 = vmatprep.subr.mxu0 0.0
      %2086 = vmatpush1.msra.mxu0 0.0
      %2087 = vmatprep.subr.mxu0 0.0
      %2088 = vmatpush1.msra.mxu0 0.0
      %2089 = vmatprep.subr.mxu0 0.0
      %2090 = vmatpush1.msra.mxu0 0.0
      %2091 = vmatprep.subr.mxu0 0.0
      %2092 = vmatpush1.msra.mxu0 0.0
      %2093 = vmatprep.subr.mxu0 0.0
      %2094 = vmatpush1.msra.mxu0 0.0
      %2095 = vmatprep.subr.mxu0 0.0
      %2096 = vmatpush1.msra.mxu0 0.0
      %2097 = vmatprep.subr.mxu0 0.0
      %2098 = vmatpush1.msra.mxu0 0.0
      %2099 = vmatprep.subr.mxu0 0.0
      %2100 = vmatpush1.msra.mxu0 0.0
      %2101 = vmatprep.subr.mxu0 0.0
      %2102 = vmatpush1.msra.mxu0 0.0
      %2103 = vmatprep.subr.mxu0 0.0
      %2104 = vmatpush1.msra.mxu0 0.0
      %2105 = vmatprep.subr.mxu0 0.0
      %2106 = vmatpush1.msra.mxu0 0.0
      %2107 = vmatprep.subr.mxu0 0.0
      %2108 = vmatpush1.msra.mxu0 0.0
      %2109 = vmatprep.subr.mxu0 0.0
      %2110 = vmatpush1.msra.mxu0 0.0
      %2111 = vmatprep.subr.mxu0 0.0
      %2112 = vmatpush1.msra.mxu0 0.0
      %2113 = vmatprep.subr.mxu0 0.0
      %2114 = vmatpush1.msra.mxu0 0.0
      %2115 = vmatprep.mubr.f32.mxu0 0.0
      %2116 = vmatmul.mubr.f32.gmra.mrb[0].mxu0 %v2049
      %v2117 = vpop.f32.mrb[0].mxu0
      %v2118 = vadd.f32 0.0, %v2117
      %v2119 = vpop.f32.mrb[0].mxu0
      %2120 = vdwg.mxu0
      %v2121 = vadd.f32 %v1655, %v2118
      %s2122 = scalar_lea.vmem %s648, 96
      %v2123 = vld [vmem:[%s2122] sm:$0xff]
      %v2124 = vld [vmem:[%s2122 + $0x8] sm:$0xff]
      %v2125 = vld [vmem:[%s2122 + $0x10] sm:$0xff]
      %v2126 = vld [vmem:[%s2122 + $0x18] sm:$0xff]
      %2127 = vmatprep.subr.mxu0 0.0
      %2128 = vmatpush1.msra.mxu0 %v2123
      %2129 = vmatprep.subr.mxu0 0.0
      %2130 = vmatpush1.msra.mxu0 %v2124
      %2131 = vmatprep.subr.mxu0 0.0
      %2132 = vmatpush1.msra.mxu0 %v2125
      %2133 = vmatprep.subr.mxu0 0.0
      %2134 = vmatpush1.msra.mxu0 %v2126
      %2135 = vmatprep.subr.mxu0 0.0
      %2136 = vmatpush1.msra.mxu0 0.0
      %2137 = vmatprep.subr.mxu0 0.0
      %2138 = vmatpush1.msra.mxu0 0.0
      %2139 = vmatprep.subr.mxu0 0.0
      %2140 = vmatpush1.msra.mxu0 0.0
      %2141 = vmatprep.subr.mxu0 0.0
      %2142 = vmatpush1.msra.mxu0 0.0
      %2143 = vmatprep.subr.mxu0 0.0
      %2144 = vmatpush1.msra.mxu0 0.0
      %2145 = vmatprep.subr.mxu0 0.0
      %2146 = vmatpush1.msra.mxu0 0.0
      %2147 = vmatprep.subr.mxu0 0.0
      %2148 = vmatpush1.msra.mxu0 0.0
      %2149 = vmatprep.subr.mxu0 0.0
      %2150 = vmatpush1.msra.mxu0 0.0
      %2151 = vmatprep.subr.mxu0 0.0
      %2152 = vmatpush1.msra.mxu0 0.0
      %2153 = vmatprep.subr.mxu0 0.0
      %2154 = vmatpush1.msra.mxu0 0.0
      %2155 = vmatprep.subr.mxu0 0.0
      %2156 = vmatpush1.msra.mxu0 0.0
      %2157 = vmatprep.subr.mxu0 0.0
      %2158 = vmatpush1.msra.mxu0 0.0
      %2159 = vmatprep.subr.mxu0 0.0
      %2160 = vmatpush1.msra.mxu0 0.0
      %2161 = vmatprep.subr.mxu0 0.0
      %2162 = vmatpush1.msra.mxu0 0.0
      %2163 = vmatprep.subr.mxu0 0.0
      %2164 = vmatpush1.msra.mxu0 0.0
      %2165 = vmatprep.subr.mxu0 0.0
      %2166 = vmatpush1.msra.mxu0 0.0
      %2167 = vmatprep.subr.mxu0 0.0
      %2168 = vmatpush1.msra.mxu0 0.0
      %2169 = vmatprep.subr.mxu0 0.0
      %2170 = vmatpush1.msra.mxu0 0.0
      %2171 = vmatprep.subr.mxu0 0.0
      %2172 = vmatpush1.msra.mxu0 0.0
      %2173 = vmatprep.subr.mxu0 0.0
      %2174 = vmatpush1.msra.mxu0 0.0
      %2175 = vmatprep.subr.mxu0 0.0
      %2176 = vmatpush1.msra.mxu0 0.0
      %2177 = vmatprep.subr.mxu0 0.0
      %2178 = vmatpush1.msra.mxu0 0.0
      %2179 = vmatprep.subr.mxu0 0.0
      %2180 = vmatpush1.msra.mxu0 0.0
      %2181 = vmatprep.subr.mxu0 0.0
      %2182 = vmatpush1.msra.mxu0 0.0
      %2183 = vmatprep.subr.mxu0 0.0
      %2184 = vmatpush1.msra.mxu0 0.0
      %2185 = vmatprep.subr.mxu0 0.0
      %2186 = vmatpush1.msra.mxu0 0.0
      %2187 = vmatprep.subr.mxu0 0.0
      %2188 = vmatpush1.msra.mxu0 0.0
      %2189 = vmatprep.subr.mxu0 0.0
      %2190 = vmatpush1.msra.mxu0 0.0
      %2191 = vmatprep.mubr.f32.mxu0 0.0
      %2192 = vmatmul.mubr.f32.gmra.mrb[0].mxu0 %v737
      %v2193 = vpop.f32.mrb[0].mxu0
      %v2194 = vadd.f32 0.0, %v2193
      %v2195 = vpop.f32.mrb[0].mxu0
      %2196 = vdwg.mxu0
      %s2197 = scalar_lea.vmem %s653, 96
      %v2198 = vld [vmem:[%s2197] sm:$0xff]
      %v2199 = vld [vmem:[%s2197 + $0x8] sm:$0xff]
      %v2200 = vld [vmem:[%s2197 + $0x10] sm:$0xff]
      %v2201 = vld [vmem:[%s2197 + $0x18] sm:$0xff]
      %2202 = vmatprep.subr.mxu0 0.0
      %2203 = vmatpush1.msra.mxu0 %v2198
      %2204 = vmatprep.subr.mxu0 0.0
      %2205 = vmatpush1.msra.mxu0 %v2199
      %2206 = vmatprep.subr.mxu0 0.0
      %2207 = vmatpush1.msra.mxu0 %v2200
      %2208 = vmatprep.subr.mxu0 0.0
      %2209 = vmatpush1.msra.mxu0 %v2201
      %2210 = vmatprep.subr.mxu0 0.0
      %2211 = vmatpush1.msra.mxu0 0.0
      %2212 = vmatprep.subr.mxu0 0.0
      %2213 = vmatpush1.msra.mxu0 0.0
      %2214 = vmatprep.subr.mxu0 0.0
      %2215 = vmatpush1.msra.mxu0 0.0
      %2216 = vmatprep.subr.mxu0 0.0
      %2217 = vmatpush1.msra.mxu0 0.0
      %2218 = vmatprep.subr.mxu0 0.0
      %2219 = vmatpush1.msra.mxu0 0.0
      %2220 = vmatprep.subr.mxu0 0.0
      %2221 = vmatpush1.msra.mxu0 0.0
      %2222 = vmatprep.subr.mxu0 0.0
      %2223 = vmatpush1.msra.mxu0 0.0
      %2224 = vmatprep.subr.mxu0 0.0
      %2225 = vmatpush1.msra.mxu0 0.0
      %2226 = vmatprep.subr.mxu0 0.0
      %2227 = vmatpush1.msra.mxu0 0.0
      %2228 = vmatprep.subr.mxu0 0.0
      %2229 = vmatpush1.msra.mxu0 0.0
      %2230 = vmatprep.subr.mxu0 0.0
      %2231 = vmatpush1.msra.mxu0 0.0
      %2232 = vmatprep.subr.mxu0 0.0
      %2233 = vmatpush1.msra.mxu0 0.0
      %2234 = vmatprep.subr.mxu0 0.0
      %2235 = vmatpush1.msra.mxu0 0.0
      %2236 = vmatprep.subr.mxu0 0.0
      %2237 = vmatpush1.msra.mxu0 0.0
      %2238 = vmatprep.subr.mxu0 0.0
      %2239 = vmatpush1.msra.mxu0 0.0
      %2240 = vmatprep.subr.mxu0 0.0
      %2241 = vmatpush1.msra.mxu0 0.0
      %2242 = vmatprep.subr.mxu0 0.0
      %2243 = vmatpush1.msra.mxu0 0.0
      %2244 = vmatprep.subr.mxu0 0.0
      %2245 = vmatpush1.msra.mxu0 0.0
      %2246 = vmatprep.subr.mxu0 0.0
      %2247 = vmatpush1.msra.mxu0 0.0
      %2248 = vmatprep.subr.mxu0 0.0
      %2249 = vmatpush1.msra.mxu0 0.0
      %2250 = vmatprep.subr.mxu0 0.0
      %2251 = vmatpush1.msra.mxu0 0.0
      %2252 = vmatprep.subr.mxu0 0.0
      %2253 = vmatpush1.msra.mxu0 0.0
      %2254 = vmatprep.subr.mxu0 0.0
      %2255 = vmatpush1.msra.mxu0 0.0
      %2256 = vmatprep.subr.mxu0 0.0
      %2257 = vmatpush1.msra.mxu0 0.0
      %2258 = vmatprep.subr.mxu0 0.0
      %2259 = vmatpush1.msra.mxu0 0.0
      %2260 = vmatprep.subr.mxu0 0.0
      %2261 = vmatpush1.msra.mxu0 0.0
      %2262 = vmatprep.subr.mxu0 0.0
      %2263 = vmatpush1.msra.mxu0 0.0
      %2264 = vmatprep.subr.mxu0 0.0
      %2265 = vmatpush1.msra.mxu0 0.0
      %2266 = vmatprep.mubr.f32.mxu0 0.0
      %2267 = vmatmul.mubr.f32.gmra.mrb[0].mxu0 %v737
      %v2268 = vpop.f32.mrb[0].mxu0
      %v2269 = vadd.f32 0.0, %v2268
      %v2270 = vpop.f32.mrb[0].mxu0
      %2271 = vdwg.mxu0
      %s2272 = scalar_lea.vmem %s658, 96
      %v2273 = vld [vmem:[%s2272] sm:$0xff]
      %v2274 = vld [vmem:[%s2272 + $0x8] sm:$0xff]
      %v2275 = vld [vmem:[%s2272 + $0x10] sm:$0xff]
      %v2276 = vld [vmem:[%s2272 + $0x18] sm:$0xff]
      %2277 = vmatprep.subr.mxu0 0.0
      %2278 = vmatpush1.msra.mxu0 %v2273
      %2279 = vmatprep.subr.mxu0 0.0
      %2280 = vmatpush1.msra.mxu0 %v2274
      %2281 = vmatprep.subr.mxu0 0.0
      %2282 = vmatpush1.msra.mxu0 %v2275
      %2283 = vmatprep.subr.mxu0 0.0
      %2284 = vmatpush1.msra.mxu0 %v2276
      %2285 = vmatprep.subr.mxu0 0.0
      %2286 = vmatpush1.msra.mxu0 0.0
      %2287 = vmatprep.subr.mxu0 0.0
      %2288 = vmatpush1.msra.mxu0 0.0
      %2289 = vmatprep.subr.mxu0 0.0
      %2290 = vmatpush1.msra.mxu0 0.0
      %2291 = vmatprep.subr.mxu0 0.0
      %2292 = vmatpush1.msra.mxu0 0.0
      %2293 = vmatprep.subr.mxu0 0.0
      %2294 = vmatpush1.msra.mxu0 0.0
      %2295 = vmatprep.subr.mxu0 0.0
      %2296 = vmatpush1.msra.mxu0 0.0
      %2297 = vmatprep.subr.mxu0 0.0
      %2298 = vmatpush1.msra.mxu0 0.0
      %2299 = vmatprep.subr.mxu0 0.0
      %2300 = vmatpush1.msra.mxu0 0.0
      %2301 = vmatprep.subr.mxu0 0.0
      %2302 = vmatpush1.msra.mxu0 0.0
      %2303 = vmatprep.subr.mxu0 0.0
      %2304 = vmatpush1.msra.mxu0 0.0
      %2305 = vmatprep.subr.mxu0 0.0
      %2306 = vmatpush1.msra.mxu0 0.0
      %2307 = vmatprep.subr.mxu0 0.0
      %2308 = vmatpush1.msra.mxu0 0.0
      %2309 = vmatprep.subr.mxu0 0.0
      %2310 = vmatpush1.msra.mxu0 0.0
      %2311 = vmatprep.subr.mxu0 0.0
      %2312 = vmatpush1.msra.mxu0 0.0
      %2313 = vmatprep.subr.mxu0 0.0
      %2314 = vmatpush1.msra.mxu0 0.0
      %2315 = vmatprep.subr.mxu0 0.0
      %2316 = vmatpush1.msra.mxu0 0.0
      %2317 = vmatprep.subr.mxu0 0.0
      %2318 = vmatpush1.msra.mxu0 0.0
      %2319 = vmatprep.subr.mxu0 0.0
      %2320 = vmatpush1.msra.mxu0 0.0
      %2321 = vmatprep.subr.mxu0 0.0
      %2322 = vmatpush1.msra.mxu0 0.0
      %2323 = vmatprep.subr.mxu0 0.0
      %2324 = vmatpush1.msra.mxu0 0.0
      %2325 = vmatprep.subr.mxu0 0.0
      %2326 = vmatpush1.msra.mxu0 0.0
      %2327 = vmatprep.subr.mxu0 0.0
      %2328 = vmatpush1.msra.mxu0 0.0
      %2329 = vmatprep.subr.mxu0 0.0
      %2330 = vmatpush1.msra.mxu0 0.0
      %2331 = vmatprep.subr.mxu0 0.0
      %2332 = vmatpush1.msra.mxu0 0.0
      %2333 = vmatprep.subr.mxu0 0.0
      %2334 = vmatpush1.msra.mxu0 0.0
      %2335 = vmatprep.subr.mxu0 0.0
      %2336 = vmatpush1.msra.mxu0 0.0
      %2337 = vmatprep.subr.mxu0 0.0
      %2338 = vmatpush1.msra.mxu0 0.0
      %2339 = vmatprep.subr.mxu0 0.0
      %2340 = vmatpush1.msra.mxu0 0.0
      %2341 = vmatprep.mubr.f32.mxu0 0.0
      %2342 = vmatmul.mubr.f32.gmra.mrb[0].mxu0 %v737
      %v2343 = vpop.f32.mrb[0].mxu0
      %v2344 = vadd.f32 0.0, %v2343
      %v2345 = vpop.f32.mrb[0].mxu0
      %2346 = vdwg.mxu0
      %v2348 = vsel %vm957, %v2194, 0
      %v2351 = vsel %vm957, %v2269, 0
      %2353 = vmatprep.subr.mxu0 0.0
      %2354 = vmatpush1.xpose.msra.mxu0 %v2351
      %2355 = vmatprep.subr.mxu0 0.0
      %2356 = vmatpush1.xpose.msra.mxu0 0.0
      %2357 = vmatprep.subr.mxu0 0.0
      %2358 = vmatpush1.xpose.msra.mxu0 0.0
      %2359 = vmatprep.subr.mxu0 0.0
      %2360 = vmatpush1.xpose.msra.mxu0 0.0
      %2361 = vmatprep.subr.mxu0 0.0
      %2362 = vmatpush1.xpose.msra.mxu0 0.0
      %2363 = vmatprep.subr.mxu0 0.0
      %2364 = vmatpush1.xpose.msra.mxu0 0.0
      %2365 = vmatprep.subr.mxu0 0.0
      %2366 = vmatpush1.xpose.msra.mxu0 0.0
      %2367 = vmatprep.subr.mxu0 0.0
      %2368 = vmatpush1.xpose.msra.mxu0 0.0
      %2369 = vmatprep.subr.mxu0 0.0
      %2370 = vmatpush1.xpose.msra.mxu0 0.0
      %2371 = vmatprep.subr.mxu0 0.0
      %2372 = vmatpush1.xpose.msra.mxu0 0.0
      %2373 = vmatprep.subr.mxu0 0.0
      %2374 = vmatpush1.xpose.msra.mxu0 0.0
      %2375 = vmatprep.subr.mxu0 0.0
      %2376 = vmatpush1.xpose.msra.mxu0 0.0
      %2377 = vmatprep.subr.mxu0 0.0
      %2378 = vmatpush1.xpose.msra.mxu0 0.0
      %2379 = vmatprep.subr.mxu0 0.0
      %2380 = vmatpush1.xpose.msra.mxu0 0.0
      %2381 = vmatprep.subr.mxu0 0.0
      %2382 = vmatpush1.xpose.msra.mxu0 0.0
      %2383 = vmatprep.subr.mxu0 0.0
      %2384 = vmatpush1.xpose.msra.mxu0 0.0
      %2385 = vmatprep.subr.mxu0 0.0
      %2386 = vmatpush1.xpose.msra.mxu0 0.0
      %2387 = vmatprep.subr.mxu0 0.0
      %2388 = vmatpush1.xpose.msra.mxu0 0.0
      %2389 = vmatprep.subr.mxu0 0.0
      %2390 = vmatpush1.xpose.msra.mxu0 0.0
      %2391 = vmatprep.subr.mxu0 0.0
      %2392 = vmatpush1.xpose.msra.mxu0 0.0
      %2393 = vmatprep.subr.mxu0 0.0
      %2394 = vmatpush1.xpose.msra.mxu0 0.0
      %2395 = vmatprep.subr.mxu0 0.0
      %2396 = vmatpush1.xpose.msra.mxu0 0.0
      %2397 = vmatprep.subr.mxu0 0.0
      %2398 = vmatpush1.xpose.msra.mxu0 0.0
      %2399 = vmatprep.subr.mxu0 0.0
      %2400 = vmatpush1.xpose.msra.mxu0 0.0
      %2401 = vmatprep.subr.mxu0 0.0
      %2402 = vmatpush1.xpose.msra.mxu0 0.0
      %2403 = vmatprep.subr.mxu0 0.0
      %2404 = vmatpush1.xpose.msra.mxu0 0.0
      %2405 = vmatprep.subr.mxu0 0.0
      %2406 = vmatpush1.xpose.msra.mxu0 0.0
      %2407 = vmatprep.subr.mxu0 0.0
      %2408 = vmatpush1.xpose.msra.mxu0 0.0
      %2409 = vmatprep.subr.mxu0 0.0
      %2410 = vmatpush1.xpose.msra.mxu0 0.0
      %2411 = vmatprep.subr.mxu0 0.0
      %2412 = vmatpush1.xpose.msra.mxu0 0.0
      %2413 = vmatprep.subr.mxu0 0.0
      %2414 = vmatpush1.xpose.msra.mxu0 0.0
      %2415 = vmatprep.subr.mxu0 0.0
      %2416 = vmatpush1.xpose.msra.mxu0 0.0
      %2417 = vmatprep.mubr.f32.mxu0 0.0
      %2418 = vmatmul.mubr.f32.gmra.mrb[0].mxu0 %v2348
      %v2419 = vpop.f32.mrb[0].mxu0
      %v2420 = vadd.f32 0.0, %v2419
      %v2421 = vpop.f32.mrb[0].mxu0
      %2422 = vdwg.mxu0
      %v2423 = vsel %vm957, %v2420, -inf
      %2424 = vmax.xlane.f32.xlu0 %v2423
      %v2425 = vpop.xlane.xlu0 %2424
      %v2426 = vsub.f32 %v2420, %v2425
      %v2427 = vmul.f32 %v2426, 1.442695
      %v2428 = vpow.pop %v2427
      %v2429 = vsel %vm957, %v2428, 0.0
      %2430 = vadd.xlane.f32.xlu0 %v2429
      %v2431 = vpop.xlane.xlu0 %2430
      %v2432 = vrcp.pop %v2431
      %v2433 = vmul.f32 %v2431, %v2432
      %v2434 = vsub.f32 2.0, %v2433
      %v2435 = vmul.f32 %v2432, %v2434
      %v2436 = vmul.f32 %v2428, %v2435
      %v2438 = vsel %vm957, %v2436, 0
      %2440 = vmatprep.subr.mxu0 0.0
      %2441 = vmatpush1.msra.mxu0 %v2344
      %2442 = vmatprep.subr.mxu0 0.0
      %2443 = vmatpush1.msra.mxu0 0.0
      %2444 = vmatprep.subr.mxu0 0.0
      %2445 = vmatpush1.msra.mxu0 0.0
      %2446 = vmatprep.subr.mxu0 0.0
      %2447 = vmatpush1.msra.mxu0 0.0
      %2448 = vmatprep.subr.mxu0 0.0
      %2449 = vmatpush1.msra.mxu0 0.0
      %2450 = vmatprep.subr.mxu0 0.0
      %2451 = vmatpush1.msra.mxu0 0.0
      %2452 = vmatprep.subr.mxu0 0.0
      %2453 = vmatpush1.msra.mxu0 0.0
      %2454 = vmatprep.subr.mxu0 0.0
      %2455 = vmatpush1.msra.mxu0 0.0
      %2456 = vmatprep.subr.mxu0 0.0
      %2457 = vmatpush1.msra.mxu0 0.0
      %2458 = vmatprep.subr.mxu0 0.0
      %2459 = vmatpush1.msra.mxu0 0.0
      %2460 = vmatprep.subr.mxu0 0.0
      %2461 = vmatpush1.msra.mxu0 0.0
      %2462 = vmatprep.subr.mxu0 0.0
      %2463 = vmatpush1.msra.mxu0 0.0
      %2464 = vmatprep.subr.mxu0 0.0
      %2465 = vmatpush1.msra.mxu0 0.0
      %2466 = vmatprep.subr.mxu0 0.0
      %2467 = vmatpush1.msra.mxu0 0.0
      %2468 = vmatprep.subr.mxu0 0.0
      %2469 = vmatpush1.msra.mxu0 0.0
      %2470 = vmatprep.subr.mxu0 0.0
      %2471 = vmatpush1.msra.mxu0 0.0
      %2472 = vmatprep.subr.mxu0 0.0
      %2473 = vmatpush1.msra.mxu0 0.0
      %2474 = vmatprep.subr.mxu0 0.0
      %2475 = vmatpush1.msra.mxu0 0.0
      %2476 = vmatprep.subr.mxu0 0.0
      %2477 = vmatpush1.msra.mxu0 0.0
      %2478 = vmatprep.subr.mxu0 0.0
      %2479 = vmatpush1.msra.mxu0 0.0
      %2480 = vmatprep.subr.mxu0 0.0
      %2481 = vmatpush1.msra.mxu0 0.0
      %2482 = vmatprep.subr.mxu0 0.0
      %2483 = vmatpush1.msra.mxu0 0.0
      %2484 = vmatprep.subr.mxu0 0.0
      %2485 = vmatpush1.msra.mxu0 0.0
      %2486 = vmatprep.subr.mxu0 0.0
      %2487 = vmatpush1.msra.mxu0 0.0
      %2488 = vmatprep.subr.mxu0 0.0
      %2489 = vmatpush1.msra.mxu0 0.0
      %2490 = vmatprep.subr.mxu0 0.0
      %2491 = vmatpush1.msra.mxu0 0.0
      %2492 = vmatprep.subr.mxu0 0.0
      %2493 = vmatpush1.msra.mxu0 0.0
      %2494 = vmatprep.subr.mxu0 0.0
      %2495 = vmatpush1.msra.mxu0 0.0
      %2496 = vmatprep.subr.mxu0 0.0
      %2497 = vmatpush1.msra.mxu0 0.0
      %2498 = vmatprep.subr.mxu0 0.0
      %2499 = vmatpush1.msra.mxu0 0.0
      %2500 = vmatprep.subr.mxu0 0.0
      %2501 = vmatpush1.msra.mxu0 0.0
      %2502 = vmatprep.subr.mxu0 0.0
      %2503 = vmatpush1.msra.mxu0 0.0
      %2504 = vmatprep.mubr.f32.mxu0 0.0
      %2505 = vmatmul.mubr.f32.gmra.mrb[0].mxu0 %v2438
      %v2506 = vpop.f32.mrb[0].mxu0
      %v2507 = vadd.f32 0.0, %v2506
      %v2508 = vpop.f32.mrb[0].mxu0
      %2509 = vdwg.mxu0
      %s2510 = scalar_lea.vmem %s663, 24
      %v2511 = vld [vmem:[%s2510] sm:$0xff]
      %v2513 = vsel %vm957, %v2507, 0
      %2515 = vmatprep.subr.mxu0 0.0
      %2516 = vmatpush1.msra.mxu0 %v2511
      %2517 = vmatprep.subr.mxu0 0.0
      %2518 = vmatpush1.msra.mxu0 0.0
      %2519 = vmatprep.subr.mxu0 0.0
      %2520 = vmatpush1.msra.mxu0 0.0
      %2521 = vmatprep.subr.mxu0 0.0
      %2522 = vmatpush1.msra.mxu0 0.0
      %2523 = vmatprep.subr.mxu0 0.0
      %2524 = vmatpush1.msra.mxu0 0.0
      %2525 = vmatprep.subr.mxu0 0.0
      %2526 = vmatpush1.msra.mxu0 0.0
      %2527 = vmatprep.subr.mxu0 0.0
      %2528 = vmatpush1.msra.mxu0 0.0
      %2529 = vmatprep.subr.mxu0 0.0
      %2530 = vmatpush1.msra.mxu0 0.0
      %2531 = vmatprep.subr.mxu0 0.0
      %2532 = vmatpush1.msra.mxu0 0.0
      %2533 = vmatprep.subr.mxu0 0.0
      %2534 = vmatpush1.msra.mxu0 0.0
      %2535 = vmatprep.subr.mxu0 0.0
      %2536 = vmatpush1.msra.mxu0 0.0
      %2537 = vmatprep.subr.mxu0 0.0
      %2538 = vmatpush1.msra.mxu0 0.0
      %2539 = vmatprep.subr.mxu0 0.0
      %2540 = vmatpush1.msra.mxu0 0.0
      %2541 = vmatprep.subr.mxu0 0.0
      %2542 = vmatpush1.msra.mxu0 0.0
      %2543 = vmatprep.subr.mxu0 0.0
      %2544 = vmatpush1.msra.mxu0 0.0
      %2545 = vmatprep.subr.mxu0 0.0
      %2546 = vmatpush1.msra.mxu0 0.0
      %2547 = vmatprep.subr.mxu0 0.0
      %2548 = vmatpush1.msra.mxu0 0.0
      %2549 = vmatprep.subr.mxu0 0.0
      %2550 = vmatpush1.msra.mxu0 0.0
      %2551 = vmatprep.subr.mxu0 0.0
      %2552 = vmatpush1.msra.mxu0 0.0
      %2553 = vmatprep.subr.mxu0 0.0
      %2554 = vmatpush1.msra.mxu0 0.0
      %2555 = vmatprep.subr.mxu0 0.0
      %2556 = vmatpush1.msra.mxu0 0.0
      %2557 = vmatprep.subr.mxu0 0.0
      %2558 = vmatpush1.msra.mxu0 0.0
      %2559 = vmatprep.subr.mxu0 0.0
      %2560 = vmatpush1.msra.mxu0 0.0
      %2561 = vmatprep.subr.mxu0 0.0
      %2562 = vmatpush1.msra.mxu0 0.0
      %2563 = vmatprep.subr.mxu0 0.0
      %2564 = vmatpush1.msra.mxu0 0.0
      %2565 = vmatprep.subr.mxu0 0.0
      %2566 = vmatpush1.msra.mxu0 0.0
      %2567 = vmatprep.subr.mxu0 0.0
      %2568 = vmatpush1.msra.mxu0 0.0
      %2569 = vmatprep.subr.mxu0 0.0
      %2570 = vmatpush1.msra.mxu0 0.0
      %2571 = vmatprep.subr.mxu0 0.0
      %2572 = vmatpush1.msra.mxu0 0.0
      %2573 = vmatprep.subr.mxu0 0.0
      %2574 = vmatpush1.msra.mxu0 0.0
      %2575 = vmatprep.subr.mxu0 0.0
      %2576 = vmatpush1.msra.mxu0 0.0
      %2577 = vmatprep.subr.mxu0 0.0
      %2578 = vmatpush1.msra.mxu0 0.0
      %2579 = vmatprep.mubr.f32.mxu0 0.0
      %2580 = vmatmul.mubr.f32.gmra.mrb[0].mxu0 %v2513
      %v2581 = vpop.f32.mrb[0].mxu0
      %v2582 = vadd.f32 0.0, %v2581
      %v2583 = vpop.f32.mrb[0].mxu0
      %2584 = vdwg.mxu0
      %v2585 = vadd.f32 %v2121, %v2582
      %v2586 = vadd.f32 %v700, %v2585
      %v2587 = vld [vmem:[%s666] sm:$0x1]
      %v2589 = vlaneseq
      %v2590 = vshrl.u32 %v2589, 7
      %v2591 = vsub.s32 0, %v2590
      %v2592 = vrot.slane %v2587, %v2591
      %v2594 = vadd.f32 %v2586, %v2592
      %v2595 = vld [vmem:[%s669] sm:$0x1]
      %v2596 = vld [vmem:[%s672] sm:$0x1]
      %v2597 = vsel %vm703, %v2594, 0.0
      %2598 = vadd.xlane.f32.xlu0 %v2597
      %v2599 = vpop.xlane.xlu0 %2598
      %v2600 = vmul.f32 %v2599, %v707
      %v2601 = vsub.f32 %v2594, %v2600
      %v2602 = vmul.f32 %v2601, %v2601
      %v2603 = vsel %vm703, %v2602, 0.0
      %2604 = vadd.xlane.f32.xlu0 %v2603
      %v2605 = vpop.xlane.xlu0 %2604
      %v2606 = vmul.f32 %v2605, %v707
      %v2607 = vadd.f32 %v2606, 1e-05
      %v2608 = vrsqrt.pop %v2607
      %v2609 = vmul.f32 %v2601, %v2608
      %v2611 = vlaneseq
      %v2612 = vshrl.u32 %v2611, 7
      %v2613 = vsub.s32 0, %v2612
      %v2614 = vrot.slane %v2595, %v2613
      %v2616 = vmul.f32 %v2609, %v2614
      %v2618 = vlaneseq
      %v2619 = vshrl.u32 %v2618, 7
      %v2620 = vsub.s32 0, %v2619
      %v2621 = vrot.slane %v2596, %v2620
      %v2623 = vadd.f32 %v2616, %v2621
      %v2624 = vld [vmem:[%s677] sm:$0xff]
      %v2625 = vld [vmem:[%s677 + $0x8] sm:$0xff]
      %v2626 = vld [vmem:[%s677 + $0x10] sm:$0xff]
      %v2627 = vld [vmem:[%s677 + $0x18] sm:$0xff]
      %v2628 = vld [vmem:[%s680] sm:$0x1]
      %v2630 = vlaneseq
      %v2631 = vshrl.u32 %v2630, 7
      %v2632 = vsub.s32 0, %v2631
      %v2633 = vrot.slane %v2628, %v2632
      %v2636 = vsel %vm703, %v2623, 0
      %2638 = vmatprep.subr.mxu0 0.0
      %2639 = vmatpush1.msra.mxu0 %v2624
      %2640 = vmatprep.subr.mxu0 0.0
      %2641 = vmatpush1.msra.mxu0 %v2625
      %2642 = vmatprep.subr.mxu0 0.0
      %2643 = vmatpush1.msra.mxu0 %v2626
      %2644 = vmatprep.subr.mxu0 0.0
      %2645 = vmatpush1.msra.mxu0 %v2627
      %2646 = vmatprep.subr.mxu0 0.0
      %2647 = vmatpush1.msra.mxu0 0.0
      %2648 = vmatprep.subr.mxu0 0.0
      %2649 = vmatpush1.msra.mxu0 0.0
      %2650 = vmatprep.subr.mxu0 0.0
      %2651 = vmatpush1.msra.mxu0 0.0
      %2652 = vmatprep.subr.mxu0 0.0
      %2653 = vmatpush1.msra.mxu0 0.0
      %2654 = vmatprep.subr.mxu0 0.0
      %2655 = vmatpush1.msra.mxu0 0.0
      %2656 = vmatprep.subr.mxu0 0.0
      %2657 = vmatpush1.msra.mxu0 0.0
      %2658 = vmatprep.subr.mxu0 0.0
      %2659 = vmatpush1.msra.mxu0 0.0
      %2660 = vmatprep.subr.mxu0 0.0
      %2661 = vmatpush1.msra.mxu0 0.0
      %2662 = vmatprep.subr.mxu0 0.0
      %2663 = vmatpush1.msra.mxu0 0.0
      %2664 = vmatprep.subr.mxu0 0.0
      %2665 = vmatpush1.msra.mxu0 0.0
      %2666 = vmatprep.subr.mxu0 0.0
      %2667 = vmatpush1.msra.mxu0 0.0
      %2668 = vmatprep.subr.mxu0 0.0
      %2669 = vmatpush1.msra.mxu0 0.0
      %2670 = vmatprep.subr.mxu0 0.0
      %2671 = vmatpush1.msra.mxu0 0.0
      %2672 = vmatprep.subr.mxu0 0.0
      %2673 = vmatpush1.msra.mxu0 0.0
      %2674 = vmatprep.subr.mxu0 0.0
      %2675 = vmatpush1.msra.mxu0 0.0
      %2676 = vmatprep.subr.mxu0 0.0
      %2677 = vmatpush1.msra.mxu0 0.0
      %2678 = vmatprep.subr.mxu0 0.0
      %2679 = vmatpush1.msra.mxu0 0.0
      %2680 = vmatprep.subr.mxu0 0.0
      %2681 = vmatpush1.msra.mxu0 0.0
      %2682 = vmatprep.subr.mxu0 0.0
      %2683 = vmatpush1.msra.mxu0 0.0
      %2684 = vmatprep.subr.mxu0 0.0
      %2685 = vmatpush1.msra.mxu0 0.0
      %2686 = vmatprep.subr.mxu0 0.0
      %2687 = vmatpush1.msra.mxu0 0.0
      %2688 = vmatprep.subr.mxu0 0.0
      %2689 = vmatpush1.msra.mxu0 0.0
      %2690 = vmatprep.subr.mxu0 0.0
      %2691 = vmatpush1.msra.mxu0 0.0
      %2692 = vmatprep.subr.mxu0 0.0
      %2693 = vmatpush1.msra.mxu0 0.0
      %2694 = vmatprep.subr.mxu0 0.0
      %2695 = vmatpush1.msra.mxu0 0.0
      %2696 = vmatprep.subr.mxu0 0.0
      %2697 = vmatpush1.msra.mxu0 0.0
      %2698 = vmatprep.subr.mxu0 0.0
      %2699 = vmatpush1.msra.mxu0 0.0
      %2700 = vmatprep.subr.mxu0 0.0
      %2701 = vmatpush1.msra.mxu0 0.0
      %2702 = vmatprep.mubr.f32.mxu0 0.0
      %2703 = vmatmul.mubr.f32.gmra.mrb[0].mxu0 %v2636
      %v2704 = vpop.f32.mrb[0].mxu0
      %v2705 = vadd.f32 %v2633, %v2704
      %v2706 = vpop.f32.mrb[0].mxu0
      %2707 = vdwg.mxu0
      %v2708 = vmul.f32 %v2705, 0.5
      %v2709 = vmul.f32 %v2705, 0.70710677
      %v2710 = vand.u32 2147483647, %v2709
      %v2711 = vmul.f32 %v2710, 0.3275911
      %v2712 = vadd.f32 %v2711, 1.0
      %v2713 = vrcp.pop %v2712
      %v2714 = vmul.f32 %v2712, %v2713
      %v2715 = vsub.f32 2.0, %v2714
      %v2716 = vmul.f32 %v2713, %v2715
      %v2717 = vmul.f32 %v2716, 1.0614054
      %v2718 = vadd.f32 %v2717, -1.4531521
      %v2719 = vmul.f32 %v2718, %v2716
      %v2720 = vadd.f32 %v2719, 1.4214138
      %v2721 = vmul.f32 %v2720, %v2716
      %v2722 = vadd.f32 %v2721, -0.28449672
      %v2723 = vmul.f32 %v2722, %v2716
      %v2724 = vadd.f32 %v2723, 0.2548296
      %v2725 = vmul.f32 %v2724, %v2716
      %v2726 = vsub.f32 0.0, %v2710
      %v2727 = vmul.f32 %v2726, %v2710
      %v2728 = vmul.f32 %v2727, 1.442695
      %v2729 = vpow.pop %v2728
      %v2730 = vmul.f32 %v2725, %v2729
      %v2731 = vsub.f32 1.0, %v2730
      %vm2732 = vcmp.ge.f32.partialorder %v2709, 0.0
      %v2733 = vsub.f32 0.0, %v2731
      %v2734 = vsel %vm2732, %v2731, %v2733
      %v2735 = vadd.f32 %v2734, 1.0
      %v2736 = vmul.f32 %v2708, %v2735
      %v2737 = vld [vmem:[%s685] sm:$0xff]
      %v2738 = vld [vmem:[%s685 + $0x8] sm:$0xff]
      %v2739 = vld [vmem:[%s685 + $0x10] sm:$0xff]
      %v2740 = vld [vmem:[%s685 + $0x18] sm:$0xff]
      %v2741 = vld [vmem:[%s685 + $0x20] sm:$0xff]
      %v2742 = vld [vmem:[%s685 + $0x28] sm:$0xff]
      %v2743 = vld [vmem:[%s685 + $0x30] sm:$0xff]
      %v2744 = vld [vmem:[%s685 + $0x38] sm:$0xff]
      %vm2745 = vcmask 523264
      %v2747 = vsel %vm2745, %v2736, 0
      %2749 = vmatprep.subr.mxu0 0.0
      %2750 = vmatpush1.msra.mxu0 %v2737
      %2751 = vmatprep.subr.mxu0 0.0
      %2752 = vmatpush1.msra.mxu0 %v2738
      %2753 = vmatprep.subr.mxu0 0.0
      %2754 = vmatpush1.msra.mxu0 %v2739
      %2755 = vmatprep.subr.mxu0 0.0
      %2756 = vmatpush1.msra.mxu0 %v2740
      %2757 = vmatprep.subr.mxu0 0.0
      %2758 = vmatpush1.msra.mxu0 %v2741
      %2759 = vmatprep.subr.mxu0 0.0
      %2760 = vmatpush1.msra.mxu0 %v2742
      %2761 = vmatprep.subr.mxu0 0.0
      %2762 = vmatpush1.msra.mxu0 %v2743
      %2763 = vmatprep.subr.mxu0 0.0
      %2764 = vmatpush1.msra.mxu0 %v2744
      %2765 = vmatprep.subr.mxu0 0.0
      %2766 = vmatpush1.msra.mxu0 0.0
      %2767 = vmatprep.subr.mxu0 0.0
      %2768 = vmatpush1.msra.mxu0 0.0
      %2769 = vmatprep.subr.mxu0 0.0
      %2770 = vmatpush1.msra.mxu0 0.0
      %2771 = vmatprep.subr.mxu0 0.0
      %2772 = vmatpush1.msra.mxu0 0.0
      %2773 = vmatprep.subr.mxu0 0.0
      %2774 = vmatpush1.msra.mxu0 0.0
      %2775 = vmatprep.subr.mxu0 0.0
      %2776 = vmatpush1.msra.mxu0 0.0
      %2777 = vmatprep.subr.mxu0 0.0
      %2778 = vmatpush1.msra.mxu0 0.0
      %2779 = vmatprep.subr.mxu0 0.0
      %2780 = vmatpush1.msra.mxu0 0.0
      %2781 = vmatprep.subr.mxu0 0.0
      %2782 = vmatpush1.msra.mxu0 0.0
      %2783 = vmatprep.subr.mxu0 0.0
      %2784 = vmatpush1.msra.mxu0 0.0
      %2785 = vmatprep.subr.mxu0 0.0
      %2786 = vmatpush1.msra.mxu0 0.0
      %2787 = vmatprep.subr.mxu0 0.0
      %2788 = vmatpush1.msra.mxu0 0.0
      %2789 = vmatprep.subr.mxu0 0.0
      %2790 = vmatpush1.msra.mxu0 0.0
      %2791 = vmatprep.subr.mxu0 0.0
      %2792 = vmatpush1.msra.mxu0 0.0
      %2793 = vmatprep.subr.mxu0 0.0
      %2794 = vmatpush1.msra.mxu0 0.0
      %2795 = vmatprep.subr.mxu0 0.0
      %2796 = vmatpush1.msra.mxu0 0.0
      %2797 = vmatprep.subr.mxu0 0.0
      %2798 = vmatpush1.msra.mxu0 0.0
      %2799 = vmatprep.subr.mxu0 0.0
      %2800 = vmatpush1.msra.mxu0 0.0
      %2801 = vmatprep.subr.mxu0 0.0
      %2802 = vmatpush1.msra.mxu0 0.0
      %2803 = vmatprep.subr.mxu0 0.0
      %2804 = vmatpush1.msra.mxu0 0.0
      %2805 = vmatprep.subr.mxu0 0.0
      %2806 = vmatpush1.msra.mxu0 0.0
      %2807 = vmatprep.subr.mxu0 0.0
      %2808 = vmatpush1.msra.mxu0 0.0
      %2809 = vmatprep.subr.mxu0 0.0
      %2810 = vmatpush1.msra.mxu0 0.0
      %2811 = vmatprep.subr.mxu0 0.0
      %2812 = vmatpush1.msra.mxu0 0.0
      %2813 = vmatprep.mubr.f32.mxu0 0.0
      %2814 = vmatmul.mubr.f32.gmra.mrb[0].mxu0 %v2747
      %v2815 = vpop.f32.mrb[0].mxu0
      %v2816 = vadd.f32 0.0, %v2815
      %v2817 = vpop.f32.mrb[0].mxu0
      %2818 = vdwg.mxu0
      %v2819 = vadd.f32 %v2594, %v2816
      %v2820 = vld [vmem:[%s688] sm:$0x1]
      %v2822 = vlaneseq
      %v2823 = vshrl.u32 %v2822, 7
      %v2824 = vsub.s32 0, %v2823
      %v2825 = vrot.slane %v2820, %v2824
      %v2827 = vadd.f32 %v2819, %v2825
      %2828 = vst.msk [vmem:[#allocation2] sm:$0xff] %vm703, %v2827
      %p2829 = scmp.eq.s32.totalorder %s30, 1
      // Predicated region
      $region81: #{transformer_forward.2} parent=75 // pred_check
        %p2830 = pneg %p2829
      $region82: #{transformer_forward.2} parent=75 // pred_check_branch
        %2832 = sbr.rel (%p2830) target = $region84
      $region83: #{transformer_forward.2} parent=75 // pred_region
        %2833 = vst.msk [vmem:[%s692] sm:$0xff] %vm703, %v2827
      $region84: #{transformer_forward.2} parent=75 // pred_fallthru
        _
      %p2834 = scmp.lt.s32.totalorder %s29, 1
      %s2835 = scalar_select %p2834, %s29, 1
      %s2836 = smul.addr %s2835, 8
      %s2837 = scalar_lea.vmem %s14, %s2836
      // Predicated region
      $region85: #{transformer_forward.2} parent=75 // pred_check
        %p2838 = pneg %p419
      $region86: #{transformer_forward.2} parent=75 // pred_check_branch
        %2840 = sbr.rel (%p2838) target = $region88
      $region87: #{transformer_forward.2} parent=75 // pred_region
        _
      $region88: #{transformer_forward.2} parent=75 // pred_fallthru
        _
    $region76: #{transformer_forward.2} parent=5 // pred_fallthru
      _
    %p2841 = scmp.le.s32.totalorder 2, %s20
    // Predicated region
    $region89: #{transformer_forward.2} parent=5 // pred_check
      %p2842 = pneg %p2841
    $region90: #{transformer_forward.2} parent=5 // pred_check_branch
      %2844 = sbr.rel (%p2842) target = $region92
    $region91: #{transformer_forward.2} parent=5 // pred_region
      %s2845 = ssub.s32 %s20, 2
      // Predicated region
      $region93: #{transformer_forward.2} parent=91 // pred_check
        %p2846 = pneg %p425
      $region94: #{transformer_forward.2} parent=91 // pred_check_branch
        %2848 = sbr.rel (%p2846) target = $region96
      $region95: #{transformer_forward.2} parent=91 // pred_region
        %p2849 = scmp.lt.s32.totalorder %s31, 1
        %s2850 = scalar_select %p2849, %s31, 1
        %s2851 = smul.addr %s2850, 8
        %s2852 = scalar_lea.vmem %s14, %s2851
      $region96: #{transformer_forward.2} parent=91 // pred_fallthru
        _
    $region92: #{transformer_forward.2} parent=5 // pred_fallthru
      _
  $region6: #{transformer_forward.2} parent=0 // loop_footer
    %s24 = sadd.s32 1, %s20
  $region7: #{transformer_forward.2} parent=0 // loop_footer_branch
    %19 = sbr.rel target = $region3
  $region8: #{transformer_forward.2} parent=0 // loop_exit
    _

</llo_original>
